<compile_context>
chip_gen: v5e
topology: v5e:2x2
jax: 0.10.0
libtpu: 0.0.40
codegen_flags: <defaults>
</compile_context>

<pallas_src>
import functools
import math

import jax
import jax.numpy as jnp
from jax import lax
from jax.experimental import pallas as pl
from jax.experimental.pallas import tpu as pltpu


def _spatial_attention_kernel(x_ref, w_ref, o_ref, pool_ref, acc_ref, *,
                              H, W, K, P, bm, C, Wp, Lo):
    """x_ref:    (bm, C, H, W)   VMEM  — unpadded input tile
       w_ref:    (2*K*K,)        SMEM  — flattened conv weight [c, kh, kw]
       o_ref:    (1, H, Lo)      VMEM  — lane-dense packed sigmoid(conv) slab
       pool_ref: (2, Hp, Lw)     VMEM scratch — zero-padded, lane-packed
                                   [avg, max] pooled maps (image b at lanes
                                   [b*Wp, (b+1)*Wp))
       acc_ref:  (H, Lo)         VMEM scratch — conv accumulator."""
    # Zero-pad scratch every step (cheap; safe under megacore grid sharding).
    pool_ref[...] = jnp.zeros_like(pool_ref)

    # ---- Channel pooling: streaming sum/max over C, no full f32 temporary.
    inv_c = jnp.float32(1.0 / C)
    for b in range(bm):                                   # bm is small, static
        def body(c, carry, _b=b):
            s, m = carry
            xc = x_ref[_b, c].astype(jnp.float32)         # (H, W)
            return s + xc, jnp.maximum(m, xc)

        s, m = lax.fori_loop(
            0, C, body,
            (jnp.zeros((H, W), jnp.float32),
             jnp.full((H, W), -jnp.inf, jnp.float32)),
            unroll=True)

        col = b * Wp + P                                   # interior offset
        pool_ref[0, P:P + H, col:col + W] = s * inv_c      # channel average
        pool_ref[1, P:P + H, col:col + W] = m              # channel max

    # ---- 7x7 conv over the two pooled maps = 2*K*K shifted scalar FMAs,
    # lane-dense over all bm packed images at once.  One wide row load per
    # (c, kh); the K lane shifts are value slices of that load.
    for c in range(2):
        for kh in range(K):
            row = pool_ref[c, kh:kh + H, :]                # (H, Lw)
            contrib = w_ref[c * K * K + kh * K] * row[:, 0:Lo]
            for kw in range(1, K):
                wgt = w_ref[c * K * K + kh * K + kw]
                contrib = contrib + wgt * row[:, kw:kw + Lo]
            if c == 0 and kh == 0:
                acc_ref[...] = contrib
            else:
                acc_ref[...] += contrib

    o_ref[0] = jax.nn.sigmoid(acc_ref[...]).astype(o_ref.dtype)


def spatial_attention(x, conv_weight, *, kernel_size=7, bm=None):
    """x: (B, C, H, W). conv_weight: (1, 2, K, K) (torch OIHW layout).
    Returns sigmoid(conv([mean_c(x), max_c(x)])) with shape (B, 1, H, W)."""
    B, C, H, W = x.shape
    K = kernel_size
    P = K // 2
    Hp, Wp = H + 2 * P, W + 2 * P
    assert conv_weight.shape == (1, 2, K, K)

    # Batch-tile selection: keep >=2 grid steps when possible (v7x megacore),
    # and among those prefer the smallest bm that still packs >=128 lanes.
    if bm is None:
        divs = [d for d in range(1, B + 1) if B % d == 0]
        cands = [d for d in divs if B // d >= 2] or divs
        dense = [d for d in cands if d * Wp >= 128]
        bm = min(dense) if dense else max(cands)
    assert B % bm == 0, "ragged batch unsupported; pad B to a multiple of bm"
    G = B // bm

    def _rup(v, m):
        return (v + m - 1) // m * m

    Lo = _rup(bm * Wp, 128)      # lane-dense packed output width
    Lw = Lo + 128                # pooled-map width (slack for kw shifts, zeros)

    w_flat = conv_weight.reshape(-1).astype(jnp.float32)   # (2*K*K,)

    kernel = functools.partial(_spatial_attention_kernel, H=H, W=W, K=K, P=P,
                               bm=bm, C=C, Wp=Wp, Lo=Lo)

    out = pl.pallas_call(
        kernel,
        out_shape=jax.ShapeDtypeStruct((G, H, Lo), x.dtype),
        grid_spec=pltpu.PrefetchScalarGridSpec(
            num_scalar_prefetch=0,
            grid=(G,),
            in_specs=[
                pl.BlockSpec((bm, C, H, W), lambda i: (i, 0, 0, 0)),
                pl.BlockSpec(memory_space=pltpu.MemorySpace.SMEM),
            ],
            out_specs=pl.BlockSpec((1, H, Lo), lambda i: (i, 0, 0)),
            scratch_shapes=[
                pltpu.VMEM((2, Hp, Lw), jnp.float32),   # packed pooled maps
                pltpu.VMEM((H, Lo), jnp.float32),       # conv accumulator
            ],
        ),
        compiler_params=pltpu.CompilerParams(
            dimension_semantics=("parallel",),
            vmem_limit_bytes=64 * 1024 * 1024),
    )(x, w_flat)

    # Unpack the lane-dense slab (G, H, Lo) -> (B, 1, H, W): pure layout
    # plumbing on the (small) output tensor.
    out = out[:, :, :bm * Wp].reshape(G, H, bm, Wp)[:, :, :, :W]
    out = out.transpose(0, 2, 1, 3).reshape(B, 1, H, W)
    return out


def _reference(x, conv_weight, *, kernel_size=7):
    """Pure-JAX/XLA reference of the PyTorch forward (for sanity checking)."""
    P = kernel_size // 2
    avg = jnp.mean(x, axis=1, keepdims=True)
    mx = jnp.max(x, axis=1, keepdims=True)
    cat = jnp.concatenate([avg, mx], axis=1)                   # (B, 2, H, W)
    out = lax.conv_general_dilated(
        cat, conv_weight, window_strides=(1, 1),
        padding=((P, P), (P, P)),
        dimension_numbers=("NCHW", "OIHW", "NCHW"),
        precision=lax.Precision.HIGHEST)
    return jax.nn.sigmoid(out)


if __name__ == "__main__":
    batch, channels, spatial, ksize = 2, 4, 16, 7
    key = jax.random.PRNGKey(0)
    kx, kw = jax.random.split(key)
    x = jax.random.normal(kx, (batch, channels, spatial, spatial), jnp.float32)
    bound = 1.0 / math.sqrt(2 * ksize * ksize)                 # torch-like init
    conv_w = jax.random.uniform(kw, (1, 2, ksize, ksize), jnp.float32,
                                -bound, bound)

    out = spatial_attention(x, conv_w, kernel_size=ksize)
    out = jax.block_until_ready(out)

    ref = _reference(x, conv_w, kernel_size=ksize)
    assert out.shape == (batch, 1, spatial, spatial)
    assert jnp.allclose(out, ref, atol=1e-5, rtol=1e-5), "mismatch vs reference"
    print("KERNEL_OK")
</pallas_src>

<mosaic_0001>
module attributes {stable_mosaic.version = 11 : i64} {
  func.func @_spatial_attention_kernel(%arg0: i32, %arg1: memref<1x4x16x16xf32, #tpu.memory_space<vmem>>, %arg2: memref<98xf32, #tpu.memory_space<smem>>, %arg3: memref<1x16x128xf32, #tpu.memory_space<vmem>>, %arg4: memref<2x22x256xf32, #tpu.memory_space<vmem>>, %arg5: memref<16x128xf32, #tpu.memory_space<vmem>>) attributes {dimension_semantics = [#tpu.dimension_semantics<parallel>], iteration_bounds = array<i64: 2>, scalar_prefetch = 0 : i64, scratch_operands = 2 : i64, tpu.core_type = #tpu.core_type<tc>, window_params = [{transform_indices = @transform_0, window_bounds = array<i64: 1, 4, 16, 16>}, {transform_indices = @transform_1, window_bounds = array<i64: 98>}, {transform_indices = @transform_2, window_bounds = array<i64: 1, 16, 128>}]} {
    %cst = arith.constant 0.000000e+00 : f32
    %0 = vector.broadcast %cst : f32 to vector<2x22x256xf32>
    %c0 = arith.constant 0 : index
    %c0_0 = arith.constant 0 : index
    %c0_1 = arith.constant 0 : index
    %1 = vector.load %arg4[%c0, %c0_0, %c0_1] : memref<2x22x256xf32, #tpu.memory_space<vmem>>, vector<2x22x256xf32>
    tpu.vector_store %arg4[%c0, %c0_0, %c0_1], %0 {strides = array<i32>} : memref<2x22x256xf32, #tpu.memory_space<vmem>>, vector<2x22x256xf32>,
    %cst_2 = arith.constant 0.000000e+00 : f32
    %2 = vector.broadcast %cst_2 : f32 to vector<16x16xf32>
    %cst_3 = arith.constant 0xFF800000 : f32
    %3 = vector.broadcast %cst_3 : f32 to vector<16x16xf32>
    %c0_i32 = arith.constant 0 : i32
    %c0_4 = arith.constant 0 : index
    %4 = arith.index_cast %c0_i32 : i32 to index
    %c0_5 = arith.constant 0 : index
    %c0_6 = arith.constant 0 : index
    %5 = vector.load %arg1[%c0_4, %4, %c0_5, %c0_6] : memref<1x4x16x16xf32, #tpu.memory_space<vmem>>, vector<1x1x16x16xf32>
    %6 = vector.shape_cast %5 : vector<1x1x16x16xf32> to vector<16x16xf32>
    %7 = arith.addf %2, %6 : vector<16x16xf32>
    %8 = arith.maximumf %3, %6 : vector<16x16xf32>
    %c1_i32 = arith.constant 1 : i32
    %c0_7 = arith.constant 0 : index
    %9 = arith.index_cast %c1_i32 : i32 to index
    %c0_8 = arith.constant 0 : index
    %c0_9 = arith.constant 0 : index
    %10 = vector.load %arg1[%c0_7, %9, %c0_8, %c0_9] : memref<1x4x16x16xf32, #tpu.memory_space<vmem>>, vector<1x1x16x16xf32>
    %11 = vector.shape_cast %10 : vector<1x1x16x16xf32> to vector<16x16xf32>
    %12 = arith.addf %7, %11 : vector<16x16xf32>
    %13 = arith.maximumf %8, %11 : vector<16x16xf32>
    %c2_i32 = arith.constant 2 : i32
    %c0_10 = arith.constant 0 : index
    %14 = arith.index_cast %c2_i32 : i32 to index
    %c0_11 = arith.constant 0 : index
    %c0_12 = arith.constant 0 : index
    %15 = vector.load %arg1[%c0_10, %14, %c0_11, %c0_12] : memref<1x4x16x16xf32, #tpu.memory_space<vmem>>, vector<1x1x16x16xf32>
    %16 = vector.shape_cast %15 : vector<1x1x16x16xf32> to vector<16x16xf32>
    %17 = arith.addf %12, %16 : vector<16x16xf32>
    %18 = arith.maximumf %13, %16 : vector<16x16xf32>
    %c3_i32 = arith.constant 3 : i32
    %c0_13 = arith.constant 0 : index
    %19 = arith.index_cast %c3_i32 : i32 to index
    %c0_14 = arith.constant 0 : index
    %c0_15 = arith.constant 0 : index
    %20 = vector.load %arg1[%c0_13, %19, %c0_14, %c0_15] : memref<1x4x16x16xf32, #tpu.memory_space<vmem>>, vector<1x1x16x16xf32>
    %21 = vector.shape_cast %20 : vector<1x1x16x16xf32> to vector<16x16xf32>
    %22 = arith.addf %17, %21 : vector<16x16xf32>
    %23 = arith.maximumf %18, %21 : vector<16x16xf32>
    %c4_i32 = arith.constant 4 : i32
    %cst_16 = arith.constant 2.500000e-01 : f32
    %24 = vector.broadcast %cst_16 : f32 to vector<16x16xf32>
    %25 = arith.mulf %22, %24 : vector<16x16xf32>
    %c0_17 = arith.constant 0 : index
    %c3 = arith.constant 3 : index
    %c3_18 = arith.constant 3 : index
    %26 = vector.load %arg4[%c0_17, %c3, %c3_18] : memref<2x22x256xf32, #tpu.memory_space<vmem>>, vector<1x16x16xf32>
    %27 = vector.shape_cast %26 : vector<1x16x16xf32> to vector<16x16xf32>
    %28 = vector.shape_cast %25 : vector<16x16xf32> to vector<1x16x16xf32>
    tpu.vector_store %arg4[%c0_17, %c3, %c3_18], %28 {strides = array<i32>} : memref<2x22x256xf32, #tpu.memory_space<vmem>>, vector<1x16x16xf32>,
    %c1 = arith.constant 1 : index
    %c3_19 = arith.constant 3 : index
    %c3_20 = arith.constant 3 : index
    %29 = vector.load %arg4[%c1, %c3_19, %c3_20] : memref<2x22x256xf32, #tpu.memory_space<vmem>>, vector<1x16x16xf32>
    %30 = vector.shape_cast %29 : vector<1x16x16xf32> to vector<16x16xf32>
    %31 = vector.shape_cast %23 : vector<16x16xf32> to vector<1x16x16xf32>
    tpu.vector_store %arg4[%c1, %c3_19, %c3_20], %31 {strides = array<i32>} : memref<2x22x256xf32, #tpu.memory_space<vmem>>, vector<1x16x16xf32>,
    %c0_21 = arith.constant 0 : index
    %c0_22 = arith.constant 0 : index
    %c0_23 = arith.constant 0 : index
    %32 = vector.load %arg4[%c0_21, %c0_22, %c0_23] : memref<2x22x256xf32, #tpu.memory_space<vmem>>, vector<1x16x256xf32>
    %33 = vector.shape_cast %32 : vector<1x16x256xf32> to vector<16x256xf32>
    %c0_24 = arith.constant 0 : index
    %34 = memref.load %arg2[%c0_24] : memref<98xf32, #tpu.memory_space<smem>>
    %35 = vector.extract_strided_slice %33 {offsets = [0, 0], sizes = [16, 128], strides = [1, 1]} : vector<16x256xf32> to vector<16x128xf32>
    %36 = vector.broadcast %34 : f32 to vector<16x128xf32>
    %37 = arith.mulf %36, %35 : vector<16x128xf32>
    %c1_25 = arith.constant 1 : index
    %38 = memref.load %arg2[%c1_25] : memref<98xf32, #tpu.memory_space<smem>>
    %39 = vector.extract_strided_slice %33 {offsets = [0, 1], sizes = [16, 128], strides = [1, 1]} : vector<16x256xf32> to vector<16x128xf32>
    %40 = vector.broadcast %38 : f32 to vector<16x128xf32>
    %41 = arith.mulf %40, %39 : vector<16x128xf32>
    %42 = arith.addf %37, %41 : vector<16x128xf32>
    %c2 = arith.constant 2 : index
    %43 = memref.load %arg2[%c2] : memref<98xf32, #tpu.memory_space<smem>>
    %44 = vector.extract_strided_slice %33 {offsets = [0, 2], sizes = [16, 128], strides = [1, 1]} : vector<16x256xf32> to vector<16x128xf32>
    %45 = vector.broadcast %43 : f32 to vector<16x128xf32>
    %46 = arith.mulf %45, %44 : vector<16x128xf32>
    %47 = arith.addf %42, %46 : vector<16x128xf32>
    %c3_26 = arith.constant 3 : index
    %48 = memref.load %arg2[%c3_26] : memref<98xf32, #tpu.memory_space<smem>>
    %49 = vector.extract_strided_slice %33 {offsets = [0, 3], sizes = [16, 128], strides = [1, 1]} : vector<16x256xf32> to vector<16x128xf32>
    %50 = vector.broadcast %48 : f32 to vector<16x128xf32>
    %51 = arith.mulf %50, %49 : vector<16x128xf32>
    %52 = arith.addf %47, %51 : vector<16x128xf32>
    %c4 = arith.constant 4 : index
    %53 = memref.load %arg2[%c4] : memref<98xf32, #tpu.memory_space<smem>>
    %54 = vector.extract_strided_slice %33 {offsets = [0, 4], sizes = [16, 128], strides = [1, 1]} : vector<16x256xf32> to vector<16x128xf32>
    %55 = vector.broadcast %53 : f32 to vector<16x128xf32>
    %56 = arith.mulf %55, %54 : vector<16x128xf32>
    %57 = arith.addf %52, %56 : vector<16x128xf32>
    %c5 = arith.constant 5 : index
    %58 = memref.load %arg2[%c5] : memref<98xf32, #tpu.memory_space<smem>>
    %59 = vector.extract_strided_slice %33 {offsets = [0, 5], sizes = [16, 128], strides = [1, 1]} : vector<16x256xf32> to vector<16x128xf32>
    %60 = vector.broadcast %58 : f32 to vector<16x128xf32>
    %61 = arith.mulf %60, %59 : vector<16x128xf32>
    %62 = arith.addf %57, %61 : vector<16x128xf32>
    %c6 = arith.constant 6 : index
    %63 = memref.load %arg2[%c6] : memref<98xf32, #tpu.memory_space<smem>>
    %64 = vector.extract_strided_slice %33 {offsets = [0, 6], sizes = [16, 128], strides = [1, 1]} : vector<16x256xf32> to vector<16x128xf32>
    %65 = vector.broadcast %63 : f32 to vector<16x128xf32>
    %66 = arith.mulf %65, %64 : vector<16x128xf32>
    %67 = arith.addf %62, %66 : vector<16x128xf32>
    %c0_27 = arith.constant 0 : index
    %c0_28 = arith.constant 0 : index
    %68 = vector.load %arg5[%c0_27, %c0_28] : memref<16x128xf32, #tpu.memory_space<vmem>>, vector<16x128xf32>
    tpu.vector_store %arg5[%c0_27, %c0_28], %67 {strides = array<i32>} : memref<16x128xf32, #tpu.memory_space<vmem>>, vector<16x128xf32>,
    %c0_29 = arith.constant 0 : index
    %c1_30 = arith.constant 1 : index
    %c0_31 = arith.constant 0 : index
    %69 = vector.load %arg4[%c0_29, %c1_30, %c0_31] : memref<2x22x256xf32, #tpu.memory_space<vmem>>, vector<1x16x256xf32>
    %70 = vector.shape_cast %69 : vector<1x16x256xf32> to vector<16x256xf32>
    %c7 = arith.constant 7 : index
    %71 = memref.load %arg2[%c7] : memref<98xf32, #tpu.memory_space<smem>>
    %72 = vector.extract_strided_slice %70 {offsets = [0, 0], sizes = [16, 128], strides = [1, 1]} : vector<16x256xf32> to vector<16x128xf32>
    %73 = vector.broadcast %71 : f32 to vector<16x128xf32>
    %74 = arith.mulf %73, %72 : vector<16x128xf32>
    %c8 = arith.constant 8 : index
    %75 = memref.load %arg2[%c8] : memref<98xf32, #tpu.memory_space<smem>>
    %76 = vector.extract_strided_slice %70 {offsets = [0, 1], sizes = [16, 128], strides = [1, 1]} : vector<16x256xf32> to vector<16x128xf32>
    %77 = vector.broadcast %75 : f32 to vector<16x128xf32>
    %78 = arith.mulf %77, %76 : vector<16x128xf32>
    %79 = arith.addf %74, %78 : vector<16x128xf32>
    %c9 = arith.constant 9 : index
    %80 = memref.load %arg2[%c9] : memref<98xf32, #tpu.memory_space<smem>>
    %81 = vector.extract_strided_slice %70 {offsets = [0, 2], sizes = [16, 128], strides = [1, 1]} : vector<16x256xf32> to vector<16x128xf32>
    %82 = vector.broadcast %80 : f32 to vector<16x128xf32>
    %83 = arith.mulf %82, %81 : vector<16x128xf32>
    %84 = arith.addf %79, %83 : vector<16x128xf32>
    %c10 = arith.constant 10 : index
    %85 = memref.load %arg2[%c10] : memref<98xf32, #tpu.memory_space<smem>>
    %86 = vector.extract_strided_slice %70 {offsets = [0, 3], sizes = [16, 128], strides = [1, 1]} : vector<16x256xf32> to vector<16x128xf32>
    %87 = vector.broadcast %85 : f32 to vector<16x128xf32>
    %88 = arith.mulf %87, %86 : vector<16x128xf32>
    %89 = arith.addf %84, %88 : vector<16x128xf32>
    %c11 = arith.constant 11 : index
    %90 = memref.load %arg2[%c11] : memref<98xf32, #tpu.memory_space<smem>>
    %91 = vector.extract_strided_slice %70 {offsets = [0, 4], sizes = [16, 128], strides = [1, 1]} : vector<16x256xf32> to vector<16x128xf32>
    %92 = vector.broadcast %90 : f32 to vector<16x128xf32>
    %93 = arith.mulf %92, %91 : vector<16x128xf32>
    %94 = arith.addf %89, %93 : vector<16x128xf32>
    %c12 = arith.constant 12 : index
    %95 = memref.load %arg2[%c12] : memref<98xf32, #tpu.memory_space<smem>>
    %96 = vector.extract_strided_slice %70 {offsets = [0, 5], sizes = [16, 128], strides = [1, 1]} : vector<16x256xf32> to vector<16x128xf32>
    %97 = vector.broadcast %95 : f32 to vector<16x128xf32>
    %98 = arith.mulf %97, %96 : vector<16x128xf32>
    %99 = arith.addf %94, %98 : vector<16x128xf32>
    %c13 = arith.constant 13 : index
    %100 = memref.load %arg2[%c13] : memref<98xf32, #tpu.memory_space<smem>>
    %101 = vector.extract_strided_slice %70 {offsets = [0, 6], sizes = [16, 128], strides = [1, 1]} : vector<16x256xf32> to vector<16x128xf32>
    %102 = vector.broadcast %100 : f32 to vector<16x128xf32>
    %103 = arith.mulf %102, %101 : vector<16x128xf32>
    %104 = arith.addf %99, %103 : vector<16x128xf32>
    %c0_32 = arith.constant 0 : index
    %c0_33 = arith.constant 0 : index
    %105 = vector.load %arg5[%c0_32, %c0_33] : memref<16x128xf32, #tpu.memory_space<vmem>>, vector<16x128xf32>
    %106 = arith.addf %105, %104 : vector<16x128xf32>
    %c0_34 = arith.constant 0 : index
    %c0_35 = arith.constant 0 : index
    %107 = vector.load %arg5[%c0_34, %c0_35] : memref<16x128xf32, #tpu.memory_space<vmem>>, vector<16x128xf32>
    tpu.vector_store %arg5[%c0_34, %c0_35], %106 {strides = array<i32>} : memref<16x128xf32, #tpu.memory_space<vmem>>, vector<16x128xf32>,
    %c0_36 = arith.constant 0 : index
    %c2_37 = arith.constant 2 : index
    %c0_38 = arith.constant 0 : index
    %108 = vector.load %arg4[%c0_36, %c2_37, %c0_38] : memref<2x22x256xf32, #tpu.memory_space<vmem>>, vector<1x16x256xf32>
    %109 = vector.shape_cast %108 : vector<1x16x256xf32> to vector<16x256xf32>
    %c14 = arith.constant 14 : index
    %110 = memref.load %arg2[%c14] : memref<98xf32, #tpu.memory_space<smem>>
    %111 = vector.extract_strided_slice %109 {offsets = [0, 0], sizes = [16, 128], strides = [1, 1]} : vector<16x256xf32> to vector<16x128xf32>
    %112 = vector.broadcast %110 : f32 to vector<16x128xf32>
    %113 = arith.mulf %112, %111 : vector<16x128xf32>
    %c15 = arith.constant 15 : index
    %114 = memref.load %arg2[%c15] : memref<98xf32, #tpu.memory_space<smem>>
    %115 = vector.extract_strided_slice %109 {offsets = [0, 1], sizes = [16, 128], strides = [1, 1]} : vector<16x256xf32> to vector<16x128xf32>
    %116 = vector.broadcast %114 : f32 to vector<16x128xf32>
    %117 = arith.mulf %116, %115 : vector<16x128xf32>
    %118 = arith.addf %113, %117 : vector<16x128xf32>
    %c16 = arith.constant 16 : index
    %119 = memref.load %arg2[%c16] : memref<98xf32, #tpu.memory_space<smem>>
    %120 = vector.extract_strided_slice %109 {offsets = [0, 2], sizes = [16, 128], strides = [1, 1]} : vector<16x256xf32> to vector<16x128xf32>
    %121 = vector.broadcast %119 : f32 to vector<16x128xf32>
    %122 = arith.mulf %121, %120 : vector<16x128xf32>
    %123 = arith.addf %118, %122 : vector<16x128xf32>
    %c17 = arith.constant 17 : index
    %124 = memref.load %arg2[%c17] : memref<98xf32, #tpu.memory_space<smem>>
    %125 = vector.extract_strided_slice %109 {offsets = [0, 3], sizes = [16, 128], strides = [1, 1]} : vector<16x256xf32> to vector<16x128xf32>
    %126 = vector.broadcast %124 : f32 to vector<16x128xf32>
    %127 = arith.mulf %126, %125 : vector<16x128xf32>
    %128 = arith.addf %123, %127 : vector<16x128xf32>
    %c18 = arith.constant 18 : index
    %129 = memref.load %arg2[%c18] : memref<98xf32, #tpu.memory_space<smem>>
    %130 = vector.extract_strided_slice %109 {offsets = [0, 4], sizes = [16, 128], strides = [1, 1]} : vector<16x256xf32> to vector<16x128xf32>
    %131 = vector.broadcast %129 : f32 to vector<16x128xf32>
    %132 = arith.mulf %131, %130 : vector<16x128xf32>
    %133 = arith.addf %128, %132 : vector<16x128xf32>
    %c19 = arith.constant 19 : index
    %134 = memref.load %arg2[%c19] : memref<98xf32, #tpu.memory_space<smem>>
    %135 = vector.extract_strided_slice %109 {offsets = [0, 5], sizes = [16, 128], strides = [1, 1]} : vector<16x256xf32> to vector<16x128xf32>
    %136 = vector.broadcast %134 : f32 to vector<16x128xf32>
    %137 = arith.mulf %136, %135 : vector<16x128xf32>
    %138 = arith.addf %133, %137 : vector<16x128xf32>
    %c20 = arith.constant 20 : index
    %139 = memref.load %arg2[%c20] : memref<98xf32, #tpu.memory_space<smem>>
    %140 = vector.extract_strided_slice %109 {offsets = [0, 6], sizes = [16, 128], strides = [1, 1]} : vector<16x256xf32> to vector<16x128xf32>
    %141 = vector.broadcast %139 : f32 to vector<16x128xf32>
    %142 = arith.mulf %141, %140 : vector<16x128xf32>
    %143 = arith.addf %138, %142 : vector<16x128xf32>
    %c0_39 = arith.constant 0 : index
    %c0_40 = arith.constant 0 : index
    %144 = vector.load %arg5[%c0_39, %c0_40] : memref<16x128xf32, #tpu.memory_space<vmem>>, vector<16x128xf32>
    %145 = arith.addf %144, %143 : vector<16x128xf32>
    %c0_41 = arith.constant 0 : index
    %c0_42 = arith.constant 0 : index
    %146 = vector.load %arg5[%c0_41, %c0_42] : memref<16x128xf32, #tpu.memory_space<vmem>>, vector<16x128xf32>
    tpu.vector_store %arg5[%c0_41, %c0_42], %145 {strides = array<i32>} : memref<16x128xf32, #tpu.memory_space<vmem>>, vector<16x128xf32>,
    %c0_43 = arith.constant 0 : index
    %c3_44 = arith.constant 3 : index
    %c0_45 = arith.constant 0 : index
    %147 = vector.load %arg4[%c0_43, %c3_44, %c0_45] : memref<2x22x256xf32, #tpu.memory_space<vmem>>, vector<1x16x256xf32>
    %148 = vector.shape_cast %147 : vector<1x16x256xf32> to vector<16x256xf32>
    %c21 = arith.constant 21 : index
    %149 = memref.load %arg2[%c21] : memref<98xf32, #tpu.memory_space<smem>>
    %150 = vector.extract_strided_slice %148 {offsets = [0, 0], sizes = [16, 128], strides = [1, 1]} : vector<16x256xf32> to vector<16x128xf32>
    %151 = vector.broadcast %149 : f32 to vector<16x128xf32>
    %152 = arith.mulf %151, %150 : vector<16x128xf32>
    %c22 = arith.constant 22 : index
    %153 = memref.load %arg2[%c22] : memref<98xf32, #tpu.memory_space<smem>>
    %154 = vector.extract_strided_slice %148 {offsets = [0, 1], sizes = [16, 128], strides = [1, 1]} : vector<16x256xf32> to vector<16x128xf32>
    %155 = vector.broadcast %153 : f32 to vector<16x128xf32>
    %156 = arith.mulf %155, %154 : vector<16x128xf32>
    %157 = arith.addf %152, %156 : vector<16x128xf32>
    %c23 = arith.constant 23 : index
    %158 = memref.load %arg2[%c23] : memref<98xf32, #tpu.memory_space<smem>>
    %159 = vector.extract_strided_slice %148 {offsets = [0, 2], sizes = [16, 128], strides = [1, 1]} : vector<16x256xf32> to vector<16x128xf32>
    %160 = vector.broadcast %158 : f32 to vector<16x128xf32>
    %161 = arith.mulf %160, %159 : vector<16x128xf32>
    %162 = arith.addf %157, %161 : vector<16x128xf32>
    %c24 = arith.constant 24 : index
    %163 = memref.load %arg2[%c24] : memref<98xf32, #tpu.memory_space<smem>>
    %164 = vector.extract_strided_slice %148 {offsets = [0, 3], sizes = [16, 128], strides = [1, 1]} : vector<16x256xf32> to vector<16x128xf32>
    %165 = vector.broadcast %163 : f32 to vector<16x128xf32>
    %166 = arith.mulf %165, %164 : vector<16x128xf32>
    %167 = arith.addf %162, %166 : vector<16x128xf32>
    %c25 = arith.constant 25 : index
    %168 = memref.load %arg2[%c25] : memref<98xf32, #tpu.memory_space<smem>>
    %169 = vector.extract_strided_slice %148 {offsets = [0, 4], sizes = [16, 128], strides = [1, 1]} : vector<16x256xf32> to vector<16x128xf32>
    %170 = vector.broadcast %168 : f32 to vector<16x128xf32>
    %171 = arith.mulf %170, %169 : vector<16x128xf32>
    %172 = arith.addf %167, %171 : vector<16x128xf32>
    %c26 = arith.constant 26 : index
    %173 = memref.load %arg2[%c26] : memref<98xf32, #tpu.memory_space<smem>>
    %174 = vector.extract_strided_slice %148 {offsets = [0, 5], sizes = [16, 128], strides = [1, 1]} : vector<16x256xf32> to vector<16x128xf32>
    %175 = vector.broadcast %173 : f32 to vector<16x128xf32>
    %176 = arith.mulf %175, %174 : vector<16x128xf32>
    %177 = arith.addf %172, %176 : vector<16x128xf32>
    %c27 = arith.constant 27 : index
    %178 = memref.load %arg2[%c27] : memref<98xf32, #tpu.memory_space<smem>>
    %179 = vector.extract_strided_slice %148 {offsets = [0, 6], sizes = [16, 128], strides = [1, 1]} : vector<16x256xf32> to vector<16x128xf32>
    %180 = vector.broadcast %178 : f32 to vector<16x128xf32>
    %181 = arith.mulf %180, %179 : vector<16x128xf32>
    %182 = arith.addf %177, %181 : vector<16x128xf32>
    %c0_46 = arith.constant 0 : index
    %c0_47 = arith.constant 0 : index
    %183 = vector.load %arg5[%c0_46, %c0_47] : memref<16x128xf32, #tpu.memory_space<vmem>>, vector<16x128xf32>
    %184 = arith.addf %183, %182 : vector<16x128xf32>
    %c0_48 = arith.constant 0 : index
    %c0_49 = arith.constant 0 : index
    %185 = vector.load %arg5[%c0_48, %c0_49] : memref<16x128xf32, #tpu.memory_space<vmem>>, vector<16x128xf32>
    tpu.vector_store %arg5[%c0_48, %c0_49], %184 {strides = array<i32>} : memref<16x128xf32, #tpu.memory_space<vmem>>, vector<16x128xf32>,
    %c0_50 = arith.constant 0 : index
    %c4_51 = arith.constant 4 : index
    %c0_52 = arith.constant 0 : index
    %186 = vector.load %arg4[%c0_50, %c4_51, %c0_52] : memref<2x22x256xf32, #tpu.memory_space<vmem>>, vector<1x16x256xf32>
    %187 = vector.shape_cast %186 : vector<1x16x256xf32> to vector<16x256xf32>
    %c28 = arith.constant 28 : index
    %188 = memref.load %arg2[%c28] : memref<98xf32, #tpu.memory_space<smem>>
    %189 = vector.extract_strided_slice %187 {offsets = [0, 0], sizes = [16, 128], strides = [1, 1]} : vector<16x256xf32> to vector<16x128xf32>
    %190 = vector.broadcast %188 : f32 to vector<16x128xf32>
    %191 = arith.mulf %190, %189 : vector<16x128xf32>
    %c29 = arith.constant 29 : index
    %192 = memref.load %arg2[%c29] : memref<98xf32, #tpu.memory_space<smem>>
    %193 = vector.extract_strided_slice %187 {offsets = [0, 1], sizes = [16, 128], strides = [1, 1]} : vector<16x256xf32> to vector<16x128xf32>
    %194 = vector.broadcast %192 : f32 to vector<16x128xf32>
    %195 = arith.mulf %194, %193 : vector<16x128xf32>
    %196 = arith.addf %191, %195 : vector<16x128xf32>
    %c30 = arith.constant 30 : index
    %197 = memref.load %arg2[%c30] : memref<98xf32, #tpu.memory_space<smem>>
    %198 = vector.extract_strided_slice %187 {offsets = [0, 2], sizes = [16, 128], strides = [1, 1]} : vector<16x256xf32> to vector<16x128xf32>
    %199 = vector.broadcast %197 : f32 to vector<16x128xf32>
    %200 = arith.mulf %199, %198 : vector<16x128xf32>
    %201 = arith.addf %196, %200 : vector<16x128xf32>
    %c31 = arith.constant 31 : index
    %202 = memref.load %arg2[%c31] : memref<98xf32, #tpu.memory_space<smem>>
    %203 = vector.extract_strided_slice %187 {offsets = [0, 3], sizes = [16, 128], strides = [1, 1]} : vector<16x256xf32> to vector<16x128xf32>
    %204 = vector.broadcast %202 : f32 to vector<16x128xf32>
    %205 = arith.mulf %204, %203 : vector<16x128xf32>
    %206 = arith.addf %201, %205 : vector<16x128xf32>
    %c32 = arith.constant 32 : index
    %207 = memref.load %arg2[%c32] : memref<98xf32, #tpu.memory_space<smem>>
    %208 = vector.extract_strided_slice %187 {offsets = [0, 4], sizes = [16, 128], strides = [1, 1]} : vector<16x256xf32> to vector<16x128xf32>
    %209 = vector.broadcast %207 : f32 to vector<16x128xf32>
    %210 = arith.mulf %209, %208 : vector<16x128xf32>
    %211 = arith.addf %206, %210 : vector<16x128xf32>
    %c33 = arith.constant 33 : index
    %212 = memref.load %arg2[%c33] : memref<98xf32, #tpu.memory_space<smem>>
    %213 = vector.extract_strided_slice %187 {offsets = [0, 5], sizes = [16, 128], strides = [1, 1]} : vector<16x256xf32> to vector<16x128xf32>
    %214 = vector.broadcast %212 : f32 to vector<16x128xf32>
    %215 = arith.mulf %214, %213 : vector<16x128xf32>
    %216 = arith.addf %211, %215 : vector<16x128xf32>
    %c34 = arith.constant 34 : index
    %217 = memref.load %arg2[%c34] : memref<98xf32, #tpu.memory_space<smem>>
    %218 = vector.extract_strided_slice %187 {offsets = [0, 6], sizes = [16, 128], strides = [1, 1]} : vector<16x256xf32> to vector<16x128xf32>
    %219 = vector.broadcast %217 : f32 to vector<16x128xf32>
    %220 = arith.mulf %219, %218 : vector<16x128xf32>
    %221 = arith.addf %216, %220 : vector<16x128xf32>
    %c0_53 = arith.constant 0 : index
    %c0_54 = arith.constant 0 : index
    %222 = vector.load %arg5[%c0_53, %c0_54] : memref<16x128xf32, #tpu.memory_space<vmem>>, vector<16x128xf32>
    %223 = arith.addf %222, %221 : vector<16x128xf32>
    %c0_55 = arith.constant 0 : index
    %c0_56 = arith.constant 0 : index
    %224 = vector.load %arg5[%c0_55, %c0_56] : memref<16x128xf32, #tpu.memory_space<vmem>>, vector<16x128xf32>
    tpu.vector_store %arg5[%c0_55, %c0_56], %223 {strides = array<i32>} : memref<16x128xf32, #tpu.memory_space<vmem>>, vector<16x128xf32>,
    %c0_57 = arith.constant 0 : index
    %c5_58 = arith.constant 5 : index
    %c0_59 = arith.constant 0 : index
    %225 = vector.load %arg4[%c0_57, %c5_58, %c0_59] : memref<2x22x256xf32, #tpu.memory_space<vmem>>, vector<1x16x256xf32>
    %226 = vector.shape_cast %225 : vector<1x16x256xf32> to vector<16x256xf32>
    %c35 = arith.constant 35 : index
    %227 = memref.load %arg2[%c35] : memref<98xf32, #tpu.memory_space<smem>>
    %228 = vector.extract_strided_slice %226 {offsets = [0, 0], sizes = [16, 128], strides = [1, 1]} : vector<16x256xf32> to vector<16x128xf32>
    %229 = vector.broadcast %227 : f32 to vector<16x128xf32>
    %230 = arith.mulf %229, %228 : vector<16x128xf32>
    %c36 = arith.constant 36 : index
    %231 = memref.load %arg2[%c36] : memref<98xf32, #tpu.memory_space<smem>>
    %232 = vector.extract_strided_slice %226 {offsets = [0, 1], sizes = [16, 128], strides = [1, 1]} : vector<16x256xf32> to vector<16x128xf32>
    %233 = vector.broadcast %231 : f32 to vector<16x128xf32>
    %234 = arith.mulf %233, %232 : vector<16x128xf32>
    %235 = arith.addf %230, %234 : vector<16x128xf32>
    %c37 = arith.constant 37 : index
    %236 = memref.load %arg2[%c37] : memref<98xf32, #tpu.memory_space<smem>>
    %237 = vector.extract_strided_slice %226 {offsets = [0, 2], sizes = [16, 128], strides = [1, 1]} : vector<16x256xf32> to vector<16x128xf32>
    %238 = vector.broadcast %236 : f32 to vector<16x128xf32>
    %239 = arith.mulf %238, %237 : vector<16x128xf32>
    %240 = arith.addf %235, %239 : vector<16x128xf32>
    %c38 = arith.constant 38 : index
    %241 = memref.load %arg2[%c38] : memref<98xf32, #tpu.memory_space<smem>>
    %242 = vector.extract_strided_slice %226 {offsets = [0, 3], sizes = [16, 128], strides = [1, 1]} : vector<16x256xf32> to vector<16x128xf32>
    %243 = vector.broadcast %241 : f32 to vector<16x128xf32>
    %244 = arith.mulf %243, %242 : vector<16x128xf32>
    %245 = arith.addf %240, %244 : vector<16x128xf32>
    %c39 = arith.constant 39 : index
    %246 = memref.load %arg2[%c39] : memref<98xf32, #tpu.memory_space<smem>>
    %247 = vector.extract_strided_slice %226 {offsets = [0, 4], sizes = [16, 128], strides = [1, 1]} : vector<16x256xf32> to vector<16x128xf32>
    %248 = vector.broadcast %246 : f32 to vector<16x128xf32>
    %249 = arith.mulf %248, %247 : vector<16x128xf32>
    %250 = arith.addf %245, %249 : vector<16x128xf32>
    %c40 = arith.constant 40 : index
    %251 = memref.load %arg2[%c40] : memref<98xf32, #tpu.memory_space<smem>>
    %252 = vector.extract_strided_slice %226 {offsets = [0, 5], sizes = [16, 128], strides = [1, 1]} : vector<16x256xf32> to vector<16x128xf32>
    %253 = vector.broadcast %251 : f32 to vector<16x128xf32>
    %254 = arith.mulf %253, %252 : vector<16x128xf32>
    %255 = arith.addf %250, %254 : vector<16x128xf32>
    %c41 = arith.constant 41 : index
    %256 = memref.load %arg2[%c41] : memref<98xf32, #tpu.memory_space<smem>>
    %257 = vector.extract_strided_slice %226 {offsets = [0, 6], sizes = [16, 128], strides = [1, 1]} : vector<16x256xf32> to vector<16x128xf32>
    %258 = vector.broadcast %256 : f32 to vector<16x128xf32>
    %259 = arith.mulf %258, %257 : vector<16x128xf32>
    %260 = arith.addf %255, %259 : vector<16x128xf32>
    %c0_60 = arith.constant 0 : index
    %c0_61 = arith.constant 0 : index
    %261 = vector.load %arg5[%c0_60, %c0_61] : memref<16x128xf32, #tpu.memory_space<vmem>>, vector<16x128xf32>
    %262 = arith.addf %261, %260 : vector<16x128xf32>
    %c0_62 = arith.constant 0 : index
    %c0_63 = arith.constant 0 : index
    %263 = vector.load %arg5[%c0_62, %c0_63] : memref<16x128xf32, #tpu.memory_space<vmem>>, vector<16x128xf32>
    tpu.vector_store %arg5[%c0_62, %c0_63], %262 {strides = array<i32>} : memref<16x128xf32, #tpu.memory_space<vmem>>, vector<16x128xf32>,
    %c0_64 = arith.constant 0 : index
    %c6_65 = arith.constant 6 : index
    %c0_66 = arith.constant 0 : index
    %264 = vector.load %arg4[%c0_64, %c6_65, %c0_66] : memref<2x22x256xf32, #tpu.memory_space<vmem>>, vector<1x16x256xf32>
    %265 = vector.shape_cast %264 : vector<1x16x256xf32> to vector<16x256xf32>
    %c42 = arith.constant 42 : index
    %266 = memref.load %arg2[%c42] : memref<98xf32, #tpu.memory_space<smem>>
    %267 = vector.extract_strided_slice %265 {offsets = [0, 0], sizes = [16, 128], strides = [1, 1]} : vector<16x256xf32> to vector<16x128xf32>
    %268 = vector.broadcast %266 : f32 to vector<16x128xf32>
    %269 = arith.mulf %268, %267 : vector<16x128xf32>
    %c43 = arith.constant 43 : index
    %270 = memref.load %arg2[%c43] : memref<98xf32, #tpu.memory_space<smem>>
    %271 = vector.extract_strided_slice %265 {offsets = [0, 1], sizes = [16, 128], strides = [1, 1]} : vector<16x256xf32> to vector<16x128xf32>
    %272 = vector.broadcast %270 : f32 to vector<16x128xf32>
    %273 = arith.mulf %272, %271 : vector<16x128xf32>
    %274 = arith.addf %269, %273 : vector<16x128xf32>
    %c44 = arith.constant 44 : index
    %275 = memref.load %arg2[%c44] : memref<98xf32, #tpu.memory_space<smem>>
    %276 = vector.extract_strided_slice %265 {offsets = [0, 2], sizes = [16, 128], strides = [1, 1]} : vector<16x256xf32> to vector<16x128xf32>
    %277 = vector.broadcast %275 : f32 to vector<16x128xf32>
    %278 = arith.mulf %277, %276 : vector<16x128xf32>
    %279 = arith.addf %274, %278 : vector<16x128xf32>
    %c45 = arith.constant 45 : index
    %280 = memref.load %arg2[%c45] : memref<98xf32, #tpu.memory_space<smem>>
    %281 = vector.extract_strided_slice %265 {offsets = [0, 3], sizes = [16, 128], strides = [1, 1]} : vector<16x256xf32> to vector<16x128xf32>
    %282 = vector.broadcast %280 : f32 to vector<16x128xf32>
    %283 = arith.mulf %282, %281 : vector<16x128xf32>
    %284 = arith.addf %279, %283 : vector<16x128xf32>
    %c46 = arith.constant 46 : index
    %285 = memref.load %arg2[%c46] : memref<98xf32, #tpu.memory_space<smem>>
    %286 = vector.extract_strided_slice %265 {offsets = [0, 4], sizes = [16, 128], strides = [1, 1]} : vector<16x256xf32> to vector<16x128xf32>
    %287 = vector.broadcast %285 : f32 to vector<16x128xf32>
    %288 = arith.mulf %287, %286 : vector<16x128xf32>
    %289 = arith.addf %284, %288 : vector<16x128xf32>
    %c47 = arith.constant 47 : index
    %290 = memref.load %arg2[%c47] : memref<98xf32, #tpu.memory_space<smem>>
    %291 = vector.extract_strided_slice %265 {offsets = [0, 5], sizes = [16, 128], strides = [1, 1]} : vector<16x256xf32> to vector<16x128xf32>
    %292 = vector.broadcast %290 : f32 to vector<16x128xf32>
    %293 = arith.mulf %292, %291 : vector<16x128xf32>
    %294 = arith.addf %289, %293 : vector<16x128xf32>
    %c48 = arith.constant 48 : index
    %295 = memref.load %arg2[%c48] : memref<98xf32, #tpu.memory_space<smem>>
    %296 = vector.extract_strided_slice %265 {offsets = [0, 6], sizes = [16, 128], strides = [1, 1]} : vector<16x256xf32> to vector<16x128xf32>
    %297 = vector.broadcast %295 : f32 to vector<16x128xf32>
    %298 = arith.mulf %297, %296 : vector<16x128xf32>
    %299 = arith.addf %294, %298 : vector<16x128xf32>
    %c0_67 = arith.constant 0 : index
    %c0_68 = arith.constant 0 : index
    %300 = vector.load %arg5[%c0_67, %c0_68] : memref<16x128xf32, #tpu.memory_space<vmem>>, vector<16x128xf32>
    %301 = arith.addf %300, %299 : vector<16x128xf32>
    %c0_69 = arith.constant 0 : index
    %c0_70 = arith.constant 0 : index
    %302 = vector.load %arg5[%c0_69, %c0_70] : memref<16x128xf32, #tpu.memory_space<vmem>>, vector<16x128xf32>
    tpu.vector_store %arg5[%c0_69, %c0_70], %301 {strides = array<i32>} : memref<16x128xf32, #tpu.memory_space<vmem>>, vector<16x128xf32>,
    %c1_71 = arith.constant 1 : index
    %c0_72 = arith.constant 0 : index
    %c0_73 = arith.constant 0 : index
    %303 = vector.load %arg4[%c1_71, %c0_72, %c0_73] : memref<2x22x256xf32, #tpu.memory_space<vmem>>, vector<1x16x256xf32>
    %304 = vector.shape_cast %303 : vector<1x16x256xf32> to vector<16x256xf32>
    %c49 = arith.constant 49 : index
    %305 = memref.load %arg2[%c49] : memref<98xf32, #tpu.memory_space<smem>>
    %306 = vector.extract_strided_slice %304 {offsets = [0, 0], sizes = [16, 128], strides = [1, 1]} : vector<16x256xf32> to vector<16x128xf32>
    %307 = vector.broadcast %305 : f32 to vector<16x128xf32>
    %308 = arith.mulf %307, %306 : vector<16x128xf32>
    %c50 = arith.constant 50 : index
    %309 = memref.load %arg2[%c50] : memref<98xf32, #tpu.memory_space<smem>>
    %310 = vector.extract_strided_slice %304 {offsets = [0, 1], sizes = [16, 128], strides = [1, 1]} : vector<16x256xf32> to vector<16x128xf32>
    %311 = vector.broadcast %309 : f32 to vector<16x128xf32>
    %312 = arith.mulf %311, %310 : vector<16x128xf32>
    %313 = arith.addf %308, %312 : vector<16x128xf32>
    %c51 = arith.constant 51 : index
    %314 = memref.load %arg2[%c51] : memref<98xf32, #tpu.memory_space<smem>>
    %315 = vector.extract_strided_slice %304 {offsets = [0, 2], sizes = [16, 128], strides = [1, 1]} : vector<16x256xf32> to vector<16x128xf32>
    %316 = vector.broadcast %314 : f32 to vector<16x128xf32>
    %317 = arith.mulf %316, %315 : vector<16x128xf32>
    %318 = arith.addf %313, %317 : vector<16x128xf32>
    %c52 = arith.constant 52 : index
    %319 = memref.load %arg2[%c52] : memref<98xf32, #tpu.memory_space<smem>>
    %320 = vector.extract_strided_slice %304 {offsets = [0, 3], sizes = [16, 128], strides = [1, 1]} : vector<16x256xf32> to vector<16x128xf32>
    %321 = vector.broadcast %319 : f32 to vector<16x128xf32>
    %322 = arith.mulf %321, %320 : vector<16x128xf32>
    %323 = arith.addf %318, %322 : vector<16x128xf32>
    %c53 = arith.constant 53 : index
    %324 = memref.load %arg2[%c53] : memref<98xf32, #tpu.memory_space<smem>>
    %325 = vector.extract_strided_slice %304 {offsets = [0, 4], sizes = [16, 128], strides = [1, 1]} : vector<16x256xf32> to vector<16x128xf32>
    %326 = vector.broadcast %324 : f32 to vector<16x128xf32>
    %327 = arith.mulf %326, %325 : vector<16x128xf32>
    %328 = arith.addf %323, %327 : vector<16x128xf32>
    %c54 = arith.constant 54 : index
    %329 = memref.load %arg2[%c54] : memref<98xf32, #tpu.memory_space<smem>>
    %330 = vector.extract_strided_slice %304 {offsets = [0, 5], sizes = [16, 128], strides = [1, 1]} : vector<16x256xf32> to vector<16x128xf32>
    %331 = vector.broadcast %329 : f32 to vector<16x128xf32>
    %332 = arith.mulf %331, %330 : vector<16x128xf32>
    %333 = arith.addf %328, %332 : vector<16x128xf32>
    %c55 = arith.constant 55 : index
    %334 = memref.load %arg2[%c55] : memref<98xf32, #tpu.memory_space<smem>>
    %335 = vector.extract_strided_slice %304 {offsets = [0, 6], sizes = [16, 128], strides = [1, 1]} : vector<16x256xf32> to vector<16x128xf32>
    %336 = vector.broadcast %334 : f32 to vector<16x128xf32>
    %337 = arith.mulf %336, %335 : vector<16x128xf32>
    %338 = arith.addf %333, %337 : vector<16x128xf32>
    %c0_74 = arith.constant 0 : index
    %c0_75 = arith.constant 0 : index
    %339 = vector.load %arg5[%c0_74, %c0_75] : memref<16x128xf32, #tpu.memory_space<vmem>>, vector<16x128xf32>
    %340 = arith.addf %339, %338 : vector<16x128xf32>
    %c0_76 = arith.constant 0 : index
    %c0_77 = arith.constant 0 : index
    %341 = vector.load %arg5[%c0_76, %c0_77] : memref<16x128xf32, #tpu.memory_space<vmem>>, vector<16x128xf32>
    tpu.vector_store %arg5[%c0_76, %c0_77], %340 {strides = array<i32>} : memref<16x128xf32, #tpu.memory_space<vmem>>, vector<16x128xf32>,
    %c1_78 = arith.constant 1 : index
    %c1_79 = arith.constant 1 : index
    %c0_80 = arith.constant 0 : index
    %342 = vector.load %arg4[%c1_78, %c1_79, %c0_80] : memref<2x22x256xf32, #tpu.memory_space<vmem>>, vector<1x16x256xf32>
    %343 = vector.shape_cast %342 : vector<1x16x256xf32> to vector<16x256xf32>
    %c56 = arith.constant 56 : index
    %344 = memref.load %arg2[%c56] : memref<98xf32, #tpu.memory_space<smem>>
    %345 = vector.extract_strided_slice %343 {offsets = [0, 0], sizes = [16, 128], strides = [1, 1]} : vector<16x256xf32> to vector<16x128xf32>
    %346 = vector.broadcast %344 : f32 to vector<16x128xf32>
    %347 = arith.mulf %346, %345 : vector<16x128xf32>
    %c57 = arith.constant 57 : index
    %348 = memref.load %arg2[%c57] : memref<98xf32, #tpu.memory_space<smem>>
    %349 = vector.extract_strided_slice %343 {offsets = [0, 1], sizes = [16, 128], strides = [1, 1]} : vector<16x256xf32> to vector<16x128xf32>
    %350 = vector.broadcast %348 : f32 to vector<16x128xf32>
    %351 = arith.mulf %350, %349 : vector<16x128xf32>
    %352 = arith.addf %347, %351 : vector<16x128xf32>
    %c58 = arith.constant 58 : index
    %353 = memref.load %arg2[%c58] : memref<98xf32, #tpu.memory_space<smem>>
    %354 = vector.extract_strided_slice %343 {offsets = [0, 2], sizes = [16, 128], strides = [1, 1]} : vector<16x256xf32> to vector<16x128xf32>
    %355 = vector.broadcast %353 : f32 to vector<16x128xf32>
    %356 = arith.mulf %355, %354 : vector<16x128xf32>
    %357 = arith.addf %352, %356 : vector<16x128xf32>
    %c59 = arith.constant 59 : index
    %358 = memref.load %arg2[%c59] : memref<98xf32, #tpu.memory_space<smem>>
    %359 = vector.extract_strided_slice %343 {offsets = [0, 3], sizes = [16, 128], strides = [1, 1]} : vector<16x256xf32> to vector<16x128xf32>
    %360 = vector.broadcast %358 : f32 to vector<16x128xf32>
    %361 = arith.mulf %360, %359 : vector<16x128xf32>
    %362 = arith.addf %357, %361 : vector<16x128xf32>
    %c60 = arith.constant 60 : index
    %363 = memref.load %arg2[%c60] : memref<98xf32, #tpu.memory_space<smem>>
    %364 = vector.extract_strided_slice %343 {offsets = [0, 4], sizes = [16, 128], strides = [1, 1]} : vector<16x256xf32> to vector<16x128xf32>
    %365 = vector.broadcast %363 : f32 to vector<16x128xf32>
    %366 = arith.mulf %365, %364 : vector<16x128xf32>
    %367 = arith.addf %362, %366 : vector<16x128xf32>
    %c61 = arith.constant 61 : index
    %368 = memref.load %arg2[%c61] : memref<98xf32, #tpu.memory_space<smem>>
    %369 = vector.extract_strided_slice %343 {offsets = [0, 5], sizes = [16, 128], strides = [1, 1]} : vector<16x256xf32> to vector<16x128xf32>
    %370 = vector.broadcast %368 : f32 to vector<16x128xf32>
    %371 = arith.mulf %370, %369 : vector<16x128xf32>
    %372 = arith.addf %367, %371 : vector<16x128xf32>
    %c62 = arith.constant 62 : index
    %373 = memref.load %arg2[%c62] : memref<98xf32, #tpu.memory_space<smem>>
    %374 = vector.extract_strided_slice %343 {offsets = [0, 6], sizes = [16, 128], strides = [1, 1]} : vector<16x256xf32> to vector<16x128xf32>
    %375 = vector.broadcast %373 : f32 to vector<16x128xf32>
    %376 = arith.mulf %375, %374 : vector<16x128xf32>
    %377 = arith.addf %372, %376 : vector<16x128xf32>
    %c0_81 = arith.constant 0 : index
    %c0_82 = arith.constant 0 : index
    %378 = vector.load %arg5[%c0_81, %c0_82] : memref<16x128xf32, #tpu.memory_space<vmem>>, vector<16x128xf32>
    %379 = arith.addf %378, %377 : vector<16x128xf32>
    %c0_83 = arith.constant 0 : index
    %c0_84 = arith.constant 0 : index
    %380 = vector.load %arg5[%c0_83, %c0_84] : memref<16x128xf32, #tpu.memory_space<vmem>>, vector<16x128xf32>
    tpu.vector_store %arg5[%c0_83, %c0_84], %379 {strides = array<i32>} : memref<16x128xf32, #tpu.memory_space<vmem>>, vector<16x128xf32>,
    %c1_85 = arith.constant 1 : index
    %c2_86 = arith.constant 2 : index
    %c0_87 = arith.constant 0 : index
    %381 = vector.load %arg4[%c1_85, %c2_86, %c0_87] : memref<2x22x256xf32, #tpu.memory_space<vmem>>, vector<1x16x256xf32>
    %382 = vector.shape_cast %381 : vector<1x16x256xf32> to vector<16x256xf32>
    %c63 = arith.constant 63 : index
    %383 = memref.load %arg2[%c63] : memref<98xf32, #tpu.memory_space<smem>>
    %384 = vector.extract_strided_slice %382 {offsets = [0, 0], sizes = [16, 128], strides = [1, 1]} : vector<16x256xf32> to vector<16x128xf32>
    %385 = vector.broadcast %383 : f32 to vector<16x128xf32>
    %386 = arith.mulf %385, %384 : vector<16x128xf32>
    %c64 = arith.constant 64 : index
    %387 = memref.load %arg2[%c64] : memref<98xf32, #tpu.memory_space<smem>>
    %388 = vector.extract_strided_slice %382 {offsets = [0, 1], sizes = [16, 128], strides = [1, 1]} : vector<16x256xf32> to vector<16x128xf32>
    %389 = vector.broadcast %387 : f32 to vector<16x128xf32>
    %390 = arith.mulf %389, %388 : vector<16x128xf32>
    %391 = arith.addf %386, %390 : vector<16x128xf32>
    %c65 = arith.constant 65 : index
    %392 = memref.load %arg2[%c65] : memref<98xf32, #tpu.memory_space<smem>>
    %393 = vector.extract_strided_slice %382 {offsets = [0, 2], sizes = [16, 128], strides = [1, 1]} : vector<16x256xf32> to vector<16x128xf32>
    %394 = vector.broadcast %392 : f32 to vector<16x128xf32>
    %395 = arith.mulf %394, %393 : vector<16x128xf32>
    %396 = arith.addf %391, %395 : vector<16x128xf32>
    %c66 = arith.constant 66 : index
    %397 = memref.load %arg2[%c66] : memref<98xf32, #tpu.memory_space<smem>>
    %398 = vector.extract_strided_slice %382 {offsets = [0, 3], sizes = [16, 128], strides = [1, 1]} : vector<16x256xf32> to vector<16x128xf32>
    %399 = vector.broadcast %397 : f32 to vector<16x128xf32>
    %400 = arith.mulf %399, %398 : vector<16x128xf32>
    %401 = arith.addf %396, %400 : vector<16x128xf32>
    %c67 = arith.constant 67 : index
    %402 = memref.load %arg2[%c67] : memref<98xf32, #tpu.memory_space<smem>>
    %403 = vector.extract_strided_slice %382 {offsets = [0, 4], sizes = [16, 128], strides = [1, 1]} : vector<16x256xf32> to vector<16x128xf32>
    %404 = vector.broadcast %402 : f32 to vector<16x128xf32>
    %405 = arith.mulf %404, %403 : vector<16x128xf32>
    %406 = arith.addf %401, %405 : vector<16x128xf32>
    %c68 = arith.constant 68 : index
    %407 = memref.load %arg2[%c68] : memref<98xf32, #tpu.memory_space<smem>>
    %408 = vector.extract_strided_slice %382 {offsets = [0, 5], sizes = [16, 128], strides = [1, 1]} : vector<16x256xf32> to vector<16x128xf32>
    %409 = vector.broadcast %407 : f32 to vector<16x128xf32>
    %410 = arith.mulf %409, %408 : vector<16x128xf32>
    %411 = arith.addf %406, %410 : vector<16x128xf32>
    %c69 = arith.constant 69 : index
    %412 = memref.load %arg2[%c69] : memref<98xf32, #tpu.memory_space<smem>>
    %413 = vector.extract_strided_slice %382 {offsets = [0, 6], sizes = [16, 128], strides = [1, 1]} : vector<16x256xf32> to vector<16x128xf32>
    %414 = vector.broadcast %412 : f32 to vector<16x128xf32>
    %415 = arith.mulf %414, %413 : vector<16x128xf32>
    %416 = arith.addf %411, %415 : vector<16x128xf32>
    %c0_88 = arith.constant 0 : index
    %c0_89 = arith.constant 0 : index
    %417 = vector.load %arg5[%c0_88, %c0_89] : memref<16x128xf32, #tpu.memory_space<vmem>>, vector<16x128xf32>
    %418 = arith.addf %417, %416 : vector<16x128xf32>
    %c0_90 = arith.constant 0 : index
    %c0_91 = arith.constant 0 : index
    %419 = vector.load %arg5[%c0_90, %c0_91] : memref<16x128xf32, #tpu.memory_space<vmem>>, vector<16x128xf32>
    tpu.vector_store %arg5[%c0_90, %c0_91], %418 {strides = array<i32>} : memref<16x128xf32, #tpu.memory_space<vmem>>, vector<16x128xf32>,
    %c1_92 = arith.constant 1 : index
    %c3_93 = arith.constant 3 : index
    %c0_94 = arith.constant 0 : index
    %420 = vector.load %arg4[%c1_92, %c3_93, %c0_94] : memref<2x22x256xf32, #tpu.memory_space<vmem>>, vector<1x16x256xf32>
    %421 = vector.shape_cast %420 : vector<1x16x256xf32> to vector<16x256xf32>
    %c70 = arith.constant 70 : index
    %422 = memref.load %arg2[%c70] : memref<98xf32, #tpu.memory_space<smem>>
    %423 = vector.extract_strided_slice %421 {offsets = [0, 0], sizes = [16, 128], strides = [1, 1]} : vector<16x256xf32> to vector<16x128xf32>
    %424 = vector.broadcast %422 : f32 to vector<16x128xf32>
    %425 = arith.mulf %424, %423 : vector<16x128xf32>
    %c71 = arith.constant 71 : index
    %426 = memref.load %arg2[%c71] : memref<98xf32, #tpu.memory_space<smem>>
    %427 = vector.extract_strided_slice %421 {offsets = [0, 1], sizes = [16, 128], strides = [1, 1]} : vector<16x256xf32> to vector<16x128xf32>
    %428 = vector.broadcast %426 : f32 to vector<16x128xf32>
    %429 = arith.mulf %428, %427 : vector<16x128xf32>
    %430 = arith.addf %425, %429 : vector<16x128xf32>
    %c72 = arith.constant 72 : index
    %431 = memref.load %arg2[%c72] : memref<98xf32, #tpu.memory_space<smem>>
    %432 = vector.extract_strided_slice %421 {offsets = [0, 2], sizes = [16, 128], strides = [1, 1]} : vector<16x256xf32> to vector<16x128xf32>
    %433 = vector.broadcast %431 : f32 to vector<16x128xf32>
    %434 = arith.mulf %433, %432 : vector<16x128xf32>
    %435 = arith.addf %430, %434 : vector<16x128xf32>
    %c73 = arith.constant 73 : index
    %436 = memref.load %arg2[%c73] : memref<98xf32, #tpu.memory_space<smem>>
    %437 = vector.extract_strided_slice %421 {offsets = [0, 3], sizes = [16, 128], strides = [1, 1]} : vector<16x256xf32> to vector<16x128xf32>
    %438 = vector.broadcast %436 : f32 to vector<16x128xf32>
    %439 = arith.mulf %438, %437 : vector<16x128xf32>
    %440 = arith.addf %435, %439 : vector<16x128xf32>
    %c74 = arith.constant 74 : index
    %441 = memref.load %arg2[%c74] : memref<98xf32, #tpu.memory_space<smem>>
    %442 = vector.extract_strided_slice %421 {offsets = [0, 4], sizes = [16, 128], strides = [1, 1]} : vector<16x256xf32> to vector<16x128xf32>
    %443 = vector.broadcast %441 : f32 to vector<16x128xf32>
    %444 = arith.mulf %443, %442 : vector<16x128xf32>
    %445 = arith.addf %440, %444 : vector<16x128xf32>
    %c75 = arith.constant 75 : index
    %446 = memref.load %arg2[%c75] : memref<98xf32, #tpu.memory_space<smem>>
    %447 = vector.extract_strided_slice %421 {offsets = [0, 5], sizes = [16, 128], strides = [1, 1]} : vector<16x256xf32> to vector<16x128xf32>
    %448 = vector.broadcast %446 : f32 to vector<16x128xf32>
    %449 = arith.mulf %448, %447 : vector<16x128xf32>
    %450 = arith.addf %445, %449 : vector<16x128xf32>
    %c76 = arith.constant 76 : index
    %451 = memref.load %arg2[%c76] : memref<98xf32, #tpu.memory_space<smem>>
    %452 = vector.extract_strided_slice %421 {offsets = [0, 6], sizes = [16, 128], strides = [1, 1]} : vector<16x256xf32> to vector<16x128xf32>
    %453 = vector.broadcast %451 : f32 to vector<16x128xf32>
    %454 = arith.mulf %453, %452 : vector<16x128xf32>
    %455 = arith.addf %450, %454 : vector<16x128xf32>
    %c0_95 = arith.constant 0 : index
    %c0_96 = arith.constant 0 : index
    %456 = vector.load %arg5[%c0_95, %c0_96] : memref<16x128xf32, #tpu.memory_space<vmem>>, vector<16x128xf32>
    %457 = arith.addf %456, %455 : vector<16x128xf32>
    %c0_97 = arith.constant 0 : index
    %c0_98 = arith.constant 0 : index
    %458 = vector.load %arg5[%c0_97, %c0_98] : memref<16x128xf32, #tpu.memory_space<vmem>>, vector<16x128xf32>
    tpu.vector_store %arg5[%c0_97, %c0_98], %457 {strides = array<i32>} : memref<16x128xf32, #tpu.memory_space<vmem>>, vector<16x128xf32>,
    %c1_99 = arith.constant 1 : index
    %c4_100 = arith.constant 4 : index
    %c0_101 = arith.constant 0 : index
    %459 = vector.load %arg4[%c1_99, %c4_100, %c0_101] : memref<2x22x256xf32, #tpu.memory_space<vmem>>, vector<1x16x256xf32>
    %460 = vector.shape_cast %459 : vector<1x16x256xf32> to vector<16x256xf32>
    %c77 = arith.constant 77 : index
    %461 = memref.load %arg2[%c77] : memref<98xf32, #tpu.memory_space<smem>>
    %462 = vector.extract_strided_slice %460 {offsets = [0, 0], sizes = [16, 128], strides = [1, 1]} : vector<16x256xf32> to vector<16x128xf32>
    %463 = vector.broadcast %461 : f32 to vector<16x128xf32>
    %464 = arith.mulf %463, %462 : vector<16x128xf32>
    %c78 = arith.constant 78 : index
    %465 = memref.load %arg2[%c78] : memref<98xf32, #tpu.memory_space<smem>>
    %466 = vector.extract_strided_slice %460 {offsets = [0, 1], sizes = [16, 128], strides = [1, 1]} : vector<16x256xf32> to vector<16x128xf32>
    %467 = vector.broadcast %465 : f32 to vector<16x128xf32>
    %468 = arith.mulf %467, %466 : vector<16x128xf32>
    %469 = arith.addf %464, %468 : vector<16x128xf32>
    %c79 = arith.constant 79 : index
    %470 = memref.load %arg2[%c79] : memref<98xf32, #tpu.memory_space<smem>>
    %471 = vector.extract_strided_slice %460 {offsets = [0, 2], sizes = [16, 128], strides = [1, 1]} : vector<16x256xf32> to vector<16x128xf32>
    %472 = vector.broadcast %470 : f32 to vector<16x128xf32>
    %473 = arith.mulf %472, %471 : vector<16x128xf32>
    %474 = arith.addf %469, %473 : vector<16x128xf32>
    %c80 = arith.constant 80 : index
    %475 = memref.load %arg2[%c80] : memref<98xf32, #tpu.memory_space<smem>>
    %476 = vector.extract_strided_slice %460 {offsets = [0, 3], sizes = [16, 128], strides = [1, 1]} : vector<16x256xf32> to vector<16x128xf32>
    %477 = vector.broadcast %475 : f32 to vector<16x128xf32>
    %478 = arith.mulf %477, %476 : vector<16x128xf32>
    %479 = arith.addf %474, %478 : vector<16x128xf32>
    %c81 = arith.constant 81 : index
    %480 = memref.load %arg2[%c81] : memref<98xf32, #tpu.memory_space<smem>>
    %481 = vector.extract_strided_slice %460 {offsets = [0, 4], sizes = [16, 128], strides = [1, 1]} : vector<16x256xf32> to vector<16x128xf32>
    %482 = vector.broadcast %480 : f32 to vector<16x128xf32>
    %483 = arith.mulf %482, %481 : vector<16x128xf32>
    %484 = arith.addf %479, %483 : vector<16x128xf32>
    %c82 = arith.constant 82 : index
    %485 = memref.load %arg2[%c82] : memref<98xf32, #tpu.memory_space<smem>>
    %486 = vector.extract_strided_slice %460 {offsets = [0, 5], sizes = [16, 128], strides = [1, 1]} : vector<16x256xf32> to vector<16x128xf32>
    %487 = vector.broadcast %485 : f32 to vector<16x128xf32>
    %488 = arith.mulf %487, %486 : vector<16x128xf32>
    %489 = arith.addf %484, %488 : vector<16x128xf32>
    %c83 = arith.constant 83 : index
    %490 = memref.load %arg2[%c83] : memref<98xf32, #tpu.memory_space<smem>>
    %491 = vector.extract_strided_slice %460 {offsets = [0, 6], sizes = [16, 128], strides = [1, 1]} : vector<16x256xf32> to vector<16x128xf32>
    %492 = vector.broadcast %490 : f32 to vector<16x128xf32>
    %493 = arith.mulf %492, %491 : vector<16x128xf32>
    %494 = arith.addf %489, %493 : vector<16x128xf32>
    %c0_102 = arith.constant 0 : index
    %c0_103 = arith.constant 0 : index
    %495 = vector.load %arg5[%c0_102, %c0_103] : memref<16x128xf32, #tpu.memory_space<vmem>>, vector<16x128xf32>
    %496 = arith.addf %495, %494 : vector<16x128xf32>
    %c0_104 = arith.constant 0 : index
    %c0_105 = arith.constant 0 : index
    %497 = vector.load %arg5[%c0_104, %c0_105] : memref<16x128xf32, #tpu.memory_space<vmem>>, vector<16x128xf32>
    tpu.vector_store %arg5[%c0_104, %c0_105], %496 {strides = array<i32>} : memref<16x128xf32, #tpu.memory_space<vmem>>, vector<16x128xf32>,
    %c1_106 = arith.constant 1 : index
    %c5_107 = arith.constant 5 : index
    %c0_108 = arith.constant 0 : index
    %498 = vector.load %arg4[%c1_106, %c5_107, %c0_108] : memref<2x22x256xf32, #tpu.memory_space<vmem>>, vector<1x16x256xf32>
    %499 = vector.shape_cast %498 : vector<1x16x256xf32> to vector<16x256xf32>
    %c84 = arith.constant 84 : index
    %500 = memref.load %arg2[%c84] : memref<98xf32, #tpu.memory_space<smem>>
    %501 = vector.extract_strided_slice %499 {offsets = [0, 0], sizes = [16, 128], strides = [1, 1]} : vector<16x256xf32> to vector<16x128xf32>
    %502 = vector.broadcast %500 : f32 to vector<16x128xf32>
    %503 = arith.mulf %502, %501 : vector<16x128xf32>
    %c85 = arith.constant 85 : index
    %504 = memref.load %arg2[%c85] : memref<98xf32, #tpu.memory_space<smem>>
    %505 = vector.extract_strided_slice %499 {offsets = [0, 1], sizes = [16, 128], strides = [1, 1]} : vector<16x256xf32> to vector<16x128xf32>
    %506 = vector.broadcast %504 : f32 to vector<16x128xf32>
    %507 = arith.mulf %506, %505 : vector<16x128xf32>
    %508 = arith.addf %503, %507 : vector<16x128xf32>
    %c86 = arith.constant 86 : index
    %509 = memref.load %arg2[%c86] : memref<98xf32, #tpu.memory_space<smem>>
    %510 = vector.extract_strided_slice %499 {offsets = [0, 2], sizes = [16, 128], strides = [1, 1]} : vector<16x256xf32> to vector<16x128xf32>
    %511 = vector.broadcast %509 : f32 to vector<16x128xf32>
    %512 = arith.mulf %511, %510 : vector<16x128xf32>
    %513 = arith.addf %508, %512 : vector<16x128xf32>
    %c87 = arith.constant 87 : index
    %514 = memref.load %arg2[%c87] : memref<98xf32, #tpu.memory_space<smem>>
    %515 = vector.extract_strided_slice %499 {offsets = [0, 3], sizes = [16, 128], strides = [1, 1]} : vector<16x256xf32> to vector<16x128xf32>
    %516 = vector.broadcast %514 : f32 to vector<16x128xf32>
    %517 = arith.mulf %516, %515 : vector<16x128xf32>
    %518 = arith.addf %513, %517 : vector<16x128xf32>
    %c88 = arith.constant 88 : index
    %519 = memref.load %arg2[%c88] : memref<98xf32, #tpu.memory_space<smem>>
    %520 = vector.extract_strided_slice %499 {offsets = [0, 4], sizes = [16, 128], strides = [1, 1]} : vector<16x256xf32> to vector<16x128xf32>
    %521 = vector.broadcast %519 : f32 to vector<16x128xf32>
    %522 = arith.mulf %521, %520 : vector<16x128xf32>
    %523 = arith.addf %518, %522 : vector<16x128xf32>
    %c89 = arith.constant 89 : index
    %524 = memref.load %arg2[%c89] : memref<98xf32, #tpu.memory_space<smem>>
    %525 = vector.extract_strided_slice %499 {offsets = [0, 5], sizes = [16, 128], strides = [1, 1]} : vector<16x256xf32> to vector<16x128xf32>
    %526 = vector.broadcast %524 : f32 to vector<16x128xf32>
    %527 = arith.mulf %526, %525 : vector<16x128xf32>
    %528 = arith.addf %523, %527 : vector<16x128xf32>
    %c90 = arith.constant 90 : index
    %529 = memref.load %arg2[%c90] : memref<98xf32, #tpu.memory_space<smem>>
    %530 = vector.extract_strided_slice %499 {offsets = [0, 6], sizes = [16, 128], strides = [1, 1]} : vector<16x256xf32> to vector<16x128xf32>
    %531 = vector.broadcast %529 : f32 to vector<16x128xf32>
    %532 = arith.mulf %531, %530 : vector<16x128xf32>
    %533 = arith.addf %528, %532 : vector<16x128xf32>
    %c0_109 = arith.constant 0 : index
    %c0_110 = arith.constant 0 : index
    %534 = vector.load %arg5[%c0_109, %c0_110] : memref<16x128xf32, #tpu.memory_space<vmem>>, vector<16x128xf32>
    %535 = arith.addf %534, %533 : vector<16x128xf32>
    %c0_111 = arith.constant 0 : index
    %c0_112 = arith.constant 0 : index
    %536 = vector.load %arg5[%c0_111, %c0_112] : memref<16x128xf32, #tpu.memory_space<vmem>>, vector<16x128xf32>
    tpu.vector_store %arg5[%c0_111, %c0_112], %535 {strides = array<i32>} : memref<16x128xf32, #tpu.memory_space<vmem>>, vector<16x128xf32>,
    %c1_113 = arith.constant 1 : index
    %c6_114 = arith.constant 6 : index
    %c0_115 = arith.constant 0 : index
    %537 = vector.load %arg4[%c1_113, %c6_114, %c0_115] : memref<2x22x256xf32, #tpu.memory_space<vmem>>, vector<1x16x256xf32>
    %538 = vector.shape_cast %537 : vector<1x16x256xf32> to vector<16x256xf32>
    %c91 = arith.constant 91 : index
    %539 = memref.load %arg2[%c91] : memref<98xf32, #tpu.memory_space<smem>>
    %540 = vector.extract_strided_slice %538 {offsets = [0, 0], sizes = [16, 128], strides = [1, 1]} : vector<16x256xf32> to vector<16x128xf32>
    %541 = vector.broadcast %539 : f32 to vector<16x128xf32>
    %542 = arith.mulf %541, %540 : vector<16x128xf32>
    %c92 = arith.constant 92 : index
    %543 = memref.load %arg2[%c92] : memref<98xf32, #tpu.memory_space<smem>>
    %544 = vector.extract_strided_slice %538 {offsets = [0, 1], sizes = [16, 128], strides = [1, 1]} : vector<16x256xf32> to vector<16x128xf32>
    %545 = vector.broadcast %543 : f32 to vector<16x128xf32>
    %546 = arith.mulf %545, %544 : vector<16x128xf32>
    %547 = arith.addf %542, %546 : vector<16x128xf32>
    %c93 = arith.constant 93 : index
    %548 = memref.load %arg2[%c93] : memref<98xf32, #tpu.memory_space<smem>>
    %549 = vector.extract_strided_slice %538 {offsets = [0, 2], sizes = [16, 128], strides = [1, 1]} : vector<16x256xf32> to vector<16x128xf32>
    %550 = vector.broadcast %548 : f32 to vector<16x128xf32>
    %551 = arith.mulf %550, %549 : vector<16x128xf32>
    %552 = arith.addf %547, %551 : vector<16x128xf32>
    %c94 = arith.constant 94 : index
    %553 = memref.load %arg2[%c94] : memref<98xf32, #tpu.memory_space<smem>>
    %554 = vector.extract_strided_slice %538 {offsets = [0, 3], sizes = [16, 128], strides = [1, 1]} : vector<16x256xf32> to vector<16x128xf32>
    %555 = vector.broadcast %553 : f32 to vector<16x128xf32>
    %556 = arith.mulf %555, %554 : vector<16x128xf32>
    %557 = arith.addf %552, %556 : vector<16x128xf32>
    %c95 = arith.constant 95 : index
    %558 = memref.load %arg2[%c95] : memref<98xf32, #tpu.memory_space<smem>>
    %559 = vector.extract_strided_slice %538 {offsets = [0, 4], sizes = [16, 128], strides = [1, 1]} : vector<16x256xf32> to vector<16x128xf32>
    %560 = vector.broadcast %558 : f32 to vector<16x128xf32>
    %561 = arith.mulf %560, %559 : vector<16x128xf32>
    %562 = arith.addf %557, %561 : vector<16x128xf32>
    %c96 = arith.constant 96 : index
    %563 = memref.load %arg2[%c96] : memref<98xf32, #tpu.memory_space<smem>>
    %564 = vector.extract_strided_slice %538 {offsets = [0, 5], sizes = [16, 128], strides = [1, 1]} : vector<16x256xf32> to vector<16x128xf32>
    %565 = vector.broadcast %563 : f32 to vector<16x128xf32>
    %566 = arith.mulf %565, %564 : vector<16x128xf32>
    %567 = arith.addf %562, %566 : vector<16x128xf32>
    %c97 = arith.constant 97 : index
    %568 = memref.load %arg2[%c97] : memref<98xf32, #tpu.memory_space<smem>>
    %569 = vector.extract_strided_slice %538 {offsets = [0, 6], sizes = [16, 128], strides = [1, 1]} : vector<16x256xf32> to vector<16x128xf32>
    %570 = vector.broadcast %568 : f32 to vector<16x128xf32>
    %571 = arith.mulf %570, %569 : vector<16x128xf32>
    %572 = arith.addf %567, %571 : vector<16x128xf32>
    %c0_116 = arith.constant 0 : index
    %c0_117 = arith.constant 0 : index
    %573 = vector.load %arg5[%c0_116, %c0_117] : memref<16x128xf32, #tpu.memory_space<vmem>>, vector<16x128xf32>
    %574 = arith.addf %573, %572 : vector<16x128xf32>
    %c0_118 = arith.constant 0 : index
    %c0_119 = arith.constant 0 : index
    %575 = vector.load %arg5[%c0_118, %c0_119] : memref<16x128xf32, #tpu.memory_space<vmem>>, vector<16x128xf32>
    tpu.vector_store %arg5[%c0_118, %c0_119], %574 {strides = array<i32>} : memref<16x128xf32, #tpu.memory_space<vmem>>, vector<16x128xf32>,
    %c0_120 = arith.constant 0 : index
    %c0_121 = arith.constant 0 : index
    %576 = vector.load %arg5[%c0_120, %c0_121] : memref<16x128xf32, #tpu.memory_space<vmem>>, vector<16x128xf32>
    %577 = arith.negf %576 : vector<16x128xf32>
    %578 = math.exp %577 : vector<16x128xf32>
    %cst_122 = arith.constant 1.000000e+00 : f32
    %579 = vector.broadcast %cst_122 : f32 to vector<16x128xf32>
    %580 = arith.addf %579, %578 : vector<16x128xf32>
    %581 = arith.divf %579, %580 : vector<16x128xf32>
    %c0_123 = arith.constant 0 : index
    %c0_124 = arith.constant 0 : index
    %c0_125 = arith.constant 0 : index
    %582 = vector.load %arg3[%c0_123, %c0_124, %c0_125] : memref<1x16x128xf32, #tpu.memory_space<vmem>>, vector<1x16x128xf32>
    %583 = vector.shape_cast %582 : vector<1x16x128xf32> to vector<16x128xf32>
    %584 = vector.shape_cast %581 : vector<16x128xf32> to vector<1x16x128xf32>
    tpu.vector_store %arg3[%c0_123, %c0_124, %c0_125], %584 {strides = array<i32>} : memref<1x16x128xf32, #tpu.memory_space<vmem>>, vector<1x16x128xf32>,
    return
  }
  func.func @transform_0(%arg0: i32) -> (i32, i32, i32, i32) {
    %c0_i32 = arith.constant 0 : i32
    %c0_i32_0 = arith.constant 0 : i32
    %c0_i32_1 = arith.constant 0 : i32
    %c0_i32_2 = arith.constant 0 : i32
    return %arg0, %c0_i32, %c0_i32_0, %c0_i32_1 : i32, i32, i32, i32
  }
  func.func @transform_1(%arg0: i32) -> i32 {
    %c0_i32 = arith.constant 0 : i32
    %c0_i32_0 = arith.constant 0 : i32
    return %c0_i32 : i32
  }
  func.func @transform_2(%arg0: i32) -> (i32, i32, i32) {
    %c0_i32 = arith.constant 0 : i32
    %c0_i32_0 = arith.constant 0 : i32
    %c0_i32_1 = arith.constant 0 : i32
    return %arg0, %c0_i32, %c0_i32_0 : i32, i32, i32
  }
}

</mosaic_0001>

<llo_original>
// kernel: tpu_custom_call.1
$region0: #{tpu_custom_call.1}
  #allocation0 [shape = 'u32[]', space=smem, size = 0x4, offset = 0x4, fixed_abs, tag = 'smem constant byte address 0x4 - core index']
  #allocation1 [shape = 'u32[72,128]{1,0:T(1,128)}', space=vmem, size = 0x9000, scoped, tag = 'internal scratch']
  #allocation2 [shape = 'f32[2,22,256]{2,1,0:T(8,128)}', space=vmem, size = 0xc000, scoped, tag = 'scratch operand']
  #allocation3 [shape = 'f32[16,128]{1,0:T(8,128)}', space=vmem, size = 0x2000, scoped, tag = 'scratch operand']
  %s0 = inlined_call_operand.hbm [shape: f32[2,4,16,16], index: 0, kind: input, shape index: {}]
  %s1 = inlined_call_operand.hbm [shape: f32[98], index: 1, kind: input, shape index: {}]
  %s2 = inlined_call_operand.hbm [shape: f32[2,16,128], index: 2, kind: output, shape index: {}]
  %s3 = sld [smem:[#allocation0]]
  $region49: #{tpu_custom_call.1} parent=0
    _
  %s5 = ssub.s32 1, %s3
  %s6 = scalar_select 0, %s5, %s3
  $region1: #{tpu_custom_call.1} parent=0
    #allocation4 [shape = 'u8[65536]{0}', space=vmem, size = 0x10000, scoped, tag = 'input window, operand 0']
    #allocation5 [shape = 's32[2]{0}', space=sflag, size = 0x8, scoped, tag = 'scoped memory for tpu_custom_call.1']
    #allocation6 [shape = 's32[2]{0}', space=sflag, size = 0x8, scoped, tag = 'scoped memory for tpu_custom_call.1']
    #allocation7 [shape = 's32[2]{0}', space=sflag, size = 0x8, scoped, tag = 'scoped memory for tpu_custom_call.1']
    #allocation8 [shape = 'u8[512]{0}', space=smem, size = 0x200, scoped, tag = 'input window, operand 1, single buffered']
    #allocation9 [shape = 'u8[16384]{0}', space=vmem, size = 0x4000, scoped, tag = 'output window, operand 0']
    %7 = vsyncpa [#allocation5], 0
    %s8 = scalar_lea.sflag [#allocation5], 1
    %9 = vsyncpa %s8, 0
    %10 = vsyncpa [#allocation7], 0
    %11 = vsyncpa [#allocation6], 0
    %s12 = scalar_lea.sflag [#allocation6], 1
    %13 = vsyncpa %s12, 0
    loop: start=0, step=1, limit=4
    $region2: #{tpu_custom_call.1} parent=1 // loop_pre_header
      _
    $region3: #{tpu_custom_call.1} parent=1 // loop_header
      %s15 = sphi 0, %s19
      %p16 = scmp.ge.s32.totalorder %s15, 4
      %s25 = sphi 0, %s27
      %s28 = sphi 0, %s25
      %s29 = sphi 0, %s28
      %s45 = sphi 0, %s29
      %s49 = sphi 0, %s49
      %s51 = sphi 0, %s49
      %s52 = sphi 0, %s51
      %s66 = sphi 0, %s52
      %s72 = sphi 0, %s74
      %s75 = sphi 0, %s72
      %s76 = sphi 0, %s75
      %s92 = sphi 0, %s76
    $region4: #{tpu_custom_call.1} parent=1 // loop_header_branch
      %18 = sbr.rel (%p16) target = $region8
    $region5: #{tpu_custom_call.1} parent=1 // loop_body
      %s20 = ssub.s32 %s15, 1
      %s21 = ssub.s32 %s15, 2
      %s22 = sadd.s32 %s15, 1
      %s23 = ssub.s32 %s15, %s22
      %p24 = scmp.eq.s32.totalorder %s23, 0
      %s26 = sadd.s32 %s25, 1
      %s27 = scalar_select %p24, %s25, %s26
      %p30 = pneg %p24
      %p31 = scmp.eq.s32.totalorder %s15, 1
      %p32 = por %p30, %p31
      %p33 = scmp.ne.s32.totalorder %s25, %s28
      %p34 = scmp.eq.s32.totalorder %s15, 0
      %p35 = por %p33, %p34
      %p36 = scmp.ne.s32.totalorder %s25, %s28
      %p37 = scmp.eq.s32.totalorder %s20, 1
      %p38 = por %p36, %p37
      %p39 = scmp.ne.s32.totalorder %s28, %s29
      %p40 = scmp.eq.s32.totalorder %s20, 0
      %p41 = por %p39, %p40
      %p42 = scmp.ne.s32.totalorder %s28, %s29
      %p43 = scmp.eq.s32.totalorder %s21, 1
      %p44 = por %p42, %p43
      %p46 = scmp.ne.s32.totalorder %s29, %s45
      %p47 = scmp.eq.s32.totalorder %s21, 0
      %p48 = por %p46, %p47
      %s50 = sadd.s32 %s49, 1
      %p53 = scmp.eq.s32.totalorder %s15, 1
      %p54 = scmp.ne.s32.totalorder %s49, %s51
      %p55 = scmp.eq.s32.totalorder %s15, 0
      %p56 = por %p54, %p55
      %p57 = scmp.ne.s32.totalorder %s49, %s51
      %p58 = scmp.eq.s32.totalorder %s20, 1
      %p59 = por %p57, %p58
      %p60 = scmp.ne.s32.totalorder %s51, %s52
      %p61 = scmp.eq.s32.totalorder %s20, 0
      %p62 = por %p60, %p61
      %p63 = scmp.ne.s32.totalorder %s51, %s52
      %p64 = scmp.eq.s32.totalorder %s21, 1
      %p65 = por %p63, %p64
      %p67 = scmp.ne.s32.totalorder %s52, %s66
      %p68 = scmp.eq.s32.totalorder %s21, 0
      %p69 = por %p67, %p68
      %s70 = ssub.s32 %s15, %s22
      %p71 = scmp.eq.s32.totalorder %s70, 0
      %s73 = sadd.s32 %s72, 1
      %s74 = scalar_select %p71, %s72, %s73
      %p77 = pneg %p71
      %p78 = scmp.eq.s32.totalorder %s15, 1
      %p79 = por %p77, %p78
      %p80 = scmp.ne.s32.totalorder %s72, %s75
      %p81 = scmp.eq.s32.totalorder %s15, 0
      %p82 = por %p80, %p81
      %p83 = scmp.ne.s32.totalorder %s72, %s75
      %p84 = scmp.eq.s32.totalorder %s20, 1
      %p85 = por %p83, %p84
      %p86 = scmp.ne.s32.totalorder %s75, %s76
      %p87 = scmp.eq.s32.totalorder %s20, 0
      %p88 = por %p86, %p87
      %p89 = scmp.ne.s32.totalorder %s75, %s76
      %p90 = scmp.eq.s32.totalorder %s21, 1
      %p91 = por %p89, %p90
      %p93 = scmp.ne.s32.totalorder %s76, %s92
      %p94 = scmp.eq.s32.totalorder %s21, 0
      %p95 = por %p93, %p94
      %p96 = scmp.le.s32.totalorder 1, %s15
      %p97 = scmp.lt.s32.totalorder %s15, 3
      %p98 = pnand %p96, %p97
      %p99 = pneg %p98
      // Predicated region
      $region9: #{tpu_custom_call.1} parent=5 // pred_check
        _
      $region10: #{tpu_custom_call.1} parent=5 // pred_check_branch
        %101 = sbr.rel (%p98) target = $region12
      $region11: #{tpu_custom_call.1} parent=5 // pred_region
        %s102 = ssub.s32 %s15, 1
        // Predicated region
        $region13: #{tpu_custom_call.1} parent=11 // pred_check
          %p103 = pneg %p62
        $region14: #{tpu_custom_call.1} parent=11 // pred_check_branch
          %105 = sbr.rel (%p103) target = $region16
        $region15: #{tpu_custom_call.1} parent=11 // pred_region
          %107 = vsyncadd [#allocation7], 0
          %s109 = sshll.u32 %s1, 4
          %s110 = int_to_ptr.hbm [resolvable:$true] %s109
          %112 = dma.hbm_to_smem %s110, 16, [#allocation8], [#allocation7]
        $region16: #{tpu_custom_call.1} parent=11 // pred_fallthru
          _
      $region12: #{tpu_custom_call.1} parent=5 // pred_fallthru
        _
      %p113 = scmp.lt.s32.totalorder %s15, 2
      // Predicated region
      $region17: #{tpu_custom_call.1} parent=5 // pred_check
        %p114 = pneg %p113
      $region18: #{tpu_custom_call.1} parent=5 // pred_check_branch
        %116 = sbr.rel (%p114) target = $region20
      $region19: #{tpu_custom_call.1} parent=5 // pred_region
        // Predicated region
        $region21: #{tpu_custom_call.1} parent=19 // pred_check
          %p117 = pneg %p35
        $region22: #{tpu_custom_call.1} parent=19 // pred_check_branch
          %119 = sbr.rel (%p117) target = $region24
        $region23: #{tpu_custom_call.1} parent=19 // pred_region
          %s120 = sand.u32 %s25, 1
          %s121 = scalar_lea.sflag [#allocation5], %s120
          %s122 = sand.u32 %s25, 1
          %s123 = smul.addr %s122, 64
          %s124 = scalar_lea.vmem [#allocation4], %s123
          %126 = vsyncadd %s121, 0
          %s127 = smul.addr %s15, 8
          %s128 = smul.addr %s127, 8
          %s129 = scalar_lea.hbm %s0, %s128
          %s130 = sshll.u32 %s129, 4
          %s131 = int_to_ptr.hbm [resolvable:$true] %s130
          %s132 = sshll.u32 %s124, 4
          %s133 = int_to_ptr.vmem [resolvable:$true] %s132
          %138 = dma.hbm_to_vmem [thread:$0]  %s131, 1024, %s133, %s121, 128, 128, 8
        $region24: #{tpu_custom_call.1} parent=19 // pred_fallthru
          _
      $region20: #{tpu_custom_call.1} parent=5 // pred_fallthru
        _
      %p139 = scmp.le.s32.totalorder 1, %s15
      %p140 = scmp.lt.s32.totalorder %s15, 3
      %p141 = pnand %p139, %p140
      %p142 = pneg %p141
      // Predicated region
      $region25: #{tpu_custom_call.1} parent=5 // pred_check
        _
      $region26: #{tpu_custom_call.1} parent=5 // pred_check_branch
        %144 = sbr.rel (%p141) target = $region28
      $region27: #{tpu_custom_call.1} parent=5 // pred_region
        %s145 = ssub.s32 %s15, 1
        %s146 = sand.u32 %s28, 1
        %s147 = scalar_lea.sflag [#allocation5], %s146
        %s148 = sand.u32 %s28, 1
        %s149 = smul.addr %s148, 64
        %s150 = scalar_lea.vmem [#allocation4], %s149
        // Predicated region
        $region29: #{tpu_custom_call.1} parent=27 // pred_check
          %p151 = pneg %p41
        $region30: #{tpu_custom_call.1} parent=27 // pred_check_branch
          %153 = sbr.rel (%p151) target = $region32
        $region31: #{tpu_custom_call.1} parent=27 // pred_region
          %155 = dma.done %s147, 1024
        $region32: #{tpu_custom_call.1} parent=27 // pred_fallthru
          _
        // Predicated region
        $region33: #{tpu_custom_call.1} parent=27 // pred_check
          %p156 = pneg %p62
        $region34: #{tpu_custom_call.1} parent=27 // pred_check_branch
          %158 = sbr.rel (%p156) target = $region36
        $region35: #{tpu_custom_call.1} parent=27 // pred_region
          %160 = dma.done [#allocation7], 16
        $region36: #{tpu_custom_call.1} parent=27 // pred_fallthru
          _
        %161 = sfence
        %s162 = sand.u32 %s28, 1
        %s163 = scalar_lea.sflag [#allocation5], %s162
        %s164 = sand.u32 %s28, 1
        %s165 = smul.addr %s164, 64
        %s166 = scalar_lea.vmem [#allocation4], %s165
        %p167 = pneg %p41
        %p168 = pneg %p38
        %p169 = pneg %p62
        %p170 = pneg %p59
        %p171 = pneg %p88
        %p172 = pneg %p85
        %s173 = sand.u32 %s75, 1
        %s174 = scalar_lea.sflag [#allocation6], %s173
        %s175 = sand.u32 %s75, 1
        %s176 = smul.addr %s175, 16
        %s177 = scalar_lea.vmem [#allocation9], %s176
        %178 = vst [vmem:[#allocation2] sm:$0xff] 0.0
        %179 = vst [vmem:[#allocation2 + $0x8] sm:$0xff] 0.0
        %180 = vst [vmem:[#allocation2 + $0x10] sm:$0xff] 0.0
        %181 = vst [vmem:[#allocation2 + $0x18] sm:$0xff] 0.0
        %182 = vst [vmem:[#allocation2 + $0x20] sm:$0x3f] 0.0
        %183 = vst [vmem:[#allocation2 + $0x28] sm:$0x3f] 0.0
        %184 = vst [vmem:[#allocation2 + $0x30] sm:$0xff] 0.0
        %185 = vst [vmem:[#allocation2 + $0x38] sm:$0xff] 0.0
        %186 = vst [vmem:[#allocation2 + $0x40] sm:$0xff] 0.0
        %187 = vst [vmem:[#allocation2 + $0x48] sm:$0xff] 0.0
        %188 = vst [vmem:[#allocation2 + $0x50] sm:$0x3f] 0.0
        %189 = vst [vmem:[#allocation2 + $0x58] sm:$0x3f] 0.0
        %v190 = vld [vmem:[%s150] sm:$0xff]
        %v191 = vld [vmem:[%s150 + $0x8] sm:$0xff]
        %v192 = vadd.f32 %v190, 0.0
        %v193 = vadd.f32 %v191, 0.0
        %s194 = scalar_lea.vmem %s150, 16 [#allocation4]
        %v195 = vld [vmem:[%s194] sm:$0xff]
        %v196 = vld [vmem:[%s194 + $0x8] sm:$0xff]
        %v197 = vadd.f32 %v192, %v195
        %v198 = vadd.f32 %v193, %v196
        %v199 = vmax.f32 %v190, %v195
        %v200 = vmax.f32 %v191, %v196
        %s201 = scalar_lea.vmem %s150, 32 [#allocation4]
        %v202 = vld [vmem:[%s201] sm:$0xff]
        %v203 = vld [vmem:[%s201 + $0x8] sm:$0xff]
        %v204 = vadd.f32 %v197, %v202
        %v205 = vadd.f32 %v198, %v203
        %v206 = vmax.f32 %v199, %v202
        %v207 = vmax.f32 %v200, %v203
        %s208 = scalar_lea.vmem %s150, 48 [#allocation4]
        %v209 = vld [vmem:[%s208] sm:$0xff]
        %v210 = vld [vmem:[%s208 + $0x8] sm:$0xff]
        %v211 = vadd.f32 %v204, %v209
        %v212 = vadd.f32 %v205, %v210
        %v213 = vmax.f32 %v206, %v209
        %v214 = vmax.f32 %v207, %v210
        %v215 = vmul.f32 %v211, 0.25
        %v216 = vmul.f32 %v212, 0.25
        %vm219 = vcmask 1042432
        %v220 = vrot.slane %v215, 5
        %v221 = vrot.slane %v216, 5
        %v222 = vsel %vm219, %v220, %v221
        %223 = vrot.lane.b32.xlu0 %v220, 3
        %v224 = vpop.permute.xlu0 %223
        %225 = vrot.lane.b32.xlu0 %v222, 3
        %v226 = vpop.permute.xlu0 %225
        %227 = vrot.lane.b32.xlu0 %v221, 3
        %v228 = vpop.permute.xlu0 %227
        %vm232 = vcmask 154651
        %233 = vst.msk [vmem:[#allocation2] sm:$0xf8] %vm232, %v224
        %vm234 = vcmask 154648
        %235 = vst.msk [vmem:[#allocation2 + $0x10] sm:$0xff] %vm234, %v226
        %vm236 = vcmask 149528
        %237 = vst.msk [vmem:[#allocation2 + $0x20] sm:$0x7] %vm236, %v228
        %v240 = vrot.slane %v213, 5
        %v241 = vrot.slane %v214, 5
        %v242 = vsel %vm219, %v240, %v241
        %243 = vrot.lane.b32.xlu0 %v240, 3
        %v244 = vpop.permute.xlu0 %243
        %245 = vrot.lane.b32.xlu0 %v242, 3
        %v246 = vpop.permute.xlu0 %245
        %247 = vrot.lane.b32.xlu0 %v241, 3
        %v248 = vpop.permute.xlu0 %247
        %s252 = scalar_lea.vmem [#allocation2], 48
        %253 = vst.msk [vmem:[%s252] sm:$0xf8] %vm232, %v244
        %254 = vst.msk [vmem:[%s252 + $0x10] sm:$0xff] %vm234, %v246
        %255 = vst.msk [vmem:[%s252 + $0x20] sm:$0x7] %vm236, %v248
        %v256 = vld [vmem:[#allocation2] sm:$0xff]
        %v257 = vld [vmem:[#allocation2 + $0x8] sm:$0xff]
        %v258 = vld [vmem:[#allocation2 + $0x10] sm:$0xff]
        %v259 = vld [vmem:[#allocation2 + $0x18] sm:$0xff]
        %s260 = sld [smem:[#allocation8]]
        %v261 = vstv %s260
        %v262 = vmul.f32 %v261, %v256
        %v263 = vmul.f32 %v261, %v258
        %s264 = sld [smem:[#allocation8 + $0x1]]
        %v265 = vstv %s264
        %v266 = vmul.f32 %v265, %v256
        %v267 = vmul.f32 %v265, %v257
        %v268 = vmul.f32 %v265, %v258
        %v269 = vmul.f32 %v265, %v259
        %274 = vrot.lane.b32.xlu0 %v266, 127
        %v275 = vpop.permute.xlu0 %274
        %276 = vrot.lane.b32.xlu0 %v267, 127
        %v277 = vpop.permute.xlu0 %276
        %278 = vrot.lane.b32.xlu0 %v268, 127
        %v279 = vpop.permute.xlu0 %278
        %280 = vrot.lane.b32.xlu0 %v269, 127
        %v281 = vpop.permute.xlu0 %280
        %vm282 = vcmask 1039360
        %v283 = vsel %vm282, %v275, %v277
        %v284 = vsel %vm282, %v279, %v281
        %v287 = vadd.f32 %v262, %v283
        %v288 = vadd.f32 %v263, %v284
        %s289 = sld [smem:[#allocation8 + $0x2]]
        %v290 = vstv %s289
        %v291 = vmul.f32 %v290, %v256
        %v292 = vmul.f32 %v290, %v257
        %v293 = vmul.f32 %v290, %v258
        %v294 = vmul.f32 %v290, %v259
        %299 = vrot.lane.b32.xlu0 %v291, 126
        %v300 = vpop.permute.xlu0 %299
        %301 = vrot.lane.b32.xlu0 %v292, 126
        %v302 = vpop.permute.xlu0 %301
        %303 = vrot.lane.b32.xlu0 %v293, 126
        %v304 = vpop.permute.xlu0 %303
        %305 = vrot.lane.b32.xlu0 %v294, 126
        %v306 = vpop.permute.xlu0 %305
        %vm307 = vcmask 1031168
        %v308 = vsel %vm307, %v300, %v302
        %v309 = vsel %vm307, %v304, %v306
        %v312 = vadd.f32 %v287, %v308
        %v313 = vadd.f32 %v288, %v309
        %s314 = sld [smem:[#allocation8 + $0x3]]
        %v315 = vstv %s314
        %v316 = vmul.f32 %v315, %v256
        %v317 = vmul.f32 %v315, %v257
        %v318 = vmul.f32 %v315, %v258
        %v319 = vmul.f32 %v315, %v259
        %324 = vrot.lane.b32.xlu0 %v316, 125
        %v325 = vpop.permute.xlu0 %324
        %326 = vrot.lane.b32.xlu0 %v317, 125
        %v327 = vpop.permute.xlu0 %326
        %328 = vrot.lane.b32.xlu0 %v318, 125
        %v329 = vpop.permute.xlu0 %328
        %330 = vrot.lane.b32.xlu0 %v319, 125
        %v331 = vpop.permute.xlu0 %330
        %vm332 = vcmask 1022976
        %v333 = vsel %vm332, %v325, %v327
        %v334 = vsel %vm332, %v329, %v331
        %v337 = vadd.f32 %v312, %v333
        %v338 = vadd.f32 %v313, %v334
        %s339 = sld [smem:[#allocation8 + $0x4]]
        %v340 = vstv %s339
        %v341 = vmul.f32 %v340, %v256
        %v342 = vmul.f32 %v340, %v257
        %v343 = vmul.f32 %v340, %v258
        %v344 = vmul.f32 %v340, %v259
        %349 = vrot.lane.b32.xlu0 %v341, 124
        %v350 = vpop.permute.xlu0 %349
        %351 = vrot.lane.b32.xlu0 %v342, 124
        %v352 = vpop.permute.xlu0 %351
        %353 = vrot.lane.b32.xlu0 %v343, 124
        %v354 = vpop.permute.xlu0 %353
        %355 = vrot.lane.b32.xlu0 %v344, 124
        %v356 = vpop.permute.xlu0 %355
        %vm357 = vcmask 1014784
        %v358 = vsel %vm357, %v350, %v352
        %v359 = vsel %vm357, %v354, %v356
        %v362 = vadd.f32 %v337, %v358
        %v363 = vadd.f32 %v338, %v359
        %s364 = sld [smem:[#allocation8 + $0x5]]
        %v365 = vstv %s364
        %v366 = vmul.f32 %v365, %v256
        %v367 = vmul.f32 %v365, %v257
        %v368 = vmul.f32 %v365, %v258
        %v369 = vmul.f32 %v365, %v259
        %374 = vrot.lane.b32.xlu0 %v366, 123
        %v375 = vpop.permute.xlu0 %374
        %376 = vrot.lane.b32.xlu0 %v367, 123
        %v377 = vpop.permute.xlu0 %376
        %378 = vrot.lane.b32.xlu0 %v368, 123
        %v379 = vpop.permute.xlu0 %378
        %380 = vrot.lane.b32.xlu0 %v369, 123
        %v381 = vpop.permute.xlu0 %380
        %vm382 = vcmask 1006592
        %v383 = vsel %vm382, %v375, %v377
        %v384 = vsel %vm382, %v379, %v381
        %v387 = vadd.f32 %v362, %v383
        %v388 = vadd.f32 %v363, %v384
        %s389 = sld [smem:[#allocation8 + $0x6]]
        %v390 = vstv %s389
        %v391 = vmul.f32 %v390, %v256
        %v392 = vmul.f32 %v390, %v257
        %v393 = vmul.f32 %v390, %v258
        %v394 = vmul.f32 %v390, %v259
        %399 = vrot.lane.b32.xlu0 %v391, 122
        %v400 = vpop.permute.xlu0 %399
        %401 = vrot.lane.b32.xlu0 %v392, 122
        %v402 = vpop.permute.xlu0 %401
        %403 = vrot.lane.b32.xlu0 %v393, 122
        %v404 = vpop.permute.xlu0 %403
        %405 = vrot.lane.b32.xlu0 %v394, 122
        %v406 = vpop.permute.xlu0 %405
        %vm407 = vcmask 998400
        %v408 = vsel %vm407, %v400, %v402
        %v409 = vsel %vm407, %v404, %v406
        %v412 = vadd.f32 %v387, %v408
        %v413 = vadd.f32 %v388, %v409
        %414 = vst [vmem:[#allocation3] sm:$0xff] %v412
        %415 = vst [vmem:[#allocation3 + $0x8] sm:$0xff] %v413
        %v416 = vld [vmem:[#allocation2] sm:$0xfe]
        %v417 = vld [vmem:[#allocation2 + $0x8] sm:$0xfe]
        %v418 = vld [vmem:[#allocation2 + $0x10] sm:$0xff]
        %v419 = vld [vmem:[#allocation2 + $0x18] sm:$0xff]
        %v420 = vld [vmem:[#allocation2 + $0x20] sm:$0x1]
        %v421 = vld [vmem:[#allocation2 + $0x28] sm:$0x1]
        %s422 = sld [smem:[#allocation8 + $0x7]]
        %v423 = vstv %s422
        %v424 = vmul.f32 %v423, %v416
        %v425 = vmul.f32 %v423, %v418
        %v426 = vmul.f32 %v423, %v420
        %s427 = sld [smem:[#allocation8 + $0x8]]
        %v428 = vstv %s427
        %v429 = vmul.f32 %v428, %v416
        %v430 = vmul.f32 %v428, %v417
        %v431 = vmul.f32 %v428, %v418
        %v432 = vmul.f32 %v428, %v419
        %v433 = vmul.f32 %v428, %v420
        %v434 = vmul.f32 %v428, %v421
        %441 = vrot.lane.b32.xlu0 %v429, 127
        %v442 = vpop.permute.xlu0 %441
        %443 = vrot.lane.b32.xlu0 %v430, 127
        %v444 = vpop.permute.xlu0 %443
        %445 = vrot.lane.b32.xlu0 %v431, 127
        %v446 = vpop.permute.xlu0 %445
        %447 = vrot.lane.b32.xlu0 %v432, 127
        %v448 = vpop.permute.xlu0 %447
        %449 = vrot.lane.b32.xlu0 %v433, 127
        %v450 = vpop.permute.xlu0 %449
        %451 = vrot.lane.b32.xlu0 %v434, 127
        %v452 = vpop.permute.xlu0 %451
        %v453 = vsel %vm282, %v442, %v444
        %v454 = vsel %vm282, %v446, %v448
        %v455 = vsel %vm282, %v450, %v452
        %v459 = vadd.f32 %v424, %v453
        %v460 = vadd.f32 %v425, %v454
        %v461 = vadd.f32 %v426, %v455
        %s462 = sld [smem:[#allocation8 + $0x9]]
        %v463 = vstv %s462
        %v464 = vmul.f32 %v463, %v416
        %v465 = vmul.f32 %v463, %v417
        %v466 = vmul.f32 %v463, %v418
        %v467 = vmul.f32 %v463, %v419
        %v468 = vmul.f32 %v463, %v420
        %v469 = vmul.f32 %v463, %v421
        %476 = vrot.lane.b32.xlu0 %v464, 126
        %v477 = vpop.permute.xlu0 %476
        %478 = vrot.lane.b32.xlu0 %v465, 126
        %v479 = vpop.permute.xlu0 %478
        %480 = vrot.lane.b32.xlu0 %v466, 126
        %v481 = vpop.permute.xlu0 %480
        %482 = vrot.lane.b32.xlu0 %v467, 126
        %v483 = vpop.permute.xlu0 %482
        %484 = vrot.lane.b32.xlu0 %v468, 126
        %v485 = vpop.permute.xlu0 %484
        %486 = vrot.lane.b32.xlu0 %v469, 126
        %v487 = vpop.permute.xlu0 %486
        %v488 = vsel %vm307, %v477, %v479
        %v489 = vsel %vm307, %v481, %v483
        %v490 = vsel %vm307, %v485, %v487
        %v494 = vadd.f32 %v459, %v488
        %v495 = vadd.f32 %v460, %v489
        %v496 = vadd.f32 %v461, %v490
        %s497 = sld [smem:[#allocation8 + $0xa]]
        %v498 = vstv %s497
        %v499 = vmul.f32 %v498, %v416
        %v500 = vmul.f32 %v498, %v417
        %v501 = vmul.f32 %v498, %v418
        %v502 = vmul.f32 %v498, %v419
        %v503 = vmul.f32 %v498, %v420
        %v504 = vmul.f32 %v498, %v421
        %511 = vrot.lane.b32.xlu0 %v499, 125
        %v512 = vpop.permute.xlu0 %511
        %513 = vrot.lane.b32.xlu0 %v500, 125
        %v514 = vpop.permute.xlu0 %513
        %515 = vrot.lane.b32.xlu0 %v501, 125
        %v516 = vpop.permute.xlu0 %515
        %517 = vrot.lane.b32.xlu0 %v502, 125
        %v518 = vpop.permute.xlu0 %517
        %519 = vrot.lane.b32.xlu0 %v503, 125
        %v520 = vpop.permute.xlu0 %519
        %521 = vrot.lane.b32.xlu0 %v504, 125
        %v522 = vpop.permute.xlu0 %521
        %v523 = vsel %vm332, %v512, %v514
        %v524 = vsel %vm332, %v516, %v518
        %v525 = vsel %vm332, %v520, %v522
        %v529 = vadd.f32 %v494, %v523
        %v530 = vadd.f32 %v495, %v524
        %v531 = vadd.f32 %v496, %v525
        %s532 = sld [smem:[#allocation8 + $0xb]]
        %v533 = vstv %s532
        %v534 = vmul.f32 %v533, %v416
        %v535 = vmul.f32 %v533, %v417
        %v536 = vmul.f32 %v533, %v418
        %v537 = vmul.f32 %v533, %v419
        %v538 = vmul.f32 %v533, %v420
        %v539 = vmul.f32 %v533, %v421
        %546 = vrot.lane.b32.xlu0 %v534, 124
        %v547 = vpop.permute.xlu0 %546
        %548 = vrot.lane.b32.xlu0 %v535, 124
        %v549 = vpop.permute.xlu0 %548
        %550 = vrot.lane.b32.xlu0 %v536, 124
        %v551 = vpop.permute.xlu0 %550
        %552 = vrot.lane.b32.xlu0 %v537, 124
        %v553 = vpop.permute.xlu0 %552
        %554 = vrot.lane.b32.xlu0 %v538, 124
        %v555 = vpop.permute.xlu0 %554
        %556 = vrot.lane.b32.xlu0 %v539, 124
        %v557 = vpop.permute.xlu0 %556
        %v558 = vsel %vm357, %v547, %v549
        %v559 = vsel %vm357, %v551, %v553
        %v560 = vsel %vm357, %v555, %v557
        %v564 = vadd.f32 %v529, %v558
        %v565 = vadd.f32 %v530, %v559
        %v566 = vadd.f32 %v531, %v560
        %s567 = sld [smem:[#allocation8 + $0xc]]
        %v568 = vstv %s567
        %v569 = vmul.f32 %v568, %v416
        %v570 = vmul.f32 %v568, %v417
        %v571 = vmul.f32 %v568, %v418
        %v572 = vmul.f32 %v568, %v419
        %v573 = vmul.f32 %v568, %v420
        %v574 = vmul.f32 %v568, %v421
        %581 = vrot.lane.b32.xlu0 %v569, 123
        %v582 = vpop.permute.xlu0 %581
        %583 = vrot.lane.b32.xlu0 %v570, 123
        %v584 = vpop.permute.xlu0 %583
        %585 = vrot.lane.b32.xlu0 %v571, 123
        %v586 = vpop.permute.xlu0 %585
        %587 = vrot.lane.b32.xlu0 %v572, 123
        %v588 = vpop.permute.xlu0 %587
        %589 = vrot.lane.b32.xlu0 %v573, 123
        %v590 = vpop.permute.xlu0 %589
        %591 = vrot.lane.b32.xlu0 %v574, 123
        %v592 = vpop.permute.xlu0 %591
        %v593 = vsel %vm382, %v582, %v584
        %v594 = vsel %vm382, %v586, %v588
        %v595 = vsel %vm382, %v590, %v592
        %v599 = vadd.f32 %v564, %v593
        %v600 = vadd.f32 %v565, %v594
        %v601 = vadd.f32 %v566, %v595
        %s602 = sld [smem:[#allocation8 + $0xd]]
        %v603 = vstv %s602
        %v604 = vmul.f32 %v603, %v416
        %v605 = vmul.f32 %v603, %v417
        %v606 = vmul.f32 %v603, %v418
        %v607 = vmul.f32 %v603, %v419
        %v608 = vmul.f32 %v603, %v420
        %v609 = vmul.f32 %v603, %v421
        %616 = vrot.lane.b32.xlu0 %v604, 122
        %v617 = vpop.permute.xlu0 %616
        %618 = vrot.lane.b32.xlu0 %v605, 122
        %v619 = vpop.permute.xlu0 %618
        %620 = vrot.lane.b32.xlu0 %v606, 122
        %v621 = vpop.permute.xlu0 %620
        %622 = vrot.lane.b32.xlu0 %v607, 122
        %v623 = vpop.permute.xlu0 %622
        %624 = vrot.lane.b32.xlu0 %v608, 122
        %v625 = vpop.permute.xlu0 %624
        %626 = vrot.lane.b32.xlu0 %v609, 122
        %v627 = vpop.permute.xlu0 %626
        %v628 = vsel %vm407, %v617, %v619
        %v629 = vsel %vm407, %v621, %v623
        %v630 = vsel %vm407, %v625, %v627
        %v634 = vadd.f32 %v599, %v628
        %v635 = vadd.f32 %v600, %v629
        %v636 = vadd.f32 %v601, %v630
        %v637 = vld [vmem:[#allocation3] sm:$0xff]
        %v638 = vld [vmem:[#allocation3 + $0x8] sm:$0xff]
        %vm642 = vcmask 1046528
        %v643 = vrot.slane %v634, 1
        %v644 = vrot.slane %v635, 1
        %v645 = vsel %vm642, %v643, %v644
        %v646 = vrot.slane %v636, 1
        %v647 = vsel %vm642, %v644, %v646
        %v650 = vadd.f32 %v637, %v645
        %v651 = vadd.f32 %v638, %v647
        %652 = vst [vmem:[#allocation3] sm:$0xff] %v650
        %653 = vst [vmem:[#allocation3 + $0x8] sm:$0xff] %v651
        %v654 = vld [vmem:[#allocation2] sm:$0xfc]
        %v655 = vld [vmem:[#allocation2 + $0x8] sm:$0xfc]
        %v656 = vld [vmem:[#allocation2 + $0x10] sm:$0xff]
        %v657 = vld [vmem:[#allocation2 + $0x18] sm:$0xff]
        %v658 = vld [vmem:[#allocation2 + $0x20] sm:$0x3]
        %v659 = vld [vmem:[#allocation2 + $0x28] sm:$0x3]
        %s660 = sld [smem:[#allocation8 + $0xe]]
        %v661 = vstv %s660
        %v662 = vmul.f32 %v661, %v654
        %v663 = vmul.f32 %v661, %v656
        %v664 = vmul.f32 %v661, %v658
        %s665 = sld [smem:[#allocation8 + $0xf]]
        %v666 = vstv %s665
        %v667 = vmul.f32 %v666, %v654
        %v668 = vmul.f32 %v666, %v655
        %v669 = vmul.f32 %v666, %v656
        %v670 = vmul.f32 %v666, %v657
        %v671 = vmul.f32 %v666, %v658
        %v672 = vmul.f32 %v666, %v659
        %679 = vrot.lane.b32.xlu0 %v667, 127
        %v680 = vpop.permute.xlu0 %679
        %681 = vrot.lane.b32.xlu0 %v668, 127
        %v682 = vpop.permute.xlu0 %681
        %683 = vrot.lane.b32.xlu0 %v669, 127
        %v684 = vpop.permute.xlu0 %683
        %685 = vrot.lane.b32.xlu0 %v670, 127
        %v686 = vpop.permute.xlu0 %685
        %687 = vrot.lane.b32.xlu0 %v671, 127
        %v688 = vpop.permute.xlu0 %687
        %689 = vrot.lane.b32.xlu0 %v672, 127
        %v690 = vpop.permute.xlu0 %689
        %v691 = vsel %vm282, %v680, %v682
        %v692 = vsel %vm282, %v684, %v686
        %v693 = vsel %vm282, %v688, %v690
        %v697 = vadd.f32 %v662, %v691
        %v698 = vadd.f32 %v663, %v692
        %v699 = vadd.f32 %v664, %v693
        %s700 = sld [smem:[#allocation8 + $0x10]]
        %v701 = vstv %s700
        %v702 = vmul.f32 %v701, %v654
        %v703 = vmul.f32 %v701, %v655
        %v704 = vmul.f32 %v701, %v656
        %v705 = vmul.f32 %v701, %v657
        %v706 = vmul.f32 %v701, %v658
        %v707 = vmul.f32 %v701, %v659
        %714 = vrot.lane.b32.xlu0 %v702, 126
        %v715 = vpop.permute.xlu0 %714
        %716 = vrot.lane.b32.xlu0 %v703, 126
        %v717 = vpop.permute.xlu0 %716
        %718 = vrot.lane.b32.xlu0 %v704, 126
        %v719 = vpop.permute.xlu0 %718
        %720 = vrot.lane.b32.xlu0 %v705, 126
        %v721 = vpop.permute.xlu0 %720
        %722 = vrot.lane.b32.xlu0 %v706, 126
        %v723 = vpop.permute.xlu0 %722
        %724 = vrot.lane.b32.xlu0 %v707, 126
        %v725 = vpop.permute.xlu0 %724
        %v726 = vsel %vm307, %v715, %v717
        %v727 = vsel %vm307, %v719, %v721
        %v728 = vsel %vm307, %v723, %v725
        %v732 = vadd.f32 %v697, %v726
        %v733 = vadd.f32 %v698, %v727
        %v734 = vadd.f32 %v699, %v728
        %s735 = sld [smem:[#allocation8 + $0x11]]
        %v736 = vstv %s735
        %v737 = vmul.f32 %v736, %v654
        %v738 = vmul.f32 %v736, %v655
        %v739 = vmul.f32 %v736, %v656
        %v740 = vmul.f32 %v736, %v657
        %v741 = vmul.f32 %v736, %v658
        %v742 = vmul.f32 %v736, %v659
        %749 = vrot.lane.b32.xlu0 %v737, 125
        %v750 = vpop.permute.xlu0 %749
        %751 = vrot.lane.b32.xlu0 %v738, 125
        %v752 = vpop.permute.xlu0 %751
        %753 = vrot.lane.b32.xlu0 %v739, 125
        %v754 = vpop.permute.xlu0 %753
        %755 = vrot.lane.b32.xlu0 %v740, 125
        %v756 = vpop.permute.xlu0 %755
        %757 = vrot.lane.b32.xlu0 %v741, 125
        %v758 = vpop.permute.xlu0 %757
        %759 = vrot.lane.b32.xlu0 %v742, 125
        %v760 = vpop.permute.xlu0 %759
        %v761 = vsel %vm332, %v750, %v752
        %v762 = vsel %vm332, %v754, %v756
        %v763 = vsel %vm332, %v758, %v760
        %v767 = vadd.f32 %v732, %v761
        %v768 = vadd.f32 %v733, %v762
        %v769 = vadd.f32 %v734, %v763
        %s770 = sld [smem:[#allocation8 + $0x12]]
        %v771 = vstv %s770
        %v772 = vmul.f32 %v771, %v654
        %v773 = vmul.f32 %v771, %v655
        %v774 = vmul.f32 %v771, %v656
        %v775 = vmul.f32 %v771, %v657
        %v776 = vmul.f32 %v771, %v658
        %v777 = vmul.f32 %v771, %v659
        %784 = vrot.lane.b32.xlu0 %v772, 124
        %v785 = vpop.permute.xlu0 %784
        %786 = vrot.lane.b32.xlu0 %v773, 124
        %v787 = vpop.permute.xlu0 %786
        %788 = vrot.lane.b32.xlu0 %v774, 124
        %v789 = vpop.permute.xlu0 %788
        %790 = vrot.lane.b32.xlu0 %v775, 124
        %v791 = vpop.permute.xlu0 %790
        %792 = vrot.lane.b32.xlu0 %v776, 124
        %v793 = vpop.permute.xlu0 %792
        %794 = vrot.lane.b32.xlu0 %v777, 124
        %v795 = vpop.permute.xlu0 %794
        %v796 = vsel %vm357, %v785, %v787
        %v797 = vsel %vm357, %v789, %v791
        %v798 = vsel %vm357, %v793, %v795
        %v802 = vadd.f32 %v767, %v796
        %v803 = vadd.f32 %v768, %v797
        %v804 = vadd.f32 %v769, %v798
        %s805 = sld [smem:[#allocation8 + $0x13]]
        %v806 = vstv %s805
        %v807 = vmul.f32 %v806, %v654
        %v808 = vmul.f32 %v806, %v655
        %v809 = vmul.f32 %v806, %v656
        %v810 = vmul.f32 %v806, %v657
        %v811 = vmul.f32 %v806, %v658
        %v812 = vmul.f32 %v806, %v659
        %819 = vrot.lane.b32.xlu0 %v807, 123
        %v820 = vpop.permute.xlu0 %819
        %821 = vrot.lane.b32.xlu0 %v808, 123
        %v822 = vpop.permute.xlu0 %821
        %823 = vrot.lane.b32.xlu0 %v809, 123
        %v824 = vpop.permute.xlu0 %823
        %825 = vrot.lane.b32.xlu0 %v810, 123
        %v826 = vpop.permute.xlu0 %825
        %827 = vrot.lane.b32.xlu0 %v811, 123
        %v828 = vpop.permute.xlu0 %827
        %829 = vrot.lane.b32.xlu0 %v812, 123
        %v830 = vpop.permute.xlu0 %829
        %v831 = vsel %vm382, %v820, %v822
        %v832 = vsel %vm382, %v824, %v826
        %v833 = vsel %vm382, %v828, %v830
        %v837 = vadd.f32 %v802, %v831
        %v838 = vadd.f32 %v803, %v832
        %v839 = vadd.f32 %v804, %v833
        %s840 = sld [smem:[#allocation8 + $0x14]]
        %v841 = vstv %s840
        %v842 = vmul.f32 %v841, %v654
        %v843 = vmul.f32 %v841, %v655
        %v844 = vmul.f32 %v841, %v656
        %v845 = vmul.f32 %v841, %v657
        %v846 = vmul.f32 %v841, %v658
        %v847 = vmul.f32 %v841, %v659
        %854 = vrot.lane.b32.xlu0 %v842, 122
        %v855 = vpop.permute.xlu0 %854
        %856 = vrot.lane.b32.xlu0 %v843, 122
        %v857 = vpop.permute.xlu0 %856
        %858 = vrot.lane.b32.xlu0 %v844, 122
        %v859 = vpop.permute.xlu0 %858
        %860 = vrot.lane.b32.xlu0 %v845, 122
        %v861 = vpop.permute.xlu0 %860
        %862 = vrot.lane.b32.xlu0 %v846, 122
        %v863 = vpop.permute.xlu0 %862
        %864 = vrot.lane.b32.xlu0 %v847, 122
        %v865 = vpop.permute.xlu0 %864
        %v866 = vsel %vm407, %v855, %v857
        %v867 = vsel %vm407, %v859, %v861
        %v868 = vsel %vm407, %v863, %v865
        %v872 = vadd.f32 %v837, %v866
        %v873 = vadd.f32 %v838, %v867
        %v874 = vadd.f32 %v839, %v868
        %v875 = vld [vmem:[#allocation3] sm:$0xff]
        %v876 = vld [vmem:[#allocation3 + $0x8] sm:$0xff]
        %vm880 = vcmask 1045504
        %v881 = vrot.slane %v872, 2
        %v882 = vrot.slane %v873, 2
        %v883 = vsel %vm880, %v881, %v882
        %v884 = vrot.slane %v874, 2
        %v885 = vsel %vm880, %v882, %v884
        %v888 = vadd.f32 %v875, %v883
        %v889 = vadd.f32 %v876, %v885
        %890 = vst [vmem:[#allocation3] sm:$0xff] %v888
        %891 = vst [vmem:[#allocation3 + $0x8] sm:$0xff] %v889
        %v892 = vld [vmem:[#allocation2] sm:$0xf8]
        %v893 = vld [vmem:[#allocation2 + $0x8] sm:$0xf8]
        %v894 = vld [vmem:[#allocation2 + $0x10] sm:$0xff]
        %v895 = vld [vmem:[#allocation2 + $0x18] sm:$0xff]
        %v896 = vld [vmem:[#allocation2 + $0x20] sm:$0x7]
        %v897 = vld [vmem:[#allocation2 + $0x28] sm:$0x7]
        %s898 = sld [smem:[#allocation8 + $0x15]]
        %v899 = vstv %s898
        %v900 = vmul.f32 %v899, %v892
        %v901 = vmul.f32 %v899, %v894
        %v902 = vmul.f32 %v899, %v896
        %s903 = sld [smem:[#allocation8 + $0x16]]
        %v904 = vstv %s903
        %v905 = vmul.f32 %v904, %v892
        %v906 = vmul.f32 %v904, %v893
        %v907 = vmul.f32 %v904, %v894
        %v908 = vmul.f32 %v904, %v895
        %v909 = vmul.f32 %v904, %v896
        %v910 = vmul.f32 %v904, %v897
        %917 = vrot.lane.b32.xlu0 %v905, 127
        %v918 = vpop.permute.xlu0 %917
        %919 = vrot.lane.b32.xlu0 %v906, 127
        %v920 = vpop.permute.xlu0 %919
        %921 = vrot.lane.b32.xlu0 %v907, 127
        %v922 = vpop.permute.xlu0 %921
        %923 = vrot.lane.b32.xlu0 %v908, 127
        %v924 = vpop.permute.xlu0 %923
        %925 = vrot.lane.b32.xlu0 %v909, 127
        %v926 = vpop.permute.xlu0 %925
        %927 = vrot.lane.b32.xlu0 %v910, 127
        %v928 = vpop.permute.xlu0 %927
        %v929 = vsel %vm282, %v918, %v920
        %v930 = vsel %vm282, %v922, %v924
        %v931 = vsel %vm282, %v926, %v928
        %v935 = vadd.f32 %v900, %v929
        %v936 = vadd.f32 %v901, %v930
        %v937 = vadd.f32 %v902, %v931
        %s938 = sld [smem:[#allocation8 + $0x17]]
        %v939 = vstv %s938
        %v940 = vmul.f32 %v939, %v892
        %v941 = vmul.f32 %v939, %v893
        %v942 = vmul.f32 %v939, %v894
        %v943 = vmul.f32 %v939, %v895
        %v944 = vmul.f32 %v939, %v896
        %v945 = vmul.f32 %v939, %v897
        %952 = vrot.lane.b32.xlu0 %v940, 126
        %v953 = vpop.permute.xlu0 %952
        %954 = vrot.lane.b32.xlu0 %v941, 126
        %v955 = vpop.permute.xlu0 %954
        %956 = vrot.lane.b32.xlu0 %v942, 126
        %v957 = vpop.permute.xlu0 %956
        %958 = vrot.lane.b32.xlu0 %v943, 126
        %v959 = vpop.permute.xlu0 %958
        %960 = vrot.lane.b32.xlu0 %v944, 126
        %v961 = vpop.permute.xlu0 %960
        %962 = vrot.lane.b32.xlu0 %v945, 126
        %v963 = vpop.permute.xlu0 %962
        %v964 = vsel %vm307, %v953, %v955
        %v965 = vsel %vm307, %v957, %v959
        %v966 = vsel %vm307, %v961, %v963
        %v970 = vadd.f32 %v935, %v964
        %v971 = vadd.f32 %v936, %v965
        %v972 = vadd.f32 %v937, %v966
        %s973 = sld [smem:[#allocation8 + $0x18]]
        %v974 = vstv %s973
        %v975 = vmul.f32 %v974, %v892
        %v976 = vmul.f32 %v974, %v893
        %v977 = vmul.f32 %v974, %v894
        %v978 = vmul.f32 %v974, %v895
        %v979 = vmul.f32 %v974, %v896
        %v980 = vmul.f32 %v974, %v897
        %987 = vrot.lane.b32.xlu0 %v975, 125
        %v988 = vpop.permute.xlu0 %987
        %989 = vrot.lane.b32.xlu0 %v976, 125
        %v990 = vpop.permute.xlu0 %989
        %991 = vrot.lane.b32.xlu0 %v977, 125
        %v992 = vpop.permute.xlu0 %991
        %993 = vrot.lane.b32.xlu0 %v978, 125
        %v994 = vpop.permute.xlu0 %993
        %995 = vrot.lane.b32.xlu0 %v979, 125
        %v996 = vpop.permute.xlu0 %995
        %997 = vrot.lane.b32.xlu0 %v980, 125
        %v998 = vpop.permute.xlu0 %997
        %v999 = vsel %vm332, %v988, %v990
        %v1000 = vsel %vm332, %v992, %v994
        %v1001 = vsel %vm332, %v996, %v998
        %v1005 = vadd.f32 %v970, %v999
        %v1006 = vadd.f32 %v971, %v1000
        %v1007 = vadd.f32 %v972, %v1001
        %s1008 = sld [smem:[#allocation8 + $0x19]]
        %v1009 = vstv %s1008
        %v1010 = vmul.f32 %v1009, %v892
        %v1011 = vmul.f32 %v1009, %v893
        %v1012 = vmul.f32 %v1009, %v894
        %v1013 = vmul.f32 %v1009, %v895
        %v1014 = vmul.f32 %v1009, %v896
        %v1015 = vmul.f32 %v1009, %v897
        %1022 = vrot.lane.b32.xlu0 %v1010, 124
        %v1023 = vpop.permute.xlu0 %1022
        %1024 = vrot.lane.b32.xlu0 %v1011, 124
        %v1025 = vpop.permute.xlu0 %1024
        %1026 = vrot.lane.b32.xlu0 %v1012, 124
        %v1027 = vpop.permute.xlu0 %1026
        %1028 = vrot.lane.b32.xlu0 %v1013, 124
        %v1029 = vpop.permute.xlu0 %1028
        %1030 = vrot.lane.b32.xlu0 %v1014, 124
        %v1031 = vpop.permute.xlu0 %1030
        %1032 = vrot.lane.b32.xlu0 %v1015, 124
        %v1033 = vpop.permute.xlu0 %1032
        %v1034 = vsel %vm357, %v1023, %v1025
        %v1035 = vsel %vm357, %v1027, %v1029
        %v1036 = vsel %vm357, %v1031, %v1033
        %v1040 = vadd.f32 %v1005, %v1034
        %v1041 = vadd.f32 %v1006, %v1035
        %v1042 = vadd.f32 %v1007, %v1036
        %s1043 = sld [smem:[#allocation8 + $0x1a]]
        %v1044 = vstv %s1043
        %v1045 = vmul.f32 %v1044, %v892
        %v1046 = vmul.f32 %v1044, %v893
        %v1047 = vmul.f32 %v1044, %v894
        %v1048 = vmul.f32 %v1044, %v895
        %v1049 = vmul.f32 %v1044, %v896
        %v1050 = vmul.f32 %v1044, %v897
        %1057 = vrot.lane.b32.xlu0 %v1045, 123
        %v1058 = vpop.permute.xlu0 %1057
        %1059 = vrot.lane.b32.xlu0 %v1046, 123
        %v1060 = vpop.permute.xlu0 %1059
        %1061 = vrot.lane.b32.xlu0 %v1047, 123
        %v1062 = vpop.permute.xlu0 %1061
        %1063 = vrot.lane.b32.xlu0 %v1048, 123
        %v1064 = vpop.permute.xlu0 %1063
        %1065 = vrot.lane.b32.xlu0 %v1049, 123
        %v1066 = vpop.permute.xlu0 %1065
        %1067 = vrot.lane.b32.xlu0 %v1050, 123
        %v1068 = vpop.permute.xlu0 %1067
        %v1069 = vsel %vm382, %v1058, %v1060
        %v1070 = vsel %vm382, %v1062, %v1064
        %v1071 = vsel %vm382, %v1066, %v1068
        %v1075 = vadd.f32 %v1040, %v1069
        %v1076 = vadd.f32 %v1041, %v1070
        %v1077 = vadd.f32 %v1042, %v1071
        %s1078 = sld [smem:[#allocation8 + $0x1b]]
        %v1079 = vstv %s1078
        %v1080 = vmul.f32 %v1079, %v892
        %v1081 = vmul.f32 %v1079, %v893
        %v1082 = vmul.f32 %v1079, %v894
        %v1083 = vmul.f32 %v1079, %v895
        %v1084 = vmul.f32 %v1079, %v896
        %v1085 = vmul.f32 %v1079, %v897
        %1092 = vrot.lane.b32.xlu0 %v1080, 122
        %v1093 = vpop.permute.xlu0 %1092
        %1094 = vrot.lane.b32.xlu0 %v1081, 122
        %v1095 = vpop.permute.xlu0 %1094
        %1096 = vrot.lane.b32.xlu0 %v1082, 122
        %v1097 = vpop.permute.xlu0 %1096
        %1098 = vrot.lane.b32.xlu0 %v1083, 122
        %v1099 = vpop.permute.xlu0 %1098
        %1100 = vrot.lane.b32.xlu0 %v1084, 122
        %v1101 = vpop.permute.xlu0 %1100
        %1102 = vrot.lane.b32.xlu0 %v1085, 122
        %v1103 = vpop.permute.xlu0 %1102
        %v1104 = vsel %vm407, %v1093, %v1095
        %v1105 = vsel %vm407, %v1097, %v1099
        %v1106 = vsel %vm407, %v1101, %v1103
        %v1110 = vadd.f32 %v1075, %v1104
        %v1111 = vadd.f32 %v1076, %v1105
        %v1112 = vadd.f32 %v1077, %v1106
        %v1113 = vld [vmem:[#allocation3] sm:$0xff]
        %v1114 = vld [vmem:[#allocation3 + $0x8] sm:$0xff]
        %vm1118 = vcmask 1044480
        %v1119 = vrot.slane %v1110, 3
        %v1120 = vrot.slane %v1111, 3
        %v1121 = vsel %vm1118, %v1119, %v1120
        %v1122 = vrot.slane %v1112, 3
        %v1123 = vsel %vm1118, %v1120, %v1122
        %v1126 = vadd.f32 %v1113, %v1121
        %v1127 = vadd.f32 %v1114, %v1123
        %1128 = vst [vmem:[#allocation3] sm:$0xff] %v1126
        %1129 = vst [vmem:[#allocation3 + $0x8] sm:$0xff] %v1127
        %v1130 = vld [vmem:[#allocation2] sm:$0xf0]
        %v1131 = vld [vmem:[#allocation2 + $0x8] sm:$0xf0]
        %v1132 = vld [vmem:[#allocation2 + $0x10] sm:$0xff]
        %v1133 = vld [vmem:[#allocation2 + $0x18] sm:$0xff]
        %v1134 = vld [vmem:[#allocation2 + $0x20] sm:$0xf]
        %v1135 = vld [vmem:[#allocation2 + $0x28] sm:$0xf]
        %s1136 = sld [smem:[#allocation8 + $0x1c]]
        %v1137 = vstv %s1136
        %v1138 = vmul.f32 %v1137, %v1130
        %v1139 = vmul.f32 %v1137, %v1132
        %v1140 = vmul.f32 %v1137, %v1134
        %s1141 = sld [smem:[#allocation8 + $0x1d]]
        %v1142 = vstv %s1141
        %v1143 = vmul.f32 %v1142, %v1130
        %v1144 = vmul.f32 %v1142, %v1131
        %v1145 = vmul.f32 %v1142, %v1132
        %v1146 = vmul.f32 %v1142, %v1133
        %v1147 = vmul.f32 %v1142, %v1134
        %v1148 = vmul.f32 %v1142, %v1135
        %1155 = vrot.lane.b32.xlu0 %v1143, 127
        %v1156 = vpop.permute.xlu0 %1155
        %1157 = vrot.lane.b32.xlu0 %v1144, 127
        %v1158 = vpop.permute.xlu0 %1157
        %1159 = vrot.lane.b32.xlu0 %v1145, 127
        %v1160 = vpop.permute.xlu0 %1159
        %1161 = vrot.lane.b32.xlu0 %v1146, 127
        %v1162 = vpop.permute.xlu0 %1161
        %1163 = vrot.lane.b32.xlu0 %v1147, 127
        %v1164 = vpop.permute.xlu0 %1163
        %1165 = vrot.lane.b32.xlu0 %v1148, 127
        %v1166 = vpop.permute.xlu0 %1165
        %v1167 = vsel %vm282, %v1156, %v1158
        %v1168 = vsel %vm282, %v1160, %v1162
        %v1169 = vsel %vm282, %v1164, %v1166
        %v1173 = vadd.f32 %v1138, %v1167
        %v1174 = vadd.f32 %v1139, %v1168
        %v1175 = vadd.f32 %v1140, %v1169
        %s1176 = sld [smem:[#allocation8 + $0x1e]]
        %v1177 = vstv %s1176
        %v1178 = vmul.f32 %v1177, %v1130
        %v1179 = vmul.f32 %v1177, %v1131
        %v1180 = vmul.f32 %v1177, %v1132
        %v1181 = vmul.f32 %v1177, %v1133
        %v1182 = vmul.f32 %v1177, %v1134
        %v1183 = vmul.f32 %v1177, %v1135
        %1190 = vrot.lane.b32.xlu0 %v1178, 126
        %v1191 = vpop.permute.xlu0 %1190
        %1192 = vrot.lane.b32.xlu0 %v1179, 126
        %v1193 = vpop.permute.xlu0 %1192
        %1194 = vrot.lane.b32.xlu0 %v1180, 126
        %v1195 = vpop.permute.xlu0 %1194
        %1196 = vrot.lane.b32.xlu0 %v1181, 126
        %v1197 = vpop.permute.xlu0 %1196
        %1198 = vrot.lane.b32.xlu0 %v1182, 126
        %v1199 = vpop.permute.xlu0 %1198
        %1200 = vrot.lane.b32.xlu0 %v1183, 126
        %v1201 = vpop.permute.xlu0 %1200
        %v1202 = vsel %vm307, %v1191, %v1193
        %v1203 = vsel %vm307, %v1195, %v1197
        %v1204 = vsel %vm307, %v1199, %v1201
        %v1208 = vadd.f32 %v1173, %v1202
        %v1209 = vadd.f32 %v1174, %v1203
        %v1210 = vadd.f32 %v1175, %v1204
        %s1211 = sld [smem:[#allocation8 + $0x1f]]
        %v1212 = vstv %s1211
        %v1213 = vmul.f32 %v1212, %v1130
        %v1214 = vmul.f32 %v1212, %v1131
        %v1215 = vmul.f32 %v1212, %v1132
        %v1216 = vmul.f32 %v1212, %v1133
        %v1217 = vmul.f32 %v1212, %v1134
        %v1218 = vmul.f32 %v1212, %v1135
        %1225 = vrot.lane.b32.xlu0 %v1213, 125
        %v1226 = vpop.permute.xlu0 %1225
        %1227 = vrot.lane.b32.xlu0 %v1214, 125
        %v1228 = vpop.permute.xlu0 %1227
        %1229 = vrot.lane.b32.xlu0 %v1215, 125
        %v1230 = vpop.permute.xlu0 %1229
        %1231 = vrot.lane.b32.xlu0 %v1216, 125
        %v1232 = vpop.permute.xlu0 %1231
        %1233 = vrot.lane.b32.xlu0 %v1217, 125
        %v1234 = vpop.permute.xlu0 %1233
        %1235 = vrot.lane.b32.xlu0 %v1218, 125
        %v1236 = vpop.permute.xlu0 %1235
        %v1237 = vsel %vm332, %v1226, %v1228
        %v1238 = vsel %vm332, %v1230, %v1232
        %v1239 = vsel %vm332, %v1234, %v1236
        %v1243 = vadd.f32 %v1208, %v1237
        %v1244 = vadd.f32 %v1209, %v1238
        %v1245 = vadd.f32 %v1210, %v1239
        %s1246 = sld [smem:[#allocation8 + $0x20]]
        %v1247 = vstv %s1246
        %v1248 = vmul.f32 %v1247, %v1130
        %v1249 = vmul.f32 %v1247, %v1131
        %v1250 = vmul.f32 %v1247, %v1132
        %v1251 = vmul.f32 %v1247, %v1133
        %v1252 = vmul.f32 %v1247, %v1134
        %v1253 = vmul.f32 %v1247, %v1135
        %1260 = vrot.lane.b32.xlu0 %v1248, 124
        %v1261 = vpop.permute.xlu0 %1260
        %1262 = vrot.lane.b32.xlu0 %v1249, 124
        %v1263 = vpop.permute.xlu0 %1262
        %1264 = vrot.lane.b32.xlu0 %v1250, 124
        %v1265 = vpop.permute.xlu0 %1264
        %1266 = vrot.lane.b32.xlu0 %v1251, 124
        %v1267 = vpop.permute.xlu0 %1266
        %1268 = vrot.lane.b32.xlu0 %v1252, 124
        %v1269 = vpop.permute.xlu0 %1268
        %1270 = vrot.lane.b32.xlu0 %v1253, 124
        %v1271 = vpop.permute.xlu0 %1270
        %v1272 = vsel %vm357, %v1261, %v1263
        %v1273 = vsel %vm357, %v1265, %v1267
        %v1274 = vsel %vm357, %v1269, %v1271
        %v1278 = vadd.f32 %v1243, %v1272
        %v1279 = vadd.f32 %v1244, %v1273
        %v1280 = vadd.f32 %v1245, %v1274
        %s1281 = sld [smem:[#allocation8 + $0x21]]
        %v1282 = vstv %s1281
        %v1283 = vmul.f32 %v1282, %v1130
        %v1284 = vmul.f32 %v1282, %v1131
        %v1285 = vmul.f32 %v1282, %v1132
        %v1286 = vmul.f32 %v1282, %v1133
        %v1287 = vmul.f32 %v1282, %v1134
        %v1288 = vmul.f32 %v1282, %v1135
        %1295 = vrot.lane.b32.xlu0 %v1283, 123
        %v1296 = vpop.permute.xlu0 %1295
        %1297 = vrot.lane.b32.xlu0 %v1284, 123
        %v1298 = vpop.permute.xlu0 %1297
        %1299 = vrot.lane.b32.xlu0 %v1285, 123
        %v1300 = vpop.permute.xlu0 %1299
        %1301 = vrot.lane.b32.xlu0 %v1286, 123
        %v1302 = vpop.permute.xlu0 %1301
        %1303 = vrot.lane.b32.xlu0 %v1287, 123
        %v1304 = vpop.permute.xlu0 %1303
        %1305 = vrot.lane.b32.xlu0 %v1288, 123
        %v1306 = vpop.permute.xlu0 %1305
        %v1307 = vsel %vm382, %v1296, %v1298
        %v1308 = vsel %vm382, %v1300, %v1302
        %v1309 = vsel %vm382, %v1304, %v1306
        %v1313 = vadd.f32 %v1278, %v1307
        %v1314 = vadd.f32 %v1279, %v1308
        %v1315 = vadd.f32 %v1280, %v1309
        %s1316 = sld [smem:[#allocation8 + $0x22]]
        %v1317 = vstv %s1316
        %v1318 = vmul.f32 %v1317, %v1130
        %v1319 = vmul.f32 %v1317, %v1131
        %v1320 = vmul.f32 %v1317, %v1132
        %v1321 = vmul.f32 %v1317, %v1133
        %v1322 = vmul.f32 %v1317, %v1134
        %v1323 = vmul.f32 %v1317, %v1135
        %1330 = vrot.lane.b32.xlu0 %v1318, 122
        %v1331 = vpop.permute.xlu0 %1330
        %1332 = vrot.lane.b32.xlu0 %v1319, 122
        %v1333 = vpop.permute.xlu0 %1332
        %1334 = vrot.lane.b32.xlu0 %v1320, 122
        %v1335 = vpop.permute.xlu0 %1334
        %1336 = vrot.lane.b32.xlu0 %v1321, 122
        %v1337 = vpop.permute.xlu0 %1336
        %1338 = vrot.lane.b32.xlu0 %v1322, 122
        %v1339 = vpop.permute.xlu0 %1338
        %1340 = vrot.lane.b32.xlu0 %v1323, 122
        %v1341 = vpop.permute.xlu0 %1340
        %v1342 = vsel %vm407, %v1331, %v1333
        %v1343 = vsel %vm407, %v1335, %v1337
        %v1344 = vsel %vm407, %v1339, %v1341
        %v1348 = vadd.f32 %v1313, %v1342
        %v1349 = vadd.f32 %v1314, %v1343
        %v1350 = vadd.f32 %v1315, %v1344
        %v1351 = vld [vmem:[#allocation3] sm:$0xff]
        %v1352 = vld [vmem:[#allocation3 + $0x8] sm:$0xff]
        %vm1356 = vcmask 1043456
        %v1357 = vrot.slane %v1348, 4
        %v1358 = vrot.slane %v1349, 4
        %v1359 = vsel %vm1356, %v1357, %v1358
        %v1360 = vrot.slane %v1350, 4
        %v1361 = vsel %vm1356, %v1358, %v1360
        %v1364 = vadd.f32 %v1351, %v1359
        %v1365 = vadd.f32 %v1352, %v1361
        %1366 = vst [vmem:[#allocation3] sm:$0xff] %v1364
        %1367 = vst [vmem:[#allocation3 + $0x8] sm:$0xff] %v1365
        %v1368 = vld [vmem:[#allocation2] sm:$0xe0]
        %v1369 = vld [vmem:[#allocation2 + $0x8] sm:$0xe0]
        %v1370 = vld [vmem:[#allocation2 + $0x10] sm:$0xff]
        %v1371 = vld [vmem:[#allocation2 + $0x18] sm:$0xff]
        %v1372 = vld [vmem:[#allocation2 + $0x20] sm:$0x1f]
        %v1373 = vld [vmem:[#allocation2 + $0x28] sm:$0x1f]
        %s1374 = sld [smem:[#allocation8 + $0x23]]
        %v1375 = vstv %s1374
        %v1376 = vmul.f32 %v1375, %v1368
        %v1377 = vmul.f32 %v1375, %v1370
        %v1378 = vmul.f32 %v1375, %v1372
        %s1379 = sld [smem:[#allocation8 + $0x24]]
        %v1380 = vstv %s1379
        %v1381 = vmul.f32 %v1380, %v1368
        %v1382 = vmul.f32 %v1380, %v1369
        %v1383 = vmul.f32 %v1380, %v1370
        %v1384 = vmul.f32 %v1380, %v1371
        %v1385 = vmul.f32 %v1380, %v1372
        %v1386 = vmul.f32 %v1380, %v1373
        %1393 = vrot.lane.b32.xlu0 %v1381, 127
        %v1394 = vpop.permute.xlu0 %1393
        %1395 = vrot.lane.b32.xlu0 %v1382, 127
        %v1396 = vpop.permute.xlu0 %1395
        %1397 = vrot.lane.b32.xlu0 %v1383, 127
        %v1398 = vpop.permute.xlu0 %1397
        %1399 = vrot.lane.b32.xlu0 %v1384, 127
        %v1400 = vpop.permute.xlu0 %1399
        %1401 = vrot.lane.b32.xlu0 %v1385, 127
        %v1402 = vpop.permute.xlu0 %1401
        %1403 = vrot.lane.b32.xlu0 %v1386, 127
        %v1404 = vpop.permute.xlu0 %1403
        %v1405 = vsel %vm282, %v1394, %v1396
        %v1406 = vsel %vm282, %v1398, %v1400
        %v1407 = vsel %vm282, %v1402, %v1404
        %v1411 = vadd.f32 %v1376, %v1405
        %v1412 = vadd.f32 %v1377, %v1406
        %v1413 = vadd.f32 %v1378, %v1407
        %s1414 = sld [smem:[#allocation8 + $0x25]]
        %v1415 = vstv %s1414
        %v1416 = vmul.f32 %v1415, %v1368
        %v1417 = vmul.f32 %v1415, %v1369
        %v1418 = vmul.f32 %v1415, %v1370
        %v1419 = vmul.f32 %v1415, %v1371
        %v1420 = vmul.f32 %v1415, %v1372
        %v1421 = vmul.f32 %v1415, %v1373
        %1428 = vrot.lane.b32.xlu0 %v1416, 126
        %v1429 = vpop.permute.xlu0 %1428
        %1430 = vrot.lane.b32.xlu0 %v1417, 126
        %v1431 = vpop.permute.xlu0 %1430
        %1432 = vrot.lane.b32.xlu0 %v1418, 126
        %v1433 = vpop.permute.xlu0 %1432
        %1434 = vrot.lane.b32.xlu0 %v1419, 126
        %v1435 = vpop.permute.xlu0 %1434
        %1436 = vrot.lane.b32.xlu0 %v1420, 126
        %v1437 = vpop.permute.xlu0 %1436
        %1438 = vrot.lane.b32.xlu0 %v1421, 126
        %v1439 = vpop.permute.xlu0 %1438
        %v1440 = vsel %vm307, %v1429, %v1431
        %v1441 = vsel %vm307, %v1433, %v1435
        %v1442 = vsel %vm307, %v1437, %v1439
        %v1446 = vadd.f32 %v1411, %v1440
        %v1447 = vadd.f32 %v1412, %v1441
        %v1448 = vadd.f32 %v1413, %v1442
        %s1449 = sld [smem:[#allocation8 + $0x26]]
        %v1450 = vstv %s1449
        %v1451 = vmul.f32 %v1450, %v1368
        %v1452 = vmul.f32 %v1450, %v1369
        %v1453 = vmul.f32 %v1450, %v1370
        %v1454 = vmul.f32 %v1450, %v1371
        %v1455 = vmul.f32 %v1450, %v1372
        %v1456 = vmul.f32 %v1450, %v1373
        %1463 = vrot.lane.b32.xlu0 %v1451, 125
        %v1464 = vpop.permute.xlu0 %1463
        %1465 = vrot.lane.b32.xlu0 %v1452, 125
        %v1466 = vpop.permute.xlu0 %1465
        %1467 = vrot.lane.b32.xlu0 %v1453, 125
        %v1468 = vpop.permute.xlu0 %1467
        %1469 = vrot.lane.b32.xlu0 %v1454, 125
        %v1470 = vpop.permute.xlu0 %1469
        %1471 = vrot.lane.b32.xlu0 %v1455, 125
        %v1472 = vpop.permute.xlu0 %1471
        %1473 = vrot.lane.b32.xlu0 %v1456, 125
        %v1474 = vpop.permute.xlu0 %1473
        %v1475 = vsel %vm332, %v1464, %v1466
        %v1476 = vsel %vm332, %v1468, %v1470
        %v1477 = vsel %vm332, %v1472, %v1474
        %v1481 = vadd.f32 %v1446, %v1475
        %v1482 = vadd.f32 %v1447, %v1476
        %v1483 = vadd.f32 %v1448, %v1477
        %s1484 = sld [smem:[#allocation8 + $0x27]]
        %v1485 = vstv %s1484
        %v1486 = vmul.f32 %v1485, %v1368
        %v1487 = vmul.f32 %v1485, %v1369
        %v1488 = vmul.f32 %v1485, %v1370
        %v1489 = vmul.f32 %v1485, %v1371
        %v1490 = vmul.f32 %v1485, %v1372
        %v1491 = vmul.f32 %v1485, %v1373
        %1498 = vrot.lane.b32.xlu0 %v1486, 124
        %v1499 = vpop.permute.xlu0 %1498
        %1500 = vrot.lane.b32.xlu0 %v1487, 124
        %v1501 = vpop.permute.xlu0 %1500
        %1502 = vrot.lane.b32.xlu0 %v1488, 124
        %v1503 = vpop.permute.xlu0 %1502
        %1504 = vrot.lane.b32.xlu0 %v1489, 124
        %v1505 = vpop.permute.xlu0 %1504
        %1506 = vrot.lane.b32.xlu0 %v1490, 124
        %v1507 = vpop.permute.xlu0 %1506
        %1508 = vrot.lane.b32.xlu0 %v1491, 124
        %v1509 = vpop.permute.xlu0 %1508
        %v1510 = vsel %vm357, %v1499, %v1501
        %v1511 = vsel %vm357, %v1503, %v1505
        %v1512 = vsel %vm357, %v1507, %v1509
        %v1516 = vadd.f32 %v1481, %v1510
        %v1517 = vadd.f32 %v1482, %v1511
        %v1518 = vadd.f32 %v1483, %v1512
        %s1519 = sld [smem:[#allocation8 + $0x28]]
        %v1520 = vstv %s1519
        %v1521 = vmul.f32 %v1520, %v1368
        %v1522 = vmul.f32 %v1520, %v1369
        %v1523 = vmul.f32 %v1520, %v1370
        %v1524 = vmul.f32 %v1520, %v1371
        %v1525 = vmul.f32 %v1520, %v1372
        %v1526 = vmul.f32 %v1520, %v1373
        %1533 = vrot.lane.b32.xlu0 %v1521, 123
        %v1534 = vpop.permute.xlu0 %1533
        %1535 = vrot.lane.b32.xlu0 %v1522, 123
        %v1536 = vpop.permute.xlu0 %1535
        %1537 = vrot.lane.b32.xlu0 %v1523, 123
        %v1538 = vpop.permute.xlu0 %1537
        %1539 = vrot.lane.b32.xlu0 %v1524, 123
        %v1540 = vpop.permute.xlu0 %1539
        %1541 = vrot.lane.b32.xlu0 %v1525, 123
        %v1542 = vpop.permute.xlu0 %1541
        %1543 = vrot.lane.b32.xlu0 %v1526, 123
        %v1544 = vpop.permute.xlu0 %1543
        %v1545 = vsel %vm382, %v1534, %v1536
        %v1546 = vsel %vm382, %v1538, %v1540
        %v1547 = vsel %vm382, %v1542, %v1544
        %v1551 = vadd.f32 %v1516, %v1545
        %v1552 = vadd.f32 %v1517, %v1546
        %v1553 = vadd.f32 %v1518, %v1547
        %s1554 = sld [smem:[#allocation8 + $0x29]]
        %v1555 = vstv %s1554
        %v1556 = vmul.f32 %v1555, %v1368
        %v1557 = vmul.f32 %v1555, %v1369
        %v1558 = vmul.f32 %v1555, %v1370
        %v1559 = vmul.f32 %v1555, %v1371
        %v1560 = vmul.f32 %v1555, %v1372
        %v1561 = vmul.f32 %v1555, %v1373
        %1568 = vrot.lane.b32.xlu0 %v1556, 122
        %v1569 = vpop.permute.xlu0 %1568
        %1570 = vrot.lane.b32.xlu0 %v1557, 122
        %v1571 = vpop.permute.xlu0 %1570
        %1572 = vrot.lane.b32.xlu0 %v1558, 122
        %v1573 = vpop.permute.xlu0 %1572
        %1574 = vrot.lane.b32.xlu0 %v1559, 122
        %v1575 = vpop.permute.xlu0 %1574
        %1576 = vrot.lane.b32.xlu0 %v1560, 122
        %v1577 = vpop.permute.xlu0 %1576
        %1578 = vrot.lane.b32.xlu0 %v1561, 122
        %v1579 = vpop.permute.xlu0 %1578
        %v1580 = vsel %vm407, %v1569, %v1571
        %v1581 = vsel %vm407, %v1573, %v1575
        %v1582 = vsel %vm407, %v1577, %v1579
        %v1586 = vadd.f32 %v1551, %v1580
        %v1587 = vadd.f32 %v1552, %v1581
        %v1588 = vadd.f32 %v1553, %v1582
        %v1589 = vld [vmem:[#allocation3] sm:$0xff]
        %v1590 = vld [vmem:[#allocation3 + $0x8] sm:$0xff]
        %v1594 = vrot.slane %v1586, 5
        %v1595 = vrot.slane %v1587, 5
        %v1596 = vsel %vm219, %v1594, %v1595
        %v1597 = vrot.slane %v1588, 5
        %v1598 = vsel %vm219, %v1595, %v1597
        %v1601 = vadd.f32 %v1589, %v1596
        %v1602 = vadd.f32 %v1590, %v1598
        %1603 = vst [vmem:[#allocation3] sm:$0xff] %v1601
        %1604 = vst [vmem:[#allocation3 + $0x8] sm:$0xff] %v1602
        %v1605 = vld [vmem:[#allocation2] sm:$0xc0]
        %v1606 = vld [vmem:[#allocation2 + $0x8] sm:$0xc0]
        %v1607 = vld [vmem:[#allocation2 + $0x10] sm:$0xff]
        %v1608 = vld [vmem:[#allocation2 + $0x18] sm:$0xff]
        %v1609 = vld [vmem:[#allocation2 + $0x20] sm:$0x3f]
        %v1610 = vld [vmem:[#allocation2 + $0x28] sm:$0x3f]
        %s1611 = sld [smem:[#allocation8 + $0x2a]]
        %v1612 = vstv %s1611
        %v1613 = vmul.f32 %v1612, %v1605
        %v1614 = vmul.f32 %v1612, %v1607
        %v1615 = vmul.f32 %v1612, %v1609
        %s1616 = sld [smem:[#allocation8 + $0x2b]]
        %v1617 = vstv %s1616
        %v1618 = vmul.f32 %v1617, %v1605
        %v1619 = vmul.f32 %v1617, %v1606
        %v1620 = vmul.f32 %v1617, %v1607
        %v1621 = vmul.f32 %v1617, %v1608
        %v1622 = vmul.f32 %v1617, %v1609
        %v1623 = vmul.f32 %v1617, %v1610
        %1630 = vrot.lane.b32.xlu0 %v1618, 127
        %v1631 = vpop.permute.xlu0 %1630
        %1632 = vrot.lane.b32.xlu0 %v1619, 127
        %v1633 = vpop.permute.xlu0 %1632
        %1634 = vrot.lane.b32.xlu0 %v1620, 127
        %v1635 = vpop.permute.xlu0 %1634
        %1636 = vrot.lane.b32.xlu0 %v1621, 127
        %v1637 = vpop.permute.xlu0 %1636
        %1638 = vrot.lane.b32.xlu0 %v1622, 127
        %v1639 = vpop.permute.xlu0 %1638
        %1640 = vrot.lane.b32.xlu0 %v1623, 127
        %v1641 = vpop.permute.xlu0 %1640
        %v1642 = vsel %vm282, %v1631, %v1633
        %v1643 = vsel %vm282, %v1635, %v1637
        %v1644 = vsel %vm282, %v1639, %v1641
        %v1648 = vadd.f32 %v1613, %v1642
        %v1649 = vadd.f32 %v1614, %v1643
        %v1650 = vadd.f32 %v1615, %v1644
        %s1651 = sld [smem:[#allocation8 + $0x2c]]
        %v1652 = vstv %s1651
        %v1653 = vmul.f32 %v1652, %v1605
        %v1654 = vmul.f32 %v1652, %v1606
        %v1655 = vmul.f32 %v1652, %v1607
        %v1656 = vmul.f32 %v1652, %v1608
        %v1657 = vmul.f32 %v1652, %v1609
        %v1658 = vmul.f32 %v1652, %v1610
        %1665 = vrot.lane.b32.xlu0 %v1653, 126
        %v1666 = vpop.permute.xlu0 %1665
        %1667 = vrot.lane.b32.xlu0 %v1654, 126
        %v1668 = vpop.permute.xlu0 %1667
        %1669 = vrot.lane.b32.xlu0 %v1655, 126
        %v1670 = vpop.permute.xlu0 %1669
        %1671 = vrot.lane.b32.xlu0 %v1656, 126
        %v1672 = vpop.permute.xlu0 %1671
        %1673 = vrot.lane.b32.xlu0 %v1657, 126
        %v1674 = vpop.permute.xlu0 %1673
        %1675 = vrot.lane.b32.xlu0 %v1658, 126
        %v1676 = vpop.permute.xlu0 %1675
        %v1677 = vsel %vm307, %v1666, %v1668
        %v1678 = vsel %vm307, %v1670, %v1672
        %v1679 = vsel %vm307, %v1674, %v1676
        %v1683 = vadd.f32 %v1648, %v1677
        %v1684 = vadd.f32 %v1649, %v1678
        %v1685 = vadd.f32 %v1650, %v1679
        %s1686 = sld [smem:[#allocation8 + $0x2d]]
        %v1687 = vstv %s1686
        %v1688 = vmul.f32 %v1687, %v1605
        %v1689 = vmul.f32 %v1687, %v1606
        %v1690 = vmul.f32 %v1687, %v1607
        %v1691 = vmul.f32 %v1687, %v1608
        %v1692 = vmul.f32 %v1687, %v1609
        %v1693 = vmul.f32 %v1687, %v1610
        %1700 = vrot.lane.b32.xlu0 %v1688, 125
        %v1701 = vpop.permute.xlu0 %1700
        %1702 = vrot.lane.b32.xlu0 %v1689, 125
        %v1703 = vpop.permute.xlu0 %1702
        %1704 = vrot.lane.b32.xlu0 %v1690, 125
        %v1705 = vpop.permute.xlu0 %1704
        %1706 = vrot.lane.b32.xlu0 %v1691, 125
        %v1707 = vpop.permute.xlu0 %1706
        %1708 = vrot.lane.b32.xlu0 %v1692, 125
        %v1709 = vpop.permute.xlu0 %1708
        %1710 = vrot.lane.b32.xlu0 %v1693, 125
        %v1711 = vpop.permute.xlu0 %1710
        %v1712 = vsel %vm332, %v1701, %v1703
        %v1713 = vsel %vm332, %v1705, %v1707
        %v1714 = vsel %vm332, %v1709, %v1711
        %v1718 = vadd.f32 %v1683, %v1712
        %v1719 = vadd.f32 %v1684, %v1713
        %v1720 = vadd.f32 %v1685, %v1714
        %s1721 = sld [smem:[#allocation8 + $0x2e]]
        %v1722 = vstv %s1721
        %v1723 = vmul.f32 %v1722, %v1605
        %v1724 = vmul.f32 %v1722, %v1606
        %v1725 = vmul.f32 %v1722, %v1607
        %v1726 = vmul.f32 %v1722, %v1608
        %v1727 = vmul.f32 %v1722, %v1609
        %v1728 = vmul.f32 %v1722, %v1610
        %1735 = vrot.lane.b32.xlu0 %v1723, 124
        %v1736 = vpop.permute.xlu0 %1735
        %1737 = vrot.lane.b32.xlu0 %v1724, 124
        %v1738 = vpop.permute.xlu0 %1737
        %1739 = vrot.lane.b32.xlu0 %v1725, 124
        %v1740 = vpop.permute.xlu0 %1739
        %1741 = vrot.lane.b32.xlu0 %v1726, 124
        %v1742 = vpop.permute.xlu0 %1741
        %1743 = vrot.lane.b32.xlu0 %v1727, 124
        %v1744 = vpop.permute.xlu0 %1743
        %1745 = vrot.lane.b32.xlu0 %v1728, 124
        %v1746 = vpop.permute.xlu0 %1745
        %v1747 = vsel %vm357, %v1736, %v1738
        %v1748 = vsel %vm357, %v1740, %v1742
        %v1749 = vsel %vm357, %v1744, %v1746
        %v1753 = vadd.f32 %v1718, %v1747
        %v1754 = vadd.f32 %v1719, %v1748
        %v1755 = vadd.f32 %v1720, %v1749
        %s1756 = sld [smem:[#allocation8 + $0x2f]]
        %v1757 = vstv %s1756
        %v1758 = vmul.f32 %v1757, %v1605
        %v1759 = vmul.f32 %v1757, %v1606
        %v1760 = vmul.f32 %v1757, %v1607
        %v1761 = vmul.f32 %v1757, %v1608
        %v1762 = vmul.f32 %v1757, %v1609
        %v1763 = vmul.f32 %v1757, %v1610
        %1770 = vrot.lane.b32.xlu0 %v1758, 123
        %v1771 = vpop.permute.xlu0 %1770
        %1772 = vrot.lane.b32.xlu0 %v1759, 123
        %v1773 = vpop.permute.xlu0 %1772
        %1774 = vrot.lane.b32.xlu0 %v1760, 123
        %v1775 = vpop.permute.xlu0 %1774
        %1776 = vrot.lane.b32.xlu0 %v1761, 123
        %v1777 = vpop.permute.xlu0 %1776
        %1778 = vrot.lane.b32.xlu0 %v1762, 123
        %v1779 = vpop.permute.xlu0 %1778
        %1780 = vrot.lane.b32.xlu0 %v1763, 123
        %v1781 = vpop.permute.xlu0 %1780
        %v1782 = vsel %vm382, %v1771, %v1773
        %v1783 = vsel %vm382, %v1775, %v1777
        %v1784 = vsel %vm382, %v1779, %v1781
        %v1788 = vadd.f32 %v1753, %v1782
        %v1789 = vadd.f32 %v1754, %v1783
        %v1790 = vadd.f32 %v1755, %v1784
        %s1791 = sld [smem:[#allocation8 + $0x30]]
        %v1792 = vstv %s1791
        %v1793 = vmul.f32 %v1792, %v1605
        %v1794 = vmul.f32 %v1792, %v1606
        %v1795 = vmul.f32 %v1792, %v1607
        %v1796 = vmul.f32 %v1792, %v1608
        %v1797 = vmul.f32 %v1792, %v1609
        %v1798 = vmul.f32 %v1792, %v1610
        %1805 = vrot.lane.b32.xlu0 %v1793, 122
        %v1806 = vpop.permute.xlu0 %1805
        %1807 = vrot.lane.b32.xlu0 %v1794, 122
        %v1808 = vpop.permute.xlu0 %1807
        %1809 = vrot.lane.b32.xlu0 %v1795, 122
        %v1810 = vpop.permute.xlu0 %1809
        %1811 = vrot.lane.b32.xlu0 %v1796, 122
        %v1812 = vpop.permute.xlu0 %1811
        %1813 = vrot.lane.b32.xlu0 %v1797, 122
        %v1814 = vpop.permute.xlu0 %1813
        %1815 = vrot.lane.b32.xlu0 %v1798, 122
        %v1816 = vpop.permute.xlu0 %1815
        %v1817 = vsel %vm407, %v1806, %v1808
        %v1818 = vsel %vm407, %v1810, %v1812
        %v1819 = vsel %vm407, %v1814, %v1816
        %v1823 = vadd.f32 %v1788, %v1817
        %v1824 = vadd.f32 %v1789, %v1818
        %v1825 = vadd.f32 %v1790, %v1819
        %v1826 = vld [vmem:[#allocation3] sm:$0xff]
        %v1827 = vld [vmem:[#allocation3 + $0x8] sm:$0xff]
        %vm1831 = vcmask 1041408
        %v1832 = vrot.slane %v1823, 6
        %v1833 = vrot.slane %v1824, 6
        %v1834 = vsel %vm1831, %v1832, %v1833
        %v1835 = vrot.slane %v1825, 6
        %v1836 = vsel %vm1831, %v1833, %v1835
        %v1839 = vadd.f32 %v1826, %v1834
        %v1840 = vadd.f32 %v1827, %v1836
        %1841 = vst [vmem:[#allocation3] sm:$0xff] %v1839
        %1842 = vst [vmem:[#allocation3 + $0x8] sm:$0xff] %v1840
        %v1843 = vld [vmem:[%s252] sm:$0xff]
        %v1844 = vld [vmem:[%s252 + $0x8] sm:$0xff]
        %v1845 = vld [vmem:[%s252 + $0x10] sm:$0xff]
        %v1846 = vld [vmem:[%s252 + $0x18] sm:$0xff]
        %s1847 = sld [smem:[#allocation8 + $0x31]]
        %v1848 = vstv %s1847
        %v1849 = vmul.f32 %v1848, %v1843
        %v1850 = vmul.f32 %v1848, %v1845
        %s1851 = sld [smem:[#allocation8 + $0x32]]
        %v1852 = vstv %s1851
        %v1853 = vmul.f32 %v1852, %v1843
        %v1854 = vmul.f32 %v1852, %v1844
        %v1855 = vmul.f32 %v1852, %v1845
        %v1856 = vmul.f32 %v1852, %v1846
        %1861 = vrot.lane.b32.xlu0 %v1853, 127
        %v1862 = vpop.permute.xlu0 %1861
        %1863 = vrot.lane.b32.xlu0 %v1854, 127
        %v1864 = vpop.permute.xlu0 %1863
        %1865 = vrot.lane.b32.xlu0 %v1855, 127
        %v1866 = vpop.permute.xlu0 %1865
        %1867 = vrot.lane.b32.xlu0 %v1856, 127
        %v1868 = vpop.permute.xlu0 %1867
        %v1869 = vsel %vm282, %v1862, %v1864
        %v1870 = vsel %vm282, %v1866, %v1868
        %v1873 = vadd.f32 %v1849, %v1869
        %v1874 = vadd.f32 %v1850, %v1870
        %s1875 = sld [smem:[#allocation8 + $0x33]]
        %v1876 = vstv %s1875
        %v1877 = vmul.f32 %v1876, %v1843
        %v1878 = vmul.f32 %v1876, %v1844
        %v1879 = vmul.f32 %v1876, %v1845
        %v1880 = vmul.f32 %v1876, %v1846
        %1885 = vrot.lane.b32.xlu0 %v1877, 126
        %v1886 = vpop.permute.xlu0 %1885
        %1887 = vrot.lane.b32.xlu0 %v1878, 126
        %v1888 = vpop.permute.xlu0 %1887
        %1889 = vrot.lane.b32.xlu0 %v1879, 126
        %v1890 = vpop.permute.xlu0 %1889
        %1891 = vrot.lane.b32.xlu0 %v1880, 126
        %v1892 = vpop.permute.xlu0 %1891
        %v1893 = vsel %vm307, %v1886, %v1888
        %v1894 = vsel %vm307, %v1890, %v1892
        %v1897 = vadd.f32 %v1873, %v1893
        %v1898 = vadd.f32 %v1874, %v1894
        %s1899 = sld [smem:[#allocation8 + $0x34]]
        %v1900 = vstv %s1899
        %v1901 = vmul.f32 %v1900, %v1843
        %v1902 = vmul.f32 %v1900, %v1844
        %v1903 = vmul.f32 %v1900, %v1845
        %v1904 = vmul.f32 %v1900, %v1846
        %1909 = vrot.lane.b32.xlu0 %v1901, 125
        %v1910 = vpop.permute.xlu0 %1909
        %1911 = vrot.lane.b32.xlu0 %v1902, 125
        %v1912 = vpop.permute.xlu0 %1911
        %1913 = vrot.lane.b32.xlu0 %v1903, 125
        %v1914 = vpop.permute.xlu0 %1913
        %1915 = vrot.lane.b32.xlu0 %v1904, 125
        %v1916 = vpop.permute.xlu0 %1915
        %v1917 = vsel %vm332, %v1910, %v1912
        %v1918 = vsel %vm332, %v1914, %v1916
        %v1921 = vadd.f32 %v1897, %v1917
        %v1922 = vadd.f32 %v1898, %v1918
        %s1923 = sld [smem:[#allocation8 + $0x35]]
        %v1924 = vstv %s1923
        %v1925 = vmul.f32 %v1924, %v1843
        %v1926 = vmul.f32 %v1924, %v1844
        %v1927 = vmul.f32 %v1924, %v1845
        %v1928 = vmul.f32 %v1924, %v1846
        %1933 = vrot.lane.b32.xlu0 %v1925, 124
        %v1934 = vpop.permute.xlu0 %1933
        %1935 = vrot.lane.b32.xlu0 %v1926, 124
        %v1936 = vpop.permute.xlu0 %1935
        %1937 = vrot.lane.b32.xlu0 %v1927, 124
        %v1938 = vpop.permute.xlu0 %1937
        %1939 = vrot.lane.b32.xlu0 %v1928, 124
        %v1940 = vpop.permute.xlu0 %1939
        %v1941 = vsel %vm357, %v1934, %v1936
        %v1942 = vsel %vm357, %v1938, %v1940
        %v1945 = vadd.f32 %v1921, %v1941
        %v1946 = vadd.f32 %v1922, %v1942
        %s1947 = sld [smem:[#allocation8 + $0x36]]
        %v1948 = vstv %s1947
        %v1949 = vmul.f32 %v1948, %v1843
        %v1950 = vmul.f32 %v1948, %v1844
        %v1951 = vmul.f32 %v1948, %v1845
        %v1952 = vmul.f32 %v1948, %v1846
        %1957 = vrot.lane.b32.xlu0 %v1949, 123
        %v1958 = vpop.permute.xlu0 %1957
        %1959 = vrot.lane.b32.xlu0 %v1950, 123
        %v1960 = vpop.permute.xlu0 %1959
        %1961 = vrot.lane.b32.xlu0 %v1951, 123
        %v1962 = vpop.permute.xlu0 %1961
        %1963 = vrot.lane.b32.xlu0 %v1952, 123
        %v1964 = vpop.permute.xlu0 %1963
        %v1965 = vsel %vm382, %v1958, %v1960
        %v1966 = vsel %vm382, %v1962, %v1964
        %v1969 = vadd.f32 %v1945, %v1965
        %v1970 = vadd.f32 %v1946, %v1966
        %s1971 = sld [smem:[#allocation8 + $0x37]]
        %v1972 = vstv %s1971
        %v1973 = vmul.f32 %v1972, %v1843
        %v1974 = vmul.f32 %v1972, %v1844
        %v1975 = vmul.f32 %v1972, %v1845
        %v1976 = vmul.f32 %v1972, %v1846
        %1981 = vrot.lane.b32.xlu0 %v1973, 122
        %v1982 = vpop.permute.xlu0 %1981
        %1983 = vrot.lane.b32.xlu0 %v1974, 122
        %v1984 = vpop.permute.xlu0 %1983
        %1985 = vrot.lane.b32.xlu0 %v1975, 122
        %v1986 = vpop.permute.xlu0 %1985
        %1987 = vrot.lane.b32.xlu0 %v1976, 122
        %v1988 = vpop.permute.xlu0 %1987
        %v1989 = vsel %vm407, %v1982, %v1984
        %v1990 = vsel %vm407, %v1986, %v1988
        %v1993 = vadd.f32 %v1969, %v1989
        %v1994 = vadd.f32 %v1970, %v1990
        %v1995 = vld [vmem:[#allocation3] sm:$0xff]
        %v1996 = vld [vmem:[#allocation3 + $0x8] sm:$0xff]
        %v1997 = vadd.f32 %v1995, %v1993
        %v1998 = vadd.f32 %v1996, %v1994
        %1999 = vst [vmem:[#allocation3] sm:$0xff] %v1997
        %2000 = vst [vmem:[#allocation3 + $0x8] sm:$0xff] %v1998
        %v2001 = vld [vmem:[%s252] sm:$0xfe]
        %v2002 = vld [vmem:[%s252 + $0x8] sm:$0xfe]
        %v2003 = vld [vmem:[%s252 + $0x10] sm:$0xff]
        %v2004 = vld [vmem:[%s252 + $0x18] sm:$0xff]
        %v2005 = vld [vmem:[%s252 + $0x20] sm:$0x1]
        %v2006 = vld [vmem:[%s252 + $0x28] sm:$0x1]
        %s2007 = sld [smem:[#allocation8 + $0x38]]
        %v2008 = vstv %s2007
        %v2009 = vmul.f32 %v2008, %v2001
        %v2010 = vmul.f32 %v2008, %v2003
        %v2011 = vmul.f32 %v2008, %v2005
        %s2012 = sld [smem:[#allocation8 + $0x39]]
        %v2013 = vstv %s2012
        %v2014 = vmul.f32 %v2013, %v2001
        %v2015 = vmul.f32 %v2013, %v2002
        %v2016 = vmul.f32 %v2013, %v2003
        %v2017 = vmul.f32 %v2013, %v2004
        %v2018 = vmul.f32 %v2013, %v2005
        %v2019 = vmul.f32 %v2013, %v2006
        %2026 = vrot.lane.b32.xlu0 %v2014, 127
        %v2027 = vpop.permute.xlu0 %2026
        %2028 = vrot.lane.b32.xlu0 %v2015, 127
        %v2029 = vpop.permute.xlu0 %2028
        %2030 = vrot.lane.b32.xlu0 %v2016, 127
        %v2031 = vpop.permute.xlu0 %2030
        %2032 = vrot.lane.b32.xlu0 %v2017, 127
        %v2033 = vpop.permute.xlu0 %2032
        %2034 = vrot.lane.b32.xlu0 %v2018, 127
        %v2035 = vpop.permute.xlu0 %2034
        %2036 = vrot.lane.b32.xlu0 %v2019, 127
        %v2037 = vpop.permute.xlu0 %2036
        %v2038 = vsel %vm282, %v2027, %v2029
        %v2039 = vsel %vm282, %v2031, %v2033
        %v2040 = vsel %vm282, %v2035, %v2037
        %v2044 = vadd.f32 %v2009, %v2038
        %v2045 = vadd.f32 %v2010, %v2039
        %v2046 = vadd.f32 %v2011, %v2040
        %s2047 = sld [smem:[#allocation8 + $0x3a]]
        %v2048 = vstv %s2047
        %v2049 = vmul.f32 %v2048, %v2001
        %v2050 = vmul.f32 %v2048, %v2002
        %v2051 = vmul.f32 %v2048, %v2003
        %v2052 = vmul.f32 %v2048, %v2004
        %v2053 = vmul.f32 %v2048, %v2005
        %v2054 = vmul.f32 %v2048, %v2006
        %2061 = vrot.lane.b32.xlu0 %v2049, 126
        %v2062 = vpop.permute.xlu0 %2061
        %2063 = vrot.lane.b32.xlu0 %v2050, 126
        %v2064 = vpop.permute.xlu0 %2063
        %2065 = vrot.lane.b32.xlu0 %v2051, 126
        %v2066 = vpop.permute.xlu0 %2065
        %2067 = vrot.lane.b32.xlu0 %v2052, 126
        %v2068 = vpop.permute.xlu0 %2067
        %2069 = vrot.lane.b32.xlu0 %v2053, 126
        %v2070 = vpop.permute.xlu0 %2069
        %2071 = vrot.lane.b32.xlu0 %v2054, 126
        %v2072 = vpop.permute.xlu0 %2071
        %v2073 = vsel %vm307, %v2062, %v2064
        %v2074 = vsel %vm307, %v2066, %v2068
        %v2075 = vsel %vm307, %v2070, %v2072
        %v2079 = vadd.f32 %v2044, %v2073
        %v2080 = vadd.f32 %v2045, %v2074
        %v2081 = vadd.f32 %v2046, %v2075
        %s2082 = sld [smem:[#allocation8 + $0x3b]]
        %v2083 = vstv %s2082
        %v2084 = vmul.f32 %v2083, %v2001
        %v2085 = vmul.f32 %v2083, %v2002
        %v2086 = vmul.f32 %v2083, %v2003
        %v2087 = vmul.f32 %v2083, %v2004
        %v2088 = vmul.f32 %v2083, %v2005
        %v2089 = vmul.f32 %v2083, %v2006
        %2096 = vrot.lane.b32.xlu0 %v2084, 125
        %v2097 = vpop.permute.xlu0 %2096
        %2098 = vrot.lane.b32.xlu0 %v2085, 125
        %v2099 = vpop.permute.xlu0 %2098
        %2100 = vrot.lane.b32.xlu0 %v2086, 125
        %v2101 = vpop.permute.xlu0 %2100
        %2102 = vrot.lane.b32.xlu0 %v2087, 125
        %v2103 = vpop.permute.xlu0 %2102
        %2104 = vrot.lane.b32.xlu0 %v2088, 125
        %v2105 = vpop.permute.xlu0 %2104
        %2106 = vrot.lane.b32.xlu0 %v2089, 125
        %v2107 = vpop.permute.xlu0 %2106
        %v2108 = vsel %vm332, %v2097, %v2099
        %v2109 = vsel %vm332, %v2101, %v2103
        %v2110 = vsel %vm332, %v2105, %v2107
        %v2114 = vadd.f32 %v2079, %v2108
        %v2115 = vadd.f32 %v2080, %v2109
        %v2116 = vadd.f32 %v2081, %v2110
        %s2117 = sld [smem:[#allocation8 + $0x3c]]
        %v2118 = vstv %s2117
        %v2119 = vmul.f32 %v2118, %v2001
        %v2120 = vmul.f32 %v2118, %v2002
        %v2121 = vmul.f32 %v2118, %v2003
        %v2122 = vmul.f32 %v2118, %v2004
        %v2123 = vmul.f32 %v2118, %v2005
        %v2124 = vmul.f32 %v2118, %v2006
        %2131 = vrot.lane.b32.xlu0 %v2119, 124
        %v2132 = vpop.permute.xlu0 %2131
        %2133 = vrot.lane.b32.xlu0 %v2120, 124
        %v2134 = vpop.permute.xlu0 %2133
        %2135 = vrot.lane.b32.xlu0 %v2121, 124
        %v2136 = vpop.permute.xlu0 %2135
        %2137 = vrot.lane.b32.xlu0 %v2122, 124
        %v2138 = vpop.permute.xlu0 %2137
        %2139 = vrot.lane.b32.xlu0 %v2123, 124
        %v2140 = vpop.permute.xlu0 %2139
        %2141 = vrot.lane.b32.xlu0 %v2124, 124
        %v2142 = vpop.permute.xlu0 %2141
        %v2143 = vsel %vm357, %v2132, %v2134
        %v2144 = vsel %vm357, %v2136, %v2138
        %v2145 = vsel %vm357, %v2140, %v2142
        %v2149 = vadd.f32 %v2114, %v2143
        %v2150 = vadd.f32 %v2115, %v2144
        %v2151 = vadd.f32 %v2116, %v2145
        %s2152 = sld [smem:[#allocation8 + $0x3d]]
        %v2153 = vstv %s2152
        %v2154 = vmul.f32 %v2153, %v2001
        %v2155 = vmul.f32 %v2153, %v2002
        %v2156 = vmul.f32 %v2153, %v2003
        %v2157 = vmul.f32 %v2153, %v2004
        %v2158 = vmul.f32 %v2153, %v2005
        %v2159 = vmul.f32 %v2153, %v2006
        %2166 = vrot.lane.b32.xlu0 %v2154, 123
        %v2167 = vpop.permute.xlu0 %2166
        %2168 = vrot.lane.b32.xlu0 %v2155, 123
        %v2169 = vpop.permute.xlu0 %2168
        %2170 = vrot.lane.b32.xlu0 %v2156, 123
        %v2171 = vpop.permute.xlu0 %2170
        %2172 = vrot.lane.b32.xlu0 %v2157, 123
        %v2173 = vpop.permute.xlu0 %2172
        %2174 = vrot.lane.b32.xlu0 %v2158, 123
        %v2175 = vpop.permute.xlu0 %2174
        %2176 = vrot.lane.b32.xlu0 %v2159, 123
        %v2177 = vpop.permute.xlu0 %2176
        %v2178 = vsel %vm382, %v2167, %v2169
        %v2179 = vsel %vm382, %v2171, %v2173
        %v2180 = vsel %vm382, %v2175, %v2177
        %v2184 = vadd.f32 %v2149, %v2178
        %v2185 = vadd.f32 %v2150, %v2179
        %v2186 = vadd.f32 %v2151, %v2180
        %s2187 = sld [smem:[#allocation8 + $0x3e]]
        %v2188 = vstv %s2187
        %v2189 = vmul.f32 %v2188, %v2001
        %v2190 = vmul.f32 %v2188, %v2002
        %v2191 = vmul.f32 %v2188, %v2003
        %v2192 = vmul.f32 %v2188, %v2004
        %v2193 = vmul.f32 %v2188, %v2005
        %v2194 = vmul.f32 %v2188, %v2006
        %2201 = vrot.lane.b32.xlu0 %v2189, 122
        %v2202 = vpop.permute.xlu0 %2201
        %2203 = vrot.lane.b32.xlu0 %v2190, 122
        %v2204 = vpop.permute.xlu0 %2203
        %2205 = vrot.lane.b32.xlu0 %v2191, 122
        %v2206 = vpop.permute.xlu0 %2205
        %2207 = vrot.lane.b32.xlu0 %v2192, 122
        %v2208 = vpop.permute.xlu0 %2207
        %2209 = vrot.lane.b32.xlu0 %v2193, 122
        %v2210 = vpop.permute.xlu0 %2209
        %2211 = vrot.lane.b32.xlu0 %v2194, 122
        %v2212 = vpop.permute.xlu0 %2211
        %v2213 = vsel %vm407, %v2202, %v2204
        %v2214 = vsel %vm407, %v2206, %v2208
        %v2215 = vsel %vm407, %v2210, %v2212
        %v2219 = vadd.f32 %v2184, %v2213
        %v2220 = vadd.f32 %v2185, %v2214
        %v2221 = vadd.f32 %v2186, %v2215
        %v2222 = vld [vmem:[#allocation3] sm:$0xff]
        %v2223 = vld [vmem:[#allocation3 + $0x8] sm:$0xff]
        %v2227 = vrot.slane %v2219, 1
        %v2228 = vrot.slane %v2220, 1
        %v2229 = vsel %vm642, %v2227, %v2228
        %v2230 = vrot.slane %v2221, 1
        %v2231 = vsel %vm642, %v2228, %v2230
        %v2234 = vadd.f32 %v2222, %v2229
        %v2235 = vadd.f32 %v2223, %v2231
        %2236 = vst [vmem:[#allocation3] sm:$0xff] %v2234
        %2237 = vst [vmem:[#allocation3 + $0x8] sm:$0xff] %v2235
        %v2238 = vld [vmem:[%s252] sm:$0xfc]
        %v2239 = vld [vmem:[%s252 + $0x8] sm:$0xfc]
        %v2240 = vld [vmem:[%s252 + $0x10] sm:$0xff]
        %v2241 = vld [vmem:[%s252 + $0x18] sm:$0xff]
        %v2242 = vld [vmem:[%s252 + $0x20] sm:$0x3]
        %v2243 = vld [vmem:[%s252 + $0x28] sm:$0x3]
        %s2244 = sld [smem:[#allocation8 + $0x3f]]
        %v2245 = vstv %s2244
        %v2246 = vmul.f32 %v2245, %v2238
        %v2247 = vmul.f32 %v2245, %v2240
        %v2248 = vmul.f32 %v2245, %v2242
        %s2249 = sld [smem:[#allocation8 + $0x40]]
        %v2250 = vstv %s2249
        %v2251 = vmul.f32 %v2250, %v2238
        %v2252 = vmul.f32 %v2250, %v2239
        %v2253 = vmul.f32 %v2250, %v2240
        %v2254 = vmul.f32 %v2250, %v2241
        %v2255 = vmul.f32 %v2250, %v2242
        %v2256 = vmul.f32 %v2250, %v2243
        %2263 = vrot.lane.b32.xlu0 %v2251, 127
        %v2264 = vpop.permute.xlu0 %2263
        %2265 = vrot.lane.b32.xlu0 %v2252, 127
        %v2266 = vpop.permute.xlu0 %2265
        %2267 = vrot.lane.b32.xlu0 %v2253, 127
        %v2268 = vpop.permute.xlu0 %2267
        %2269 = vrot.lane.b32.xlu0 %v2254, 127
        %v2270 = vpop.permute.xlu0 %2269
        %2271 = vrot.lane.b32.xlu0 %v2255, 127
        %v2272 = vpop.permute.xlu0 %2271
        %2273 = vrot.lane.b32.xlu0 %v2256, 127
        %v2274 = vpop.permute.xlu0 %2273
        %v2275 = vsel %vm282, %v2264, %v2266
        %v2276 = vsel %vm282, %v2268, %v2270
        %v2277 = vsel %vm282, %v2272, %v2274
        %v2281 = vadd.f32 %v2246, %v2275
        %v2282 = vadd.f32 %v2247, %v2276
        %v2283 = vadd.f32 %v2248, %v2277
        %s2284 = sld [smem:[#allocation8 + $0x41]]
        %v2285 = vstv %s2284
        %v2286 = vmul.f32 %v2285, %v2238
        %v2287 = vmul.f32 %v2285, %v2239
        %v2288 = vmul.f32 %v2285, %v2240
        %v2289 = vmul.f32 %v2285, %v2241
        %v2290 = vmul.f32 %v2285, %v2242
        %v2291 = vmul.f32 %v2285, %v2243
        %2298 = vrot.lane.b32.xlu0 %v2286, 126
        %v2299 = vpop.permute.xlu0 %2298
        %2300 = vrot.lane.b32.xlu0 %v2287, 126
        %v2301 = vpop.permute.xlu0 %2300
        %2302 = vrot.lane.b32.xlu0 %v2288, 126
        %v2303 = vpop.permute.xlu0 %2302
        %2304 = vrot.lane.b32.xlu0 %v2289, 126
        %v2305 = vpop.permute.xlu0 %2304
        %2306 = vrot.lane.b32.xlu0 %v2290, 126
        %v2307 = vpop.permute.xlu0 %2306
        %2308 = vrot.lane.b32.xlu0 %v2291, 126
        %v2309 = vpop.permute.xlu0 %2308
        %v2310 = vsel %vm307, %v2299, %v2301
        %v2311 = vsel %vm307, %v2303, %v2305
        %v2312 = vsel %vm307, %v2307, %v2309
        %v2316 = vadd.f32 %v2281, %v2310
        %v2317 = vadd.f32 %v2282, %v2311
        %v2318 = vadd.f32 %v2283, %v2312
        %s2319 = sld [smem:[#allocation8 + $0x42]]
        %v2320 = vstv %s2319
        %v2321 = vmul.f32 %v2320, %v2238
        %v2322 = vmul.f32 %v2320, %v2239
        %v2323 = vmul.f32 %v2320, %v2240
        %v2324 = vmul.f32 %v2320, %v2241
        %v2325 = vmul.f32 %v2320, %v2242
        %v2326 = vmul.f32 %v2320, %v2243
        %2333 = vrot.lane.b32.xlu0 %v2321, 125
        %v2334 = vpop.permute.xlu0 %2333
        %2335 = vrot.lane.b32.xlu0 %v2322, 125
        %v2336 = vpop.permute.xlu0 %2335
        %2337 = vrot.lane.b32.xlu0 %v2323, 125
        %v2338 = vpop.permute.xlu0 %2337
        %2339 = vrot.lane.b32.xlu0 %v2324, 125
        %v2340 = vpop.permute.xlu0 %2339
        %2341 = vrot.lane.b32.xlu0 %v2325, 125
        %v2342 = vpop.permute.xlu0 %2341
        %2343 = vrot.lane.b32.xlu0 %v2326, 125
        %v2344 = vpop.permute.xlu0 %2343
        %v2345 = vsel %vm332, %v2334, %v2336
        %v2346 = vsel %vm332, %v2338, %v2340
        %v2347 = vsel %vm332, %v2342, %v2344
        %v2351 = vadd.f32 %v2316, %v2345
        %v2352 = vadd.f32 %v2317, %v2346
        %v2353 = vadd.f32 %v2318, %v2347
        %s2354 = sld [smem:[#allocation8 + $0x43]]
        %v2355 = vstv %s2354
        %v2356 = vmul.f32 %v2355, %v2238
        %v2357 = vmul.f32 %v2355, %v2239
        %v2358 = vmul.f32 %v2355, %v2240
        %v2359 = vmul.f32 %v2355, %v2241
        %v2360 = vmul.f32 %v2355, %v2242
        %v2361 = vmul.f32 %v2355, %v2243
        %2368 = vrot.lane.b32.xlu0 %v2356, 124
        %v2369 = vpop.permute.xlu0 %2368
        %2370 = vrot.lane.b32.xlu0 %v2357, 124
        %v2371 = vpop.permute.xlu0 %2370
        %2372 = vrot.lane.b32.xlu0 %v2358, 124
        %v2373 = vpop.permute.xlu0 %2372
        %2374 = vrot.lane.b32.xlu0 %v2359, 124
        %v2375 = vpop.permute.xlu0 %2374
        %2376 = vrot.lane.b32.xlu0 %v2360, 124
        %v2377 = vpop.permute.xlu0 %2376
        %2378 = vrot.lane.b32.xlu0 %v2361, 124
        %v2379 = vpop.permute.xlu0 %2378
        %v2380 = vsel %vm357, %v2369, %v2371
        %v2381 = vsel %vm357, %v2373, %v2375
        %v2382 = vsel %vm357, %v2377, %v2379
        %v2386 = vadd.f32 %v2351, %v2380
        %v2387 = vadd.f32 %v2352, %v2381
        %v2388 = vadd.f32 %v2353, %v2382
        %s2389 = sld [smem:[#allocation8 + $0x44]]
        %v2390 = vstv %s2389
        %v2391 = vmul.f32 %v2390, %v2238
        %v2392 = vmul.f32 %v2390, %v2239
        %v2393 = vmul.f32 %v2390, %v2240
        %v2394 = vmul.f32 %v2390, %v2241
        %v2395 = vmul.f32 %v2390, %v2242
        %v2396 = vmul.f32 %v2390, %v2243
        %2403 = vrot.lane.b32.xlu0 %v2391, 123
        %v2404 = vpop.permute.xlu0 %2403
        %2405 = vrot.lane.b32.xlu0 %v2392, 123
        %v2406 = vpop.permute.xlu0 %2405
        %2407 = vrot.lane.b32.xlu0 %v2393, 123
        %v2408 = vpop.permute.xlu0 %2407
        %2409 = vrot.lane.b32.xlu0 %v2394, 123
        %v2410 = vpop.permute.xlu0 %2409
        %2411 = vrot.lane.b32.xlu0 %v2395, 123
        %v2412 = vpop.permute.xlu0 %2411
        %2413 = vrot.lane.b32.xlu0 %v2396, 123
        %v2414 = vpop.permute.xlu0 %2413
        %v2415 = vsel %vm382, %v2404, %v2406
        %v2416 = vsel %vm382, %v2408, %v2410
        %v2417 = vsel %vm382, %v2412, %v2414
        %v2421 = vadd.f32 %v2386, %v2415
        %v2422 = vadd.f32 %v2387, %v2416
        %v2423 = vadd.f32 %v2388, %v2417
        %s2424 = sld [smem:[#allocation8 + $0x45]]
        %v2425 = vstv %s2424
        %v2426 = vmul.f32 %v2425, %v2238
        %v2427 = vmul.f32 %v2425, %v2239
        %v2428 = vmul.f32 %v2425, %v2240
        %v2429 = vmul.f32 %v2425, %v2241
        %v2430 = vmul.f32 %v2425, %v2242
        %v2431 = vmul.f32 %v2425, %v2243
        %2438 = vrot.lane.b32.xlu0 %v2426, 122
        %v2439 = vpop.permute.xlu0 %2438
        %2440 = vrot.lane.b32.xlu0 %v2427, 122
        %v2441 = vpop.permute.xlu0 %2440
        %2442 = vrot.lane.b32.xlu0 %v2428, 122
        %v2443 = vpop.permute.xlu0 %2442
        %2444 = vrot.lane.b32.xlu0 %v2429, 122
        %v2445 = vpop.permute.xlu0 %2444
        %2446 = vrot.lane.b32.xlu0 %v2430, 122
        %v2447 = vpop.permute.xlu0 %2446
        %2448 = vrot.lane.b32.xlu0 %v2431, 122
        %v2449 = vpop.permute.xlu0 %2448
        %v2450 = vsel %vm407, %v2439, %v2441
        %v2451 = vsel %vm407, %v2443, %v2445
        %v2452 = vsel %vm407, %v2447, %v2449
        %v2456 = vadd.f32 %v2421, %v2450
        %v2457 = vadd.f32 %v2422, %v2451
        %v2458 = vadd.f32 %v2423, %v2452
        %v2459 = vld [vmem:[#allocation3] sm:$0xff]
        %v2460 = vld [vmem:[#allocation3 + $0x8] sm:$0xff]
        %v2464 = vrot.slane %v2456, 2
        %v2465 = vrot.slane %v2457, 2
        %v2466 = vsel %vm880, %v2464, %v2465
        %v2467 = vrot.slane %v2458, 2
        %v2468 = vsel %vm880, %v2465, %v2467
        %v2471 = vadd.f32 %v2459, %v2466
        %v2472 = vadd.f32 %v2460, %v2468
        %2473 = vst [vmem:[#allocation3] sm:$0xff] %v2471
        %2474 = vst [vmem:[#allocation3 + $0x8] sm:$0xff] %v2472
        %v2475 = vld [vmem:[%s252] sm:$0xf8]
        %v2476 = vld [vmem:[%s252 + $0x8] sm:$0xf8]
        %v2477 = vld [vmem:[%s252 + $0x10] sm:$0xff]
        %v2478 = vld [vmem:[%s252 + $0x18] sm:$0xff]
        %v2479 = vld [vmem:[%s252 + $0x20] sm:$0x7]
        %v2480 = vld [vmem:[%s252 + $0x28] sm:$0x7]
        %s2481 = sld [smem:[#allocation8 + $0x46]]
        %v2482 = vstv %s2481
        %v2483 = vmul.f32 %v2482, %v2475
        %v2484 = vmul.f32 %v2482, %v2477
        %v2485 = vmul.f32 %v2482, %v2479
        %s2486 = sld [smem:[#allocation8 + $0x47]]
        %v2487 = vstv %s2486
        %v2488 = vmul.f32 %v2487, %v2475
        %v2489 = vmul.f32 %v2487, %v2476
        %v2490 = vmul.f32 %v2487, %v2477
        %v2491 = vmul.f32 %v2487, %v2478
        %v2492 = vmul.f32 %v2487, %v2479
        %v2493 = vmul.f32 %v2487, %v2480
        %2500 = vrot.lane.b32.xlu0 %v2488, 127
        %v2501 = vpop.permute.xlu0 %2500
        %2502 = vrot.lane.b32.xlu0 %v2489, 127
        %v2503 = vpop.permute.xlu0 %2502
        %2504 = vrot.lane.b32.xlu0 %v2490, 127
        %v2505 = vpop.permute.xlu0 %2504
        %2506 = vrot.lane.b32.xlu0 %v2491, 127
        %v2507 = vpop.permute.xlu0 %2506
        %2508 = vrot.lane.b32.xlu0 %v2492, 127
        %v2509 = vpop.permute.xlu0 %2508
        %2510 = vrot.lane.b32.xlu0 %v2493, 127
        %v2511 = vpop.permute.xlu0 %2510
        %v2512 = vsel %vm282, %v2501, %v2503
        %v2513 = vsel %vm282, %v2505, %v2507
        %v2514 = vsel %vm282, %v2509, %v2511
        %v2518 = vadd.f32 %v2483, %v2512
        %v2519 = vadd.f32 %v2484, %v2513
        %v2520 = vadd.f32 %v2485, %v2514
        %s2521 = sld [smem:[#allocation8 + $0x48]]
        %v2522 = vstv %s2521
        %v2523 = vmul.f32 %v2522, %v2475
        %v2524 = vmul.f32 %v2522, %v2476
        %v2525 = vmul.f32 %v2522, %v2477
        %v2526 = vmul.f32 %v2522, %v2478
        %v2527 = vmul.f32 %v2522, %v2479
        %v2528 = vmul.f32 %v2522, %v2480
        %2535 = vrot.lane.b32.xlu0 %v2523, 126
        %v2536 = vpop.permute.xlu0 %2535
        %2537 = vrot.lane.b32.xlu0 %v2524, 126
        %v2538 = vpop.permute.xlu0 %2537
        %2539 = vrot.lane.b32.xlu0 %v2525, 126
        %v2540 = vpop.permute.xlu0 %2539
        %2541 = vrot.lane.b32.xlu0 %v2526, 126
        %v2542 = vpop.permute.xlu0 %2541
        %2543 = vrot.lane.b32.xlu0 %v2527, 126
        %v2544 = vpop.permute.xlu0 %2543
        %2545 = vrot.lane.b32.xlu0 %v2528, 126
        %v2546 = vpop.permute.xlu0 %2545
        %v2547 = vsel %vm307, %v2536, %v2538
        %v2548 = vsel %vm307, %v2540, %v2542
        %v2549 = vsel %vm307, %v2544, %v2546
        %v2553 = vadd.f32 %v2518, %v2547
        %v2554 = vadd.f32 %v2519, %v2548
        %v2555 = vadd.f32 %v2520, %v2549
        %s2556 = sld [smem:[#allocation8 + $0x49]]
        %v2557 = vstv %s2556
        %v2558 = vmul.f32 %v2557, %v2475
        %v2559 = vmul.f32 %v2557, %v2476
        %v2560 = vmul.f32 %v2557, %v2477
        %v2561 = vmul.f32 %v2557, %v2478
        %v2562 = vmul.f32 %v2557, %v2479
        %v2563 = vmul.f32 %v2557, %v2480
        %2570 = vrot.lane.b32.xlu0 %v2558, 125
        %v2571 = vpop.permute.xlu0 %2570
        %2572 = vrot.lane.b32.xlu0 %v2559, 125
        %v2573 = vpop.permute.xlu0 %2572
        %2574 = vrot.lane.b32.xlu0 %v2560, 125
        %v2575 = vpop.permute.xlu0 %2574
        %2576 = vrot.lane.b32.xlu0 %v2561, 125
        %v2577 = vpop.permute.xlu0 %2576
        %2578 = vrot.lane.b32.xlu0 %v2562, 125
        %v2579 = vpop.permute.xlu0 %2578
        %2580 = vrot.lane.b32.xlu0 %v2563, 125
        %v2581 = vpop.permute.xlu0 %2580
        %v2582 = vsel %vm332, %v2571, %v2573
        %v2583 = vsel %vm332, %v2575, %v2577
        %v2584 = vsel %vm332, %v2579, %v2581
        %v2588 = vadd.f32 %v2553, %v2582
        %v2589 = vadd.f32 %v2554, %v2583
        %v2590 = vadd.f32 %v2555, %v2584
        %s2591 = sld [smem:[#allocation8 + $0x4a]]
        %v2592 = vstv %s2591
        %v2593 = vmul.f32 %v2592, %v2475
        %v2594 = vmul.f32 %v2592, %v2476
        %v2595 = vmul.f32 %v2592, %v2477
        %v2596 = vmul.f32 %v2592, %v2478
        %v2597 = vmul.f32 %v2592, %v2479
        %v2598 = vmul.f32 %v2592, %v2480
        %2605 = vrot.lane.b32.xlu0 %v2593, 124
        %v2606 = vpop.permute.xlu0 %2605
        %2607 = vrot.lane.b32.xlu0 %v2594, 124
        %v2608 = vpop.permute.xlu0 %2607
        %2609 = vrot.lane.b32.xlu0 %v2595, 124
        %v2610 = vpop.permute.xlu0 %2609
        %2611 = vrot.lane.b32.xlu0 %v2596, 124
        %v2612 = vpop.permute.xlu0 %2611
        %2613 = vrot.lane.b32.xlu0 %v2597, 124
        %v2614 = vpop.permute.xlu0 %2613
        %2615 = vrot.lane.b32.xlu0 %v2598, 124
        %v2616 = vpop.permute.xlu0 %2615
        %v2617 = vsel %vm357, %v2606, %v2608
        %v2618 = vsel %vm357, %v2610, %v2612
        %v2619 = vsel %vm357, %v2614, %v2616
        %v2623 = vadd.f32 %v2588, %v2617
        %v2624 = vadd.f32 %v2589, %v2618
        %v2625 = vadd.f32 %v2590, %v2619
        %s2626 = sld [smem:[#allocation8 + $0x4b]]
        %v2627 = vstv %s2626
        %v2628 = vmul.f32 %v2627, %v2475
        %v2629 = vmul.f32 %v2627, %v2476
        %v2630 = vmul.f32 %v2627, %v2477
        %v2631 = vmul.f32 %v2627, %v2478
        %v2632 = vmul.f32 %v2627, %v2479
        %v2633 = vmul.f32 %v2627, %v2480
        %2640 = vrot.lane.b32.xlu0 %v2628, 123
        %v2641 = vpop.permute.xlu0 %2640
        %2642 = vrot.lane.b32.xlu0 %v2629, 123
        %v2643 = vpop.permute.xlu0 %2642
        %2644 = vrot.lane.b32.xlu0 %v2630, 123
        %v2645 = vpop.permute.xlu0 %2644
        %2646 = vrot.lane.b32.xlu0 %v2631, 123
        %v2647 = vpop.permute.xlu0 %2646
        %2648 = vrot.lane.b32.xlu0 %v2632, 123
        %v2649 = vpop.permute.xlu0 %2648
        %2650 = vrot.lane.b32.xlu0 %v2633, 123
        %v2651 = vpop.permute.xlu0 %2650
        %v2652 = vsel %vm382, %v2641, %v2643
        %v2653 = vsel %vm382, %v2645, %v2647
        %v2654 = vsel %vm382, %v2649, %v2651
        %v2658 = vadd.f32 %v2623, %v2652
        %v2659 = vadd.f32 %v2624, %v2653
        %v2660 = vadd.f32 %v2625, %v2654
        %s2661 = sld [smem:[#allocation8 + $0x4c]]
        %v2662 = vstv %s2661
        %v2663 = vmul.f32 %v2662, %v2475
        %v2664 = vmul.f32 %v2662, %v2476
        %v2665 = vmul.f32 %v2662, %v2477
        %v2666 = vmul.f32 %v2662, %v2478
        %v2667 = vmul.f32 %v2662, %v2479
        %v2668 = vmul.f32 %v2662, %v2480
        %2675 = vrot.lane.b32.xlu0 %v2663, 122
        %v2676 = vpop.permute.xlu0 %2675
        %2677 = vrot.lane.b32.xlu0 %v2664, 122
        %v2678 = vpop.permute.xlu0 %2677
        %2679 = vrot.lane.b32.xlu0 %v2665, 122
        %v2680 = vpop.permute.xlu0 %2679
        %2681 = vrot.lane.b32.xlu0 %v2666, 122
        %v2682 = vpop.permute.xlu0 %2681
        %2683 = vrot.lane.b32.xlu0 %v2667, 122
        %v2684 = vpop.permute.xlu0 %2683
        %2685 = vrot.lane.b32.xlu0 %v2668, 122
        %v2686 = vpop.permute.xlu0 %2685
        %v2687 = vsel %vm407, %v2676, %v2678
        %v2688 = vsel %vm407, %v2680, %v2682
        %v2689 = vsel %vm407, %v2684, %v2686
        %v2693 = vadd.f32 %v2658, %v2687
        %v2694 = vadd.f32 %v2659, %v2688
        %v2695 = vadd.f32 %v2660, %v2689
        %v2696 = vld [vmem:[#allocation3] sm:$0xff]
        %v2697 = vld [vmem:[#allocation3 + $0x8] sm:$0xff]
        %v2701 = vrot.slane %v2693, 3
        %v2702 = vrot.slane %v2694, 3
        %v2703 = vsel %vm1118, %v2701, %v2702
        %v2704 = vrot.slane %v2695, 3
        %v2705 = vsel %vm1118, %v2702, %v2704
        %v2708 = vadd.f32 %v2696, %v2703
        %v2709 = vadd.f32 %v2697, %v2705
        %2710 = vst [vmem:[#allocation3] sm:$0xff] %v2708
        %2711 = vst [vmem:[#allocation3 + $0x8] sm:$0xff] %v2709
        %v2712 = vld [vmem:[%s252] sm:$0xf0]
        %v2713 = vld [vmem:[%s252 + $0x8] sm:$0xf0]
        %v2714 = vld [vmem:[%s252 + $0x10] sm:$0xff]
        %v2715 = vld [vmem:[%s252 + $0x18] sm:$0xff]
        %v2716 = vld [vmem:[%s252 + $0x20] sm:$0xf]
        %v2717 = vld [vmem:[%s252 + $0x28] sm:$0xf]
        %s2718 = sld [smem:[#allocation8 + $0x4d]]
        %v2719 = vstv %s2718
        %v2720 = vmul.f32 %v2719, %v2712
        %v2721 = vmul.f32 %v2719, %v2714
        %v2722 = vmul.f32 %v2719, %v2716
        %s2723 = sld [smem:[#allocation8 + $0x4e]]
        %v2724 = vstv %s2723
        %v2725 = vmul.f32 %v2724, %v2712
        %v2726 = vmul.f32 %v2724, %v2713
        %v2727 = vmul.f32 %v2724, %v2714
        %v2728 = vmul.f32 %v2724, %v2715
        %v2729 = vmul.f32 %v2724, %v2716
        %v2730 = vmul.f32 %v2724, %v2717
        %2737 = vrot.lane.b32.xlu0 %v2725, 127
        %v2738 = vpop.permute.xlu0 %2737
        %2739 = vrot.lane.b32.xlu0 %v2726, 127
        %v2740 = vpop.permute.xlu0 %2739
        %2741 = vrot.lane.b32.xlu0 %v2727, 127
        %v2742 = vpop.permute.xlu0 %2741
        %2743 = vrot.lane.b32.xlu0 %v2728, 127
        %v2744 = vpop.permute.xlu0 %2743
        %2745 = vrot.lane.b32.xlu0 %v2729, 127
        %v2746 = vpop.permute.xlu0 %2745
        %2747 = vrot.lane.b32.xlu0 %v2730, 127
        %v2748 = vpop.permute.xlu0 %2747
        %v2749 = vsel %vm282, %v2738, %v2740
        %v2750 = vsel %vm282, %v2742, %v2744
        %v2751 = vsel %vm282, %v2746, %v2748
        %v2755 = vadd.f32 %v2720, %v2749
        %v2756 = vadd.f32 %v2721, %v2750
        %v2757 = vadd.f32 %v2722, %v2751
        %s2758 = sld [smem:[#allocation8 + $0x4f]]
        %v2759 = vstv %s2758
        %v2760 = vmul.f32 %v2759, %v2712
        %v2761 = vmul.f32 %v2759, %v2713
        %v2762 = vmul.f32 %v2759, %v2714
        %v2763 = vmul.f32 %v2759, %v2715
        %v2764 = vmul.f32 %v2759, %v2716
        %v2765 = vmul.f32 %v2759, %v2717
        %2772 = vrot.lane.b32.xlu0 %v2760, 126
        %v2773 = vpop.permute.xlu0 %2772
        %2774 = vrot.lane.b32.xlu0 %v2761, 126
        %v2775 = vpop.permute.xlu0 %2774
        %2776 = vrot.lane.b32.xlu0 %v2762, 126
        %v2777 = vpop.permute.xlu0 %2776
        %2778 = vrot.lane.b32.xlu0 %v2763, 126
        %v2779 = vpop.permute.xlu0 %2778
        %2780 = vrot.lane.b32.xlu0 %v2764, 126
        %v2781 = vpop.permute.xlu0 %2780
        %2782 = vrot.lane.b32.xlu0 %v2765, 126
        %v2783 = vpop.permute.xlu0 %2782
        %v2784 = vsel %vm307, %v2773, %v2775
        %v2785 = vsel %vm307, %v2777, %v2779
        %v2786 = vsel %vm307, %v2781, %v2783
        %v2790 = vadd.f32 %v2755, %v2784
        %v2791 = vadd.f32 %v2756, %v2785
        %v2792 = vadd.f32 %v2757, %v2786
        %s2793 = sld [smem:[#allocation8 + $0x50]]
        %v2794 = vstv %s2793
        %v2795 = vmul.f32 %v2794, %v2712
        %v2796 = vmul.f32 %v2794, %v2713
        %v2797 = vmul.f32 %v2794, %v2714
        %v2798 = vmul.f32 %v2794, %v2715
        %v2799 = vmul.f32 %v2794, %v2716
        %v2800 = vmul.f32 %v2794, %v2717
        %2807 = vrot.lane.b32.xlu0 %v2795, 125
        %v2808 = vpop.permute.xlu0 %2807
        %2809 = vrot.lane.b32.xlu0 %v2796, 125
        %v2810 = vpop.permute.xlu0 %2809
        %2811 = vrot.lane.b32.xlu0 %v2797, 125
        %v2812 = vpop.permute.xlu0 %2811
        %2813 = vrot.lane.b32.xlu0 %v2798, 125
        %v2814 = vpop.permute.xlu0 %2813
        %2815 = vrot.lane.b32.xlu0 %v2799, 125
        %v2816 = vpop.permute.xlu0 %2815
        %2817 = vrot.lane.b32.xlu0 %v2800, 125
        %v2818 = vpop.permute.xlu0 %2817
        %v2819 = vsel %vm332, %v2808, %v2810
        %v2820 = vsel %vm332, %v2812, %v2814
        %v2821 = vsel %vm332, %v2816, %v2818
        %v2825 = vadd.f32 %v2790, %v2819
        %v2826 = vadd.f32 %v2791, %v2820
        %v2827 = vadd.f32 %v2792, %v2821
        %s2828 = sld [smem:[#allocation8 + $0x51]]
        %v2829 = vstv %s2828
        %v2830 = vmul.f32 %v2829, %v2712
        %v2831 = vmul.f32 %v2829, %v2713
        %v2832 = vmul.f32 %v2829, %v2714
        %v2833 = vmul.f32 %v2829, %v2715
        %v2834 = vmul.f32 %v2829, %v2716
        %v2835 = vmul.f32 %v2829, %v2717
        %2842 = vrot.lane.b32.xlu0 %v2830, 124
        %v2843 = vpop.permute.xlu0 %2842
        %2844 = vrot.lane.b32.xlu0 %v2831, 124
        %v2845 = vpop.permute.xlu0 %2844
        %2846 = vrot.lane.b32.xlu0 %v2832, 124
        %v2847 = vpop.permute.xlu0 %2846
        %2848 = vrot.lane.b32.xlu0 %v2833, 124
        %v2849 = vpop.permute.xlu0 %2848
        %2850 = vrot.lane.b32.xlu0 %v2834, 124
        %v2851 = vpop.permute.xlu0 %2850
        %2852 = vrot.lane.b32.xlu0 %v2835, 124
        %v2853 = vpop.permute.xlu0 %2852
        %v2854 = vsel %vm357, %v2843, %v2845
        %v2855 = vsel %vm357, %v2847, %v2849
        %v2856 = vsel %vm357, %v2851, %v2853
        %v2860 = vadd.f32 %v2825, %v2854
        %v2861 = vadd.f32 %v2826, %v2855
        %v2862 = vadd.f32 %v2827, %v2856
        %s2863 = sld [smem:[#allocation8 + $0x52]]
        %v2864 = vstv %s2863
        %v2865 = vmul.f32 %v2864, %v2712
        %v2866 = vmul.f32 %v2864, %v2713
        %v2867 = vmul.f32 %v2864, %v2714
        %v2868 = vmul.f32 %v2864, %v2715
        %v2869 = vmul.f32 %v2864, %v2716
        %v2870 = vmul.f32 %v2864, %v2717
        %2877 = vrot.lane.b32.xlu0 %v2865, 123
        %v2878 = vpop.permute.xlu0 %2877
        %2879 = vrot.lane.b32.xlu0 %v2866, 123
        %v2880 = vpop.permute.xlu0 %2879
        %2881 = vrot.lane.b32.xlu0 %v2867, 123
        %v2882 = vpop.permute.xlu0 %2881
        %2883 = vrot.lane.b32.xlu0 %v2868, 123
        %v2884 = vpop.permute.xlu0 %2883
        %2885 = vrot.lane.b32.xlu0 %v2869, 123
        %v2886 = vpop.permute.xlu0 %2885
        %2887 = vrot.lane.b32.xlu0 %v2870, 123
        %v2888 = vpop.permute.xlu0 %2887
        %v2889 = vsel %vm382, %v2878, %v2880
        %v2890 = vsel %vm382, %v2882, %v2884
        %v2891 = vsel %vm382, %v2886, %v2888
        %v2895 = vadd.f32 %v2860, %v2889
        %v2896 = vadd.f32 %v2861, %v2890
        %v2897 = vadd.f32 %v2862, %v2891
        %s2898 = sld [smem:[#allocation8 + $0x53]]
        %v2899 = vstv %s2898
        %v2900 = vmul.f32 %v2899, %v2712
        %v2901 = vmul.f32 %v2899, %v2713
        %v2902 = vmul.f32 %v2899, %v2714
        %v2903 = vmul.f32 %v2899, %v2715
        %v2904 = vmul.f32 %v2899, %v2716
        %v2905 = vmul.f32 %v2899, %v2717
        %2912 = vrot.lane.b32.xlu0 %v2900, 122
        %v2913 = vpop.permute.xlu0 %2912
        %2914 = vrot.lane.b32.xlu0 %v2901, 122
        %v2915 = vpop.permute.xlu0 %2914
        %2916 = vrot.lane.b32.xlu0 %v2902, 122
        %v2917 = vpop.permute.xlu0 %2916
        %2918 = vrot.lane.b32.xlu0 %v2903, 122
        %v2919 = vpop.permute.xlu0 %2918
        %2920 = vrot.lane.b32.xlu0 %v2904, 122
        %v2921 = vpop.permute.xlu0 %2920
        %2922 = vrot.lane.b32.xlu0 %v2905, 122
        %v2923 = vpop.permute.xlu0 %2922
        %v2924 = vsel %vm407, %v2913, %v2915
        %v2925 = vsel %vm407, %v2917, %v2919
        %v2926 = vsel %vm407, %v2921, %v2923
        %v2930 = vadd.f32 %v2895, %v2924
        %v2931 = vadd.f32 %v2896, %v2925
        %v2932 = vadd.f32 %v2897, %v2926
        %v2933 = vld [vmem:[#allocation3] sm:$0xff]
        %v2934 = vld [vmem:[#allocation3 + $0x8] sm:$0xff]
        %v2938 = vrot.slane %v2930, 4
        %v2939 = vrot.slane %v2931, 4
        %v2940 = vsel %vm1356, %v2938, %v2939
        %v2941 = vrot.slane %v2932, 4
        %v2942 = vsel %vm1356, %v2939, %v2941
        %v2945 = vadd.f32 %v2933, %v2940
        %v2946 = vadd.f32 %v2934, %v2942
        %2947 = vst [vmem:[#allocation3] sm:$0xff] %v2945
        %2948 = vst [vmem:[#allocation3 + $0x8] sm:$0xff] %v2946
        %v2949 = vld [vmem:[%s252] sm:$0xe0]
        %v2950 = vld [vmem:[%s252 + $0x8] sm:$0xe0]
        %v2951 = vld [vmem:[%s252 + $0x10] sm:$0xff]
        %v2952 = vld [vmem:[%s252 + $0x18] sm:$0xff]
        %v2953 = vld [vmem:[%s252 + $0x20] sm:$0x1f]
        %v2954 = vld [vmem:[%s252 + $0x28] sm:$0x1f]
        %s2955 = sld [smem:[#allocation8 + $0x54]]
        %v2956 = vstv %s2955
        %v2957 = vmul.f32 %v2956, %v2949
        %v2958 = vmul.f32 %v2956, %v2951
        %v2959 = vmul.f32 %v2956, %v2953
        %s2960 = sld [smem:[#allocation8 + $0x55]]
        %v2961 = vstv %s2960
        %v2962 = vmul.f32 %v2961, %v2949
        %v2963 = vmul.f32 %v2961, %v2950
        %v2964 = vmul.f32 %v2961, %v2951
        %v2965 = vmul.f32 %v2961, %v2952
        %v2966 = vmul.f32 %v2961, %v2953
        %v2967 = vmul.f32 %v2961, %v2954
        %2974 = vrot.lane.b32.xlu0 %v2962, 127
        %v2975 = vpop.permute.xlu0 %2974
        %2976 = vrot.lane.b32.xlu0 %v2963, 127
        %v2977 = vpop.permute.xlu0 %2976
        %2978 = vrot.lane.b32.xlu0 %v2964, 127
        %v2979 = vpop.permute.xlu0 %2978
        %2980 = vrot.lane.b32.xlu0 %v2965, 127
        %v2981 = vpop.permute.xlu0 %2980
        %2982 = vrot.lane.b32.xlu0 %v2966, 127
        %v2983 = vpop.permute.xlu0 %2982
        %2984 = vrot.lane.b32.xlu0 %v2967, 127
        %v2985 = vpop.permute.xlu0 %2984
        %v2986 = vsel %vm282, %v2975, %v2977
        %v2987 = vsel %vm282, %v2979, %v2981
        %v2988 = vsel %vm282, %v2983, %v2985
        %v2992 = vadd.f32 %v2957, %v2986
        %v2993 = vadd.f32 %v2958, %v2987
        %v2994 = vadd.f32 %v2959, %v2988
        %s2995 = sld [smem:[#allocation8 + $0x56]]
        %v2996 = vstv %s2995
        %v2997 = vmul.f32 %v2996, %v2949
        %v2998 = vmul.f32 %v2996, %v2950
        %v2999 = vmul.f32 %v2996, %v2951
        %v3000 = vmul.f32 %v2996, %v2952
        %v3001 = vmul.f32 %v2996, %v2953
        %v3002 = vmul.f32 %v2996, %v2954
        %3009 = vrot.lane.b32.xlu0 %v2997, 126
        %v3010 = vpop.permute.xlu0 %3009
        %3011 = vrot.lane.b32.xlu0 %v2998, 126
        %v3012 = vpop.permute.xlu0 %3011
        %3013 = vrot.lane.b32.xlu0 %v2999, 126
        %v3014 = vpop.permute.xlu0 %3013
        %3015 = vrot.lane.b32.xlu0 %v3000, 126
        %v3016 = vpop.permute.xlu0 %3015
        %3017 = vrot.lane.b32.xlu0 %v3001, 126
        %v3018 = vpop.permute.xlu0 %3017
        %3019 = vrot.lane.b32.xlu0 %v3002, 126
        %v3020 = vpop.permute.xlu0 %3019
        %v3021 = vsel %vm307, %v3010, %v3012
        %v3022 = vsel %vm307, %v3014, %v3016
        %v3023 = vsel %vm307, %v3018, %v3020
        %v3027 = vadd.f32 %v2992, %v3021
        %v3028 = vadd.f32 %v2993, %v3022
        %v3029 = vadd.f32 %v2994, %v3023
        %s3030 = sld [smem:[#allocation8 + $0x57]]
        %v3031 = vstv %s3030
        %v3032 = vmul.f32 %v3031, %v2949
        %v3033 = vmul.f32 %v3031, %v2950
        %v3034 = vmul.f32 %v3031, %v2951
        %v3035 = vmul.f32 %v3031, %v2952
        %v3036 = vmul.f32 %v3031, %v2953
        %v3037 = vmul.f32 %v3031, %v2954
        %3044 = vrot.lane.b32.xlu0 %v3032, 125
        %v3045 = vpop.permute.xlu0 %3044
        %3046 = vrot.lane.b32.xlu0 %v3033, 125
        %v3047 = vpop.permute.xlu0 %3046
        %3048 = vrot.lane.b32.xlu0 %v3034, 125
        %v3049 = vpop.permute.xlu0 %3048
        %3050 = vrot.lane.b32.xlu0 %v3035, 125
        %v3051 = vpop.permute.xlu0 %3050
        %3052 = vrot.lane.b32.xlu0 %v3036, 125
        %v3053 = vpop.permute.xlu0 %3052
        %3054 = vrot.lane.b32.xlu0 %v3037, 125
        %v3055 = vpop.permute.xlu0 %3054
        %v3056 = vsel %vm332, %v3045, %v3047
        %v3057 = vsel %vm332, %v3049, %v3051
        %v3058 = vsel %vm332, %v3053, %v3055
        %v3062 = vadd.f32 %v3027, %v3056
        %v3063 = vadd.f32 %v3028, %v3057
        %v3064 = vadd.f32 %v3029, %v3058
        %s3065 = sld [smem:[#allocation8 + $0x58]]
        %v3066 = vstv %s3065
        %v3067 = vmul.f32 %v3066, %v2949
        %v3068 = vmul.f32 %v3066, %v2950
        %v3069 = vmul.f32 %v3066, %v2951
        %v3070 = vmul.f32 %v3066, %v2952
        %v3071 = vmul.f32 %v3066, %v2953
        %v3072 = vmul.f32 %v3066, %v2954
        %3079 = vrot.lane.b32.xlu0 %v3067, 124
        %v3080 = vpop.permute.xlu0 %3079
        %3081 = vrot.lane.b32.xlu0 %v3068, 124
        %v3082 = vpop.permute.xlu0 %3081
        %3083 = vrot.lane.b32.xlu0 %v3069, 124
        %v3084 = vpop.permute.xlu0 %3083
        %3085 = vrot.lane.b32.xlu0 %v3070, 124
        %v3086 = vpop.permute.xlu0 %3085
        %3087 = vrot.lane.b32.xlu0 %v3071, 124
        %v3088 = vpop.permute.xlu0 %3087
        %3089 = vrot.lane.b32.xlu0 %v3072, 124
        %v3090 = vpop.permute.xlu0 %3089
        %v3091 = vsel %vm357, %v3080, %v3082
        %v3092 = vsel %vm357, %v3084, %v3086
        %v3093 = vsel %vm357, %v3088, %v3090
        %v3097 = vadd.f32 %v3062, %v3091
        %v3098 = vadd.f32 %v3063, %v3092
        %v3099 = vadd.f32 %v3064, %v3093
        %s3100 = sld [smem:[#allocation8 + $0x59]]
        %v3101 = vstv %s3100
        %v3102 = vmul.f32 %v3101, %v2949
        %v3103 = vmul.f32 %v3101, %v2950
        %v3104 = vmul.f32 %v3101, %v2951
        %v3105 = vmul.f32 %v3101, %v2952
        %v3106 = vmul.f32 %v3101, %v2953
        %v3107 = vmul.f32 %v3101, %v2954
        %3114 = vrot.lane.b32.xlu0 %v3102, 123
        %v3115 = vpop.permute.xlu0 %3114
        %3116 = vrot.lane.b32.xlu0 %v3103, 123
        %v3117 = vpop.permute.xlu0 %3116
        %3118 = vrot.lane.b32.xlu0 %v3104, 123
        %v3119 = vpop.permute.xlu0 %3118
        %3120 = vrot.lane.b32.xlu0 %v3105, 123
        %v3121 = vpop.permute.xlu0 %3120
        %3122 = vrot.lane.b32.xlu0 %v3106, 123
        %v3123 = vpop.permute.xlu0 %3122
        %3124 = vrot.lane.b32.xlu0 %v3107, 123
        %v3125 = vpop.permute.xlu0 %3124
        %v3126 = vsel %vm382, %v3115, %v3117
        %v3127 = vsel %vm382, %v3119, %v3121
        %v3128 = vsel %vm382, %v3123, %v3125
        %v3132 = vadd.f32 %v3097, %v3126
        %v3133 = vadd.f32 %v3098, %v3127
        %v3134 = vadd.f32 %v3099, %v3128
        %s3135 = sld [smem:[#allocation8 + $0x5a]]
        %v3136 = vstv %s3135
        %v3137 = vmul.f32 %v3136, %v2949
        %v3138 = vmul.f32 %v3136, %v2950
        %v3139 = vmul.f32 %v3136, %v2951
        %v3140 = vmul.f32 %v3136, %v2952
        %v3141 = vmul.f32 %v3136, %v2953
        %v3142 = vmul.f32 %v3136, %v2954
        %3149 = vrot.lane.b32.xlu0 %v3137, 122
        %v3150 = vpop.permute.xlu0 %3149
        %3151 = vrot.lane.b32.xlu0 %v3138, 122
        %v3152 = vpop.permute.xlu0 %3151
        %3153 = vrot.lane.b32.xlu0 %v3139, 122
        %v3154 = vpop.permute.xlu0 %3153
        %3155 = vrot.lane.b32.xlu0 %v3140, 122
        %v3156 = vpop.permute.xlu0 %3155
        %3157 = vrot.lane.b32.xlu0 %v3141, 122
        %v3158 = vpop.permute.xlu0 %3157
        %3159 = vrot.lane.b32.xlu0 %v3142, 122
        %v3160 = vpop.permute.xlu0 %3159
        %v3161 = vsel %vm407, %v3150, %v3152
        %v3162 = vsel %vm407, %v3154, %v3156
        %v3163 = vsel %vm407, %v3158, %v3160
        %v3167 = vadd.f32 %v3132, %v3161
        %v3168 = vadd.f32 %v3133, %v3162
        %v3169 = vadd.f32 %v3134, %v3163
        %v3170 = vld [vmem:[#allocation3] sm:$0xff]
        %v3171 = vld [vmem:[#allocation3 + $0x8] sm:$0xff]
        %v3175 = vrot.slane %v3167, 5
        %v3176 = vrot.slane %v3168, 5
        %v3177 = vsel %vm219, %v3175, %v3176
        %v3178 = vrot.slane %v3169, 5
        %v3179 = vsel %vm219, %v3176, %v3178
        %v3182 = vadd.f32 %v3170, %v3177
        %v3183 = vadd.f32 %v3171, %v3179
        %3184 = vst [vmem:[#allocation3] sm:$0xff] %v3182
        %3185 = vst [vmem:[#allocation3 + $0x8] sm:$0xff] %v3183
        %v3186 = vld [vmem:[%s252] sm:$0xc0]
        %v3187 = vld [vmem:[%s252 + $0x8] sm:$0xc0]
        %v3188 = vld [vmem:[%s252 + $0x10] sm:$0xff]
        %v3189 = vld [vmem:[%s252 + $0x18] sm:$0xff]
        %v3190 = vld [vmem:[%s252 + $0x20] sm:$0x3f]
        %v3191 = vld [vmem:[%s252 + $0x28] sm:$0x3f]
        %s3192 = sld [smem:[#allocation8 + $0x5b]]
        %v3193 = vstv %s3192
        %v3194 = vmul.f32 %v3193, %v3186
        %v3195 = vmul.f32 %v3193, %v3188
        %v3196 = vmul.f32 %v3193, %v3190
        %s3197 = sld [smem:[#allocation8 + $0x5c]]
        %v3198 = vstv %s3197
        %v3199 = vmul.f32 %v3198, %v3186
        %v3200 = vmul.f32 %v3198, %v3187
        %v3201 = vmul.f32 %v3198, %v3188
        %v3202 = vmul.f32 %v3198, %v3189
        %v3203 = vmul.f32 %v3198, %v3190
        %v3204 = vmul.f32 %v3198, %v3191
        %3211 = vrot.lane.b32.xlu0 %v3199, 127
        %v3212 = vpop.permute.xlu0 %3211
        %3213 = vrot.lane.b32.xlu0 %v3200, 127
        %v3214 = vpop.permute.xlu0 %3213
        %3215 = vrot.lane.b32.xlu0 %v3201, 127
        %v3216 = vpop.permute.xlu0 %3215
        %3217 = vrot.lane.b32.xlu0 %v3202, 127
        %v3218 = vpop.permute.xlu0 %3217
        %3219 = vrot.lane.b32.xlu0 %v3203, 127
        %v3220 = vpop.permute.xlu0 %3219
        %3221 = vrot.lane.b32.xlu0 %v3204, 127
        %v3222 = vpop.permute.xlu0 %3221
        %v3223 = vsel %vm282, %v3212, %v3214
        %v3224 = vsel %vm282, %v3216, %v3218
        %v3225 = vsel %vm282, %v3220, %v3222
        %v3229 = vadd.f32 %v3194, %v3223
        %v3230 = vadd.f32 %v3195, %v3224
        %v3231 = vadd.f32 %v3196, %v3225
        %s3232 = sld [smem:[#allocation8 + $0x5d]]
        %v3233 = vstv %s3232
        %v3234 = vmul.f32 %v3233, %v3186
        %v3235 = vmul.f32 %v3233, %v3187
        %v3236 = vmul.f32 %v3233, %v3188
        %v3237 = vmul.f32 %v3233, %v3189
        %v3238 = vmul.f32 %v3233, %v3190
        %v3239 = vmul.f32 %v3233, %v3191
        %3246 = vrot.lane.b32.xlu0 %v3234, 126
        %v3247 = vpop.permute.xlu0 %3246
        %3248 = vrot.lane.b32.xlu0 %v3235, 126
        %v3249 = vpop.permute.xlu0 %3248
        %3250 = vrot.lane.b32.xlu0 %v3236, 126
        %v3251 = vpop.permute.xlu0 %3250
        %3252 = vrot.lane.b32.xlu0 %v3237, 126
        %v3253 = vpop.permute.xlu0 %3252
        %3254 = vrot.lane.b32.xlu0 %v3238, 126
        %v3255 = vpop.permute.xlu0 %3254
        %3256 = vrot.lane.b32.xlu0 %v3239, 126
        %v3257 = vpop.permute.xlu0 %3256
        %v3258 = vsel %vm307, %v3247, %v3249
        %v3259 = vsel %vm307, %v3251, %v3253
        %v3260 = vsel %vm307, %v3255, %v3257
        %v3264 = vadd.f32 %v3229, %v3258
        %v3265 = vadd.f32 %v3230, %v3259
        %v3266 = vadd.f32 %v3231, %v3260
        %s3267 = sld [smem:[#allocation8 + $0x5e]]
        %v3268 = vstv %s3267
        %v3269 = vmul.f32 %v3268, %v3186
        %v3270 = vmul.f32 %v3268, %v3187
        %v3271 = vmul.f32 %v3268, %v3188
        %v3272 = vmul.f32 %v3268, %v3189
        %v3273 = vmul.f32 %v3268, %v3190
        %v3274 = vmul.f32 %v3268, %v3191
        %3281 = vrot.lane.b32.xlu0 %v3269, 125
        %v3282 = vpop.permute.xlu0 %3281
        %3283 = vrot.lane.b32.xlu0 %v3270, 125
        %v3284 = vpop.permute.xlu0 %3283
        %3285 = vrot.lane.b32.xlu0 %v3271, 125
        %v3286 = vpop.permute.xlu0 %3285
        %3287 = vrot.lane.b32.xlu0 %v3272, 125
        %v3288 = vpop.permute.xlu0 %3287
        %3289 = vrot.lane.b32.xlu0 %v3273, 125
        %v3290 = vpop.permute.xlu0 %3289
        %3291 = vrot.lane.b32.xlu0 %v3274, 125
        %v3292 = vpop.permute.xlu0 %3291
        %v3293 = vsel %vm332, %v3282, %v3284
        %v3294 = vsel %vm332, %v3286, %v3288
        %v3295 = vsel %vm332, %v3290, %v3292
        %v3299 = vadd.f32 %v3264, %v3293
        %v3300 = vadd.f32 %v3265, %v3294
        %v3301 = vadd.f32 %v3266, %v3295
        %s3302 = sld [smem:[#allocation8 + $0x5f]]
        %v3303 = vstv %s3302
        %v3304 = vmul.f32 %v3303, %v3186
        %v3305 = vmul.f32 %v3303, %v3187
        %v3306 = vmul.f32 %v3303, %v3188
        %v3307 = vmul.f32 %v3303, %v3189
        %v3308 = vmul.f32 %v3303, %v3190
        %v3309 = vmul.f32 %v3303, %v3191
        %3316 = vrot.lane.b32.xlu0 %v3304, 124
        %v3317 = vpop.permute.xlu0 %3316
        %3318 = vrot.lane.b32.xlu0 %v3305, 124
        %v3319 = vpop.permute.xlu0 %3318
        %3320 = vrot.lane.b32.xlu0 %v3306, 124
        %v3321 = vpop.permute.xlu0 %3320
        %3322 = vrot.lane.b32.xlu0 %v3307, 124
        %v3323 = vpop.permute.xlu0 %3322
        %3324 = vrot.lane.b32.xlu0 %v3308, 124
        %v3325 = vpop.permute.xlu0 %3324
        %3326 = vrot.lane.b32.xlu0 %v3309, 124
        %v3327 = vpop.permute.xlu0 %3326
        %v3328 = vsel %vm357, %v3317, %v3319
        %v3329 = vsel %vm357, %v3321, %v3323
        %v3330 = vsel %vm357, %v3325, %v3327
        %v3334 = vadd.f32 %v3299, %v3328
        %v3335 = vadd.f32 %v3300, %v3329
        %v3336 = vadd.f32 %v3301, %v3330
        %s3337 = sld [smem:[#allocation8 + $0x60]]
        %v3338 = vstv %s3337
        %v3339 = vmul.f32 %v3338, %v3186
        %v3340 = vmul.f32 %v3338, %v3187
        %v3341 = vmul.f32 %v3338, %v3188
        %v3342 = vmul.f32 %v3338, %v3189
        %v3343 = vmul.f32 %v3338, %v3190
        %v3344 = vmul.f32 %v3338, %v3191
        %3351 = vrot.lane.b32.xlu0 %v3339, 123
        %v3352 = vpop.permute.xlu0 %3351
        %3353 = vrot.lane.b32.xlu0 %v3340, 123
        %v3354 = vpop.permute.xlu0 %3353
        %3355 = vrot.lane.b32.xlu0 %v3341, 123
        %v3356 = vpop.permute.xlu0 %3355
        %3357 = vrot.lane.b32.xlu0 %v3342, 123
        %v3358 = vpop.permute.xlu0 %3357
        %3359 = vrot.lane.b32.xlu0 %v3343, 123
        %v3360 = vpop.permute.xlu0 %3359
        %3361 = vrot.lane.b32.xlu0 %v3344, 123
        %v3362 = vpop.permute.xlu0 %3361
        %v3363 = vsel %vm382, %v3352, %v3354
        %v3364 = vsel %vm382, %v3356, %v3358
        %v3365 = vsel %vm382, %v3360, %v3362
        %v3369 = vadd.f32 %v3334, %v3363
        %v3370 = vadd.f32 %v3335, %v3364
        %v3371 = vadd.f32 %v3336, %v3365
        %s3372 = sld [smem:[#allocation8 + $0x61]]
        %v3373 = vstv %s3372
        %v3374 = vmul.f32 %v3373, %v3186
        %v3375 = vmul.f32 %v3373, %v3187
        %v3376 = vmul.f32 %v3373, %v3188
        %v3377 = vmul.f32 %v3373, %v3189
        %v3378 = vmul.f32 %v3373, %v3190
        %v3379 = vmul.f32 %v3373, %v3191
        %3386 = vrot.lane.b32.xlu0 %v3374, 122
        %v3387 = vpop.permute.xlu0 %3386
        %3388 = vrot.lane.b32.xlu0 %v3375, 122
        %v3389 = vpop.permute.xlu0 %3388
        %3390 = vrot.lane.b32.xlu0 %v3376, 122
        %v3391 = vpop.permute.xlu0 %3390
        %3392 = vrot.lane.b32.xlu0 %v3377, 122
        %v3393 = vpop.permute.xlu0 %3392
        %3394 = vrot.lane.b32.xlu0 %v3378, 122
        %v3395 = vpop.permute.xlu0 %3394
        %3396 = vrot.lane.b32.xlu0 %v3379, 122
        %v3397 = vpop.permute.xlu0 %3396
        %v3398 = vsel %vm407, %v3387, %v3389
        %v3399 = vsel %vm407, %v3391, %v3393
        %v3400 = vsel %vm407, %v3395, %v3397
        %v3404 = vadd.f32 %v3369, %v3398
        %v3405 = vadd.f32 %v3370, %v3399
        %v3406 = vadd.f32 %v3371, %v3400
        %v3407 = vld [vmem:[#allocation3] sm:$0xff]
        %v3408 = vld [vmem:[#allocation3 + $0x8] sm:$0xff]
        %v3412 = vrot.slane %v3404, 6
        %v3413 = vrot.slane %v3405, 6
        %v3414 = vsel %vm1831, %v3412, %v3413
        %v3415 = vrot.slane %v3406, 6
        %v3416 = vsel %vm1831, %v3413, %v3415
        %v3419 = vadd.f32 %v3407, %v3414
        %v3420 = vadd.f32 %v3408, %v3416
        %3421 = vst [vmem:[#allocation3] sm:$0xff] %v3419
        %3422 = vst [vmem:[#allocation3 + $0x8] sm:$0xff] %v3420
        %v3423 = vld [vmem:[#allocation3] sm:$0xff]
        %v3424 = vld [vmem:[#allocation3 + $0x8] sm:$0xff]
        %v3425 = vxor.u32 %v3423, 2147483648
        %v3426 = vxor.u32 %v3424, 2147483648
        %v3427 = vmul.f32 %v3425, 1.442695
        %v3428 = vpow.pop %v3427
        %v3429 = vmul.f32 %v3426, 1.442695
        %v3430 = vpow.pop %v3429
        %v3431 = vadd.f32 %v3428, 1.0
        %v3432 = vadd.f32 %v3430, 1.0
        %v3433 = vrcp.pop %v3431
        %v3434 = vmul.f32 %v3431, %v3433
        %v3435 = vsub.f32 1.0, %v3434
        %v3436 = vmul.f32 %v3433, %v3435
        %v3437 = vadd.f32 %v3433, %v3436
        %vm3438 = vweird.f32 %v3431
        %vm3439 = vweird.f32 %v3433
        %vm3440 = vmor %vm3438, %vm3439
        %v3441 = vsel %vm3440, %v3433, %v3437
        %v3442 = vand.u32 2147483647, %v3431
        %vm3443 = vcmp.eq.f32.partialorder %v3442, 8.507059e+37
        %v3444 = vand.u32 %v3431, 2147483648
        %v3445 = vor.u32 1.1754944e-38, %v3444
        %v3446 = vsel %vm3443, %v3445, %v3441
        %v3447 = vmul.f32 1.0, %v3446
        %v3448 = vrcp.pop %v3432
        %v3449 = vmul.f32 %v3432, %v3448
        %v3450 = vsub.f32 1.0, %v3449
        %v3451 = vmul.f32 %v3448, %v3450
        %v3452 = vadd.f32 %v3448, %v3451
        %vm3453 = vweird.f32 %v3432
        %vm3454 = vweird.f32 %v3448
        %vm3455 = vmor %vm3453, %vm3454
        %v3456 = vsel %vm3455, %v3448, %v3452
        %v3457 = vand.u32 2147483647, %v3432
        %vm3458 = vcmp.eq.f32.partialorder %v3457, 8.507059e+37
        %v3459 = vand.u32 %v3432, 2147483648
        %v3460 = vor.u32 1.1754944e-38, %v3459
        %v3461 = vsel %vm3458, %v3460, %v3456
        %v3462 = vmul.f32 1.0, %v3461
        %3463 = vst [vmem:[%s177] sm:$0xff] %v3447
        %3464 = vst [vmem:[%s177 + $0x8] sm:$0xff] %v3462
        %s3465 = sand.u32 %s75, 1
        %s3466 = scalar_lea.sflag [#allocation6], %s3465
        %s3467 = sand.u32 %s75, 1
        %s3468 = smul.addr %s3467, 16
        %s3469 = scalar_lea.vmem [#allocation9], %s3468
        // Predicated region
        $region37: #{tpu_custom_call.1} parent=27 // pred_check
          %p3470 = pneg %p85
        $region38: #{tpu_custom_call.1} parent=27 // pred_check_branch
          %3472 = sbr.rel (%p3470) target = $region40
        $region39: #{tpu_custom_call.1} parent=27 // pred_region
          %3474 = vsyncadd %s3466, 0
          %s3475 = smul.addr %s20, 2
          %s3476 = smul.addr %s3475, 8
          %s3477 = scalar_lea.hbm %s2, %s3476
          %s3478 = sshll.u32 %s3469, 4
          %s3479 = int_to_ptr.vmem [resolvable:$true] %s3478
          %s3480 = sshll.u32 %s3477, 4
          %s3481 = int_to_ptr.hbm [resolvable:$true] %s3480
          %3486 = dma.vmem_to_hbm [thread:$0]  %s3479, 256, %s3481, %s3466, 128, 128, 8
        $region40: #{tpu_custom_call.1} parent=27 // pred_fallthru
          _
      $region28: #{tpu_custom_call.1} parent=5 // pred_fallthru
        _
      %p3487 = scmp.le.s32.totalorder 2, %s15
      // Predicated region
      $region41: #{tpu_custom_call.1} parent=5 // pred_check
        %p3488 = pneg %p3487
      $region42: #{tpu_custom_call.1} parent=5 // pred_check_branch
        %3490 = sbr.rel (%p3488) target = $region44
      $region43: #{tpu_custom_call.1} parent=5 // pred_region
        %s3491 = ssub.s32 %s15, 2
        // Predicated region
        $region45: #{tpu_custom_call.1} parent=43 // pred_check
          %p3492 = pneg %p91
        $region46: #{tpu_custom_call.1} parent=43 // pred_check_branch
          %3494 = sbr.rel (%p3492) target = $region48
        $region47: #{tpu_custom_call.1} parent=43 // pred_region
          %s3495 = sand.u32 %s76, 1
          %s3496 = scalar_lea.sflag [#allocation6], %s3495
          %s3497 = sand.u32 %s76, 1
          %s3498 = smul.addr %s3497, 16
          %s3499 = scalar_lea.vmem [#allocation9], %s3498
          %3501 = dma.done %s3496, 256
        $region48: #{tpu_custom_call.1} parent=43 // pred_fallthru
          _
      $region44: #{tpu_custom_call.1} parent=5 // pred_fallthru
        _
    $region6: #{tpu_custom_call.1} parent=1 // loop_footer
      %s19 = sadd.s32 1, %s15
    $region7: #{tpu_custom_call.1} parent=1 // loop_footer_branch
      %14 = sbr.rel target = $region3
    $region8: #{tpu_custom_call.1} parent=1 // loop_exit
      _
    %3502 = vsyncpa [#allocation5], 1
    %s3503 = scalar_lea.sflag [#allocation5], 1
    %3504 = vsyncpa %s3503, 1
    %3505 = vsyncpa [#allocation6], 1
    %s3506 = scalar_lea.sflag [#allocation6], 1
    %3507 = vsyncpa %s3506, 1
    %3508 = vsyncpa [#allocation7], 1
    %s3509 = scalar_lea.sflag [#allocation7], 1
    %3510 = vsyncpa %s3509, 1

</llo_original>
